<compile_context>
chip_gen: v5e
topology: v5e:2x2
jax: 0.10.0
libtpu: 0.0.40
codegen_flags: <defaults>
</compile_context>

<pallas_src>
import functools

import jax
import jax.numpy as jnp
from jax.experimental import pallas as pl
from jax.experimental.pallas import tpu as pltpu


# ----------------------------- decoder_lin -----------------------------------
def _mlp_kernel(x_ref, w1_ref, b1_ref, w2_ref, b2_ref, o_ref):
    # Linear(enc, 128) + ReLU + Linear(128, 576) + ReLU, fused in one kernel.
    h = jnp.dot(x_ref[...], w1_ref[...], preferred_element_type=jnp.float32)
    h = jnp.maximum(h + b1_ref[...], 0.0)
    y = jnp.dot(h, w2_ref[...], preferred_element_type=jnp.float32)
    o_ref[...] = jnp.maximum(y + b2_ref[...], 0.0).astype(o_ref.dtype)


def decoder_lin(x, w1, b1, w2, b2):
    n = x.shape[0]
    return pl.pallas_call(
        _mlp_kernel,
        out_shape=jax.ShapeDtypeStruct((n, w2.shape[1]), jnp.float32),
        in_specs=[pl.BlockSpec(memory_space=pltpu.MemorySpace.VMEM)] * 5,
        out_specs=pl.BlockSpec(memory_space=pltpu.MemorySpace.VMEM),
    )(x, w1, b1, w2, b2)


# --------------------------- conv-transpose layer -----------------------------
def _convt_kernel(cols_ref, w_ref, scale_ref, shift_ref, o_ref, *, act):
    # cols_ref: (1, K*K*Cin, HW_pad) bf16   w_ref: (Cout, K*K*Cin) bf16
    # Single MXU matmul with contraction depth K*K*Cin (72..576).
    y = jnp.dot(w_ref[...], cols_ref[0], preferred_element_type=jnp.float32)
    # conv bias is folded into `shift`, BatchNorm (eval) folded into scale/shift
    y = y * scale_ref[...] + shift_ref[...]
    if act == "relu":
        y = jnp.maximum(y, 0.0)
    elif act == "sigmoid":
        y = jax.nn.sigmoid(y)
    o_ref[0] = y.astype(o_ref.dtype)


def conv_transpose2d(x, w_conv, scale, shift, *, stride, padding,
                     output_padding, k, act, out_dtype):
    """x: (N, Cin, H, W); w_conv: pre-flipped/reordered (Cout, K*K*Cin) bf16."""
    n, cin, h, w = x.shape
    cout = w_conv.shape[0]
    kkc = k * k * cin

    ho = (h - 1) * stride - 2 * padding + k + output_padding
    wo = (w - 1) * stride - 2 * padding + k + output_padding
    hw = ho * wo
    hw_pad = ((hw + 127) // 128) * 128          # lane-dense matmul N / store

    # zero-insertion + padding -> equivalent regular convolution (XLA glue)
    hd = (h - 1) * stride + 1
    wd = (w - 1) * stride + 1
    xb = x.astype(jnp.bfloat16)
    xd = jnp.zeros((n, cin, hd, wd), jnp.bfloat16)
    xd = xd.at[:, :, ::stride, ::stride].set(xb)
    plo = k - 1 - padding
    phi = k - 1 - padding + output_padding
    xp = jnp.pad(xd, ((0, 0), (0, 0), (plo, phi), (plo, phi)))

    # im2col glue: (N, K*K*Cin, HW_pad) so the whole layer is one matmul.
    # TODO(synk): window extraction is XLA glue; doing it in-kernel would need
    # sublane/lane reshapes that are not worth the risk at these tiny sizes.
    cols = jnp.stack(
        [xp[:, :, kh:kh + ho, kw:kw + wo].reshape(n, cin, hw)
         for kh in range(k) for kw in range(k)], axis=1
    ).reshape(n, kkc, hw)
    cols = jnp.pad(cols, ((0, 0), (0, 0), (0, hw_pad - hw)))

    out = pl.pallas_call(
        functools.partial(_convt_kernel, act=act),
        out_shape=jax.ShapeDtypeStruct((n, cout, hw_pad), out_dtype),
        grid_spec=pltpu.PrefetchScalarGridSpec(
            num_scalar_prefetch=0,
            grid=(n,),
            in_specs=[
                pl.BlockSpec((1, kkc, hw_pad), lambda i: (i, 0, 0)),
                pl.BlockSpec((cout, kkc), lambda i: (0, 0)),
                pl.BlockSpec((cout, 1), lambda i: (0, 0)),
                pl.BlockSpec((cout, 1), lambda i: (0, 0)),
            ],
            out_specs=pl.BlockSpec((1, cout, hw_pad), lambda i: (i, 0, 0)),
        ),
        compiler_params=pltpu.CompilerParams(dimension_semantics=("parallel",)),
    )(cols, w_conv, scale, shift)
    return out[:, :, :hw].reshape(n, cout, ho, wo)


# ------------------------------ parameters ------------------------------------
_CONV_CFG = [  # (Cin, Cout, stride, padding, output_padding, has_bn, act)
    (64, 32, 2, 0, 0, True, "relu"),
    (32, 16, 2, 0, 0, True, "relu"),
    (16, 8, 2, 1, 1, True, "relu"),
    (8, 1, 2, 1, 1, False, "sigmoid"),
]
_K = 3


def init_params(key, encoded_space_dim):
    def u(k, shape, bound):
        return jax.random.uniform(k, shape, jnp.float32, -bound, bound)

    kc = 0

    def nk():
        nonlocal kc
        kc += 1
        return jax.random.fold_in(key, kc)

    p = {}
    bnd1 = 1.0 / float(encoded_space_dim) ** 0.5
    p["w1"] = u(nk(), (encoded_space_dim, 128), bnd1)
    p["b1"] = u(nk(), (1, 128), bnd1)
    bnd2 = 1.0 / 128.0 ** 0.5
    p["w2"] = u(nk(), (128, 3 * 3 * 64), bnd2)
    p["b2"] = u(nk(), (1, 3 * 3 * 64), bnd2)

    p["conv"] = []
    eps = 1e-5
    for (cin, cout, _, _, _, has_bn, _) in _CONV_CFG:
        bnd = 1.0 / float(cin * _K * _K) ** 0.5
        wt = u(nk(), (cin, cout, _K, _K), bnd)   # PyTorch ConvTranspose2d layout
        bb = u(nk(), (cout,), bnd)
        if has_bn:
            gamma = 1.0 + 0.1 * jax.random.normal(nk(), (cout,), jnp.float32)
            beta = 0.1 * jax.random.normal(nk(), (cout,), jnp.float32)
            rmean = 0.05 * jax.random.normal(nk(), (cout,), jnp.float32)
            rvar = 0.9 + 0.2 * jax.random.uniform(nk(), (cout,), jnp.float32)
            scale = gamma * jax.lax.rsqrt(rvar + eps)
            shift = beta + (bb - rmean) * scale      # fold conv bias into shift
        else:
            scale = jnp.ones((cout,), jnp.float32)
            shift = bb
        # Pre-flip + reorder to (Cout, K*K*Cin), matching im2col (kh, kw, ci).
        wflip = wt[:, :, ::-1, ::-1]                              # (Cin,Cout,K,K)
        w_conv = jnp.transpose(wflip, (2, 3, 0, 1)).reshape(_K * _K * cin, cout).T
        p["conv"].append((w_conv.astype(jnp.bfloat16),
                          scale.reshape(cout, 1),
                          shift.reshape(cout, 1)))
    return p


# ------------------------------- forward --------------------------------------
def decoder_forward(x, p):
    y = decoder_lin(x, p["w1"], p["b1"], p["w2"], p["b2"])   # (N, 576)
    n = y.shape[0]
    # TODO(synk): the reference module's nn.Unflatten(1, (32, 3, 3)) is
    # inconsistent with the 576-wide Linear output and ConvTranspose2d(64, ...);
    # (64, 3, 3) is the only consistent interpretation and is used here.
    y = y.reshape(n, 64, 3, 3)                               # NCHW
    last = len(_CONV_CFG) - 1
    for i, (cin, cout, s, pad, opad, _, act) in enumerate(_CONV_CFG):
        w_conv, scale, shift = p["conv"][i]
        out_dtype = jnp.float32 if i == last else jnp.bfloat16
        y = conv_transpose2d(y, w_conv, scale, shift, stride=s, padding=pad,
                             output_padding=opad, k=_K, act=act,
                             out_dtype=out_dtype)
    return y                                                 # (N, 1, 60, 60)


if __name__ == "__main__":
    key = jax.random.PRNGKey(0)
    pkey, xkey = jax.random.split(key)
    encoded_space_dim = 8
    params = init_params(pkey, encoded_space_dim)
    x = jax.random.normal(xkey, (2, encoded_space_dim), jnp.float32)

    fwd = jax.jit(decoder_forward)
    out = jax.block_until_ready(fwd(x, params))

    assert out.shape == (2, 1, 60, 60), out.shape
    assert bool(jnp.all(jnp.isfinite(out)))
    assert bool(jnp.all((out >= 0.0) & (out <= 1.0)))  # sigmoid output range
    print("KERNEL_OK")
</pallas_src>

<mosaic_0001>
module attributes {stable_mosaic.version = 11 : i64} {
  func.func @_mlp_kernel(%arg0: memref<2x8xf32, #tpu.memory_space<vmem>>, %arg1: memref<8x128xf32, #tpu.memory_space<vmem>>, %arg2: memref<1x128xf32, #tpu.memory_space<vmem>>, %arg3: memref<128x576xf32, #tpu.memory_space<vmem>>, %arg4: memref<1x576xf32, #tpu.memory_space<vmem>>, %arg5: memref<2x576xf32, #tpu.memory_space<vmem>>) attributes {dimension_semantics = [], scalar_prefetch = 0 : i64, scratch_operands = 0 : i64, tpu.core_type = #tpu.core_type<tc>} {
    %c0 = arith.constant 0 : index
    %c0_0 = arith.constant 0 : index
    %0 = vector.load %arg0[%c0, %c0_0] : memref<2x8xf32, #tpu.memory_space<vmem>>, vector<2x8xf32>
    %c0_1 = arith.constant 0 : index
    %c0_2 = arith.constant 0 : index
    %1 = vector.load %arg1[%c0_1, %c0_2] : memref<8x128xf32, #tpu.memory_space<vmem>>, vector<8x128xf32>
    %cst = arith.constant dense<0.000000e+00> : vector<2x128xf32>
    %2 = tpu.matmul %0, %1, %cst {dimension_numbers = #tpu.dot_dimension_numbers<[1], [0], [0], [1], [0, 0, 1, 1], [], []>} : vector<2x8xf32>, vector<8x128xf32>, vector<2x128xf32> -> vector<2x128xf32>
    %c0_3 = arith.constant 0 : index
    %c0_4 = arith.constant 0 : index
    %3 = vector.load %arg2[%c0_3, %c0_4] : memref<1x128xf32, #tpu.memory_space<vmem>>, vector<1x128xf32>
    %4 = vector.broadcast %3 : vector<1x128xf32> to vector<2x128xf32>
    %5 = arith.addf %2, %4 : vector<2x128xf32>
    %cst_5 = arith.constant 0.000000e+00 : f32
    %6 = vector.broadcast %cst_5 : f32 to vector<2x128xf32>
    %7 = arith.maximumf %5, %6 : vector<2x128xf32>
    %c0_6 = arith.constant 0 : index
    %c0_7 = arith.constant 0 : index
    %8 = vector.load %arg3[%c0_6, %c0_7] : memref<128x576xf32, #tpu.memory_space<vmem>>, vector<128x576xf32>
    %cst_8 = arith.constant dense<0.000000e+00> : vector<2x576xf32>
    %9 = tpu.matmul %7, %8, %cst_8 {dimension_numbers = #tpu.dot_dimension_numbers<[1], [0], [0], [1], [0, 0, 1, 1], [], []>} : vector<2x128xf32>, vector<128x576xf32>, vector<2x576xf32> -> vector<2x576xf32>
    %c0_9 = arith.constant 0 : index
    %c0_10 = arith.constant 0 : index
    %10 = vector.load %arg4[%c0_9, %c0_10] : memref<1x576xf32, #tpu.memory_space<vmem>>, vector<1x576xf32>
    %11 = vector.broadcast %10 : vector<1x576xf32> to vector<2x576xf32>
    %12 = arith.addf %9, %11 : vector<2x576xf32>
    %cst_11 = arith.constant 0.000000e+00 : f32
    %13 = vector.broadcast %cst_11 : f32 to vector<2x576xf32>
    %14 = arith.maximumf %12, %13 : vector<2x576xf32>
    %c0_12 = arith.constant 0 : index
    %c0_13 = arith.constant 0 : index
    %15 = vector.load %arg5[%c0_12, %c0_13] : memref<2x576xf32, #tpu.memory_space<vmem>>, vector<2x576xf32>
    tpu.vector_store %arg5[%c0_12, %c0_13], %14 {strides = array<i32>} : memref<2x576xf32, #tpu.memory_space<vmem>>, vector<2x576xf32>,
    return
  }
}

module attributes {stable_mosaic.version = 11 : i64} {
  func.func @_convt_kernel(%arg0: i32, %arg1: memref<1x576x128xbf16, #tpu.memory_space<vmem>>, %arg2: memref<32x576xbf16, #tpu.memory_space<vmem>>, %arg3: memref<32x1xf32, #tpu.memory_space<vmem>>, %arg4: memref<32x1xf32, #tpu.memory_space<vmem>>, %arg5: memref<1x32x128xbf16, #tpu.memory_space<vmem>>) attributes {dimension_semantics = [#tpu.dimension_semantics<parallel>], iteration_bounds = array<i64: 2>, scalar_prefetch = 0 : i64, scratch_operands = 0 : i64, tpu.core_type = #tpu.core_type<tc>, window_params = [{transform_indices = @transform_0, window_bounds = array<i64: 1, 576, 128>}, {pipeline_mode = #tpu.pipeline_mode<synchronous>, transform_indices = @transform_1, window_bounds = array<i64: 32, 576>}, {pipeline_mode = #tpu.pipeline_mode<synchronous>, transform_indices = @transform_2, window_bounds = array<i64: 32, 1>}, {pipeline_mode = #tpu.pipeline_mode<synchronous>, transform_indices = @transform_3, window_bounds = array<i64: 32, 1>}, {transform_indices = @transform_4, window_bounds = array<i64: 1, 32, 128>}]} {
    %c0 = arith.constant 0 : index
    %c0_0 = arith.constant 0 : index
    %0 = vector.load %arg2[%c0, %c0_0] : memref<32x576xbf16, #tpu.memory_space<vmem>>, vector<32x576xbf16>
    %c0_1 = arith.constant 0 : index
    %c0_2 = arith.constant 0 : index
    %c0_3 = arith.constant 0 : index
    %1 = vector.load %arg1[%c0_1, %c0_2, %c0_3] : memref<1x576x128xbf16, #tpu.memory_space<vmem>>, vector<1x576x128xbf16>
    %2 = vector.shape_cast %1 : vector<1x576x128xbf16> to vector<576x128xbf16>
    %cst = arith.constant dense<0.000000e+00> : vector<32x128xf32>
    %3 = tpu.matmul %0, %2, %cst {dimension_numbers = #tpu.dot_dimension_numbers<[1], [0], [0], [1], [0, 0, 1, 1], [], []>} : vector<32x576xbf16>, vector<576x128xbf16>, vector<32x128xf32> -> vector<32x128xf32>
    %c0_4 = arith.constant 0 : index
    %c0_5 = arith.constant 0 : index
    %4 = vector.load %arg3[%c0_4, %c0_5] : memref<32x1xf32, #tpu.memory_space<vmem>>, vector<32x1xf32>
    %5 = vector.broadcast %4 : vector<32x1xf32> to vector<32x128xf32>
    %6 = arith.mulf %3, %5 : vector<32x128xf32>
    %c0_6 = arith.constant 0 : index
    %c0_7 = arith.constant 0 : index
    %7 = vector.load %arg4[%c0_6, %c0_7] : memref<32x1xf32, #tpu.memory_space<vmem>>, vector<32x1xf32>
    %8 = vector.broadcast %7 : vector<32x1xf32> to vector<32x128xf32>
    %9 = arith.addf %6, %8 : vector<32x128xf32>
    %cst_8 = arith.constant 0.000000e+00 : f32
    %10 = vector.broadcast %cst_8 : f32 to vector<32x128xf32>
    %11 = arith.maximumf %9, %10 : vector<32x128xf32>
    %12 = arith.truncf %11 : vector<32x128xf32> to vector<32x128xbf16>
    %c0_9 = arith.constant 0 : index
    %c0_10 = arith.constant 0 : index
    %c0_11 = arith.constant 0 : index
    %13 = vector.load %arg5[%c0_9, %c0_10, %c0_11] : memref<1x32x128xbf16, #tpu.memory_space<vmem>>, vector<1x32x128xbf16>
    %14 = vector.shape_cast %13 : vector<1x32x128xbf16> to vector<32x128xbf16>
    %15 = vector.shape_cast %12 : vector<32x128xbf16> to vector<1x32x128xbf16>
    tpu.vector_store %arg5[%c0_9, %c0_10, %c0_11], %15 {strides = array<i32>} : memref<1x32x128xbf16, #tpu.memory_space<vmem>>, vector<1x32x128xbf16>,
    return
  }
  func.func @transform_0(%arg0: i32) -> (i32, i32, i32) {
    %c0_i32 = arith.constant 0 : i32
    %c0_i32_0 = arith.constant 0 : i32
    %c0_i32_1 = arith.constant 0 : i32
    return %arg0, %c0_i32, %c0_i32_0 : i32, i32, i32
  }
  func.func @transform_1(%arg0: i32) -> (i32, i32) {
    %c0_i32 = arith.constant 0 : i32
    %c0_i32_0 = arith.constant 0 : i32
    %c0_i32_1 = arith.constant 0 : i32
    return %c0_i32, %c0_i32_0 : i32, i32
  }
  func.func @transform_2(%arg0: i32) -> (i32, i32) {
    %c0_i32 = arith.constant 0 : i32
    %c0_i32_0 = arith.constant 0 : i32
    %c0_i32_1 = arith.constant 0 : i32
    return %c0_i32, %c0_i32_0 : i32, i32
  }
  func.func @transform_3(%arg0: i32) -> (i32, i32) {
    %c0_i32 = arith.constant 0 : i32
    %c0_i32_0 = arith.constant 0 : i32
    %c0_i32_1 = arith.constant 0 : i32
    return %c0_i32, %c0_i32_0 : i32, i32
  }
  func.func @transform_4(%arg0: i32) -> (i32, i32, i32) {
    %c0_i32 = arith.constant 0 : i32
    %c0_i32_0 = arith.constant 0 : i32
    %c0_i32_1 = arith.constant 0 : i32
    return %arg0, %c0_i32, %c0_i32_0 : i32, i32, i32
  }
}

module attributes {stable_mosaic.version = 11 : i64} {
  func.func @_convt_kernel(%arg0: i32, %arg1: memref<1x288x256xbf16, #tpu.memory_space<vmem>>, %arg2: memref<16x288xbf16, #tpu.memory_space<vmem>>, %arg3: memref<16x1xf32, #tpu.memory_space<vmem>>, %arg4: memref<16x1xf32, #tpu.memory_space<vmem>>, %arg5: memref<1x16x256xbf16, #tpu.memory_space<vmem>>) attributes {dimension_semantics = [#tpu.dimension_semantics<parallel>], iteration_bounds = array<i64: 2>, scalar_prefetch = 0 : i64, scratch_operands = 0 : i64, tpu.core_type = #tpu.core_type<tc>, window_params = [{transform_indices = @transform_0, window_bounds = array<i64: 1, 288, 256>}, {pipeline_mode = #tpu.pipeline_mode<synchronous>, transform_indices = @transform_1, window_bounds = array<i64: 16, 288>}, {pipeline_mode = #tpu.pipeline_mode<synchronous>, transform_indices = @transform_2, window_bounds = array<i64: 16, 1>}, {pipeline_mode = #tpu.pipeline_mode<synchronous>, transform_indices = @transform_3, window_bounds = array<i64: 16, 1>}, {transform_indices = @transform_4, window_bounds = array<i64: 1, 16, 256>}]} {
    %c0 = arith.constant 0 : index
    %c0_0 = arith.constant 0 : index
    %0 = vector.load %arg2[%c0, %c0_0] : memref<16x288xbf16, #tpu.memory_space<vmem>>, vector<16x288xbf16>
    %c0_1 = arith.constant 0 : index
    %c0_2 = arith.constant 0 : index
    %c0_3 = arith.constant 0 : index
    %1 = vector.load %arg1[%c0_1, %c0_2, %c0_3] : memref<1x288x256xbf16, #tpu.memory_space<vmem>>, vector<1x288x256xbf16>
    %2 = vector.shape_cast %1 : vector<1x288x256xbf16> to vector<288x256xbf16>
    %cst = arith.constant dense<0.000000e+00> : vector<16x256xf32>
    %3 = tpu.matmul %0, %2, %cst {dimension_numbers = #tpu.dot_dimension_numbers<[1], [0], [0], [1], [0, 0, 1, 1], [], []>} : vector<16x288xbf16>, vector<288x256xbf16>, vector<16x256xf32> -> vector<16x256xf32>
    %c0_4 = arith.constant 0 : index
    %c0_5 = arith.constant 0 : index
    %4 = vector.load %arg3[%c0_4, %c0_5] : memref<16x1xf32, #tpu.memory_space<vmem>>, vector<16x1xf32>
    %5 = vector.broadcast %4 : vector<16x1xf32> to vector<16x256xf32>
    %6 = arith.mulf %3, %5 : vector<16x256xf32>
    %c0_6 = arith.constant 0 : index
    %c0_7 = arith.constant 0 : index
    %7 = vector.load %arg4[%c0_6, %c0_7] : memref<16x1xf32, #tpu.memory_space<vmem>>, vector<16x1xf32>
    %8 = vector.broadcast %7 : vector<16x1xf32> to vector<16x256xf32>
    %9 = arith.addf %6, %8 : vector<16x256xf32>
    %cst_8 = arith.constant 0.000000e+00 : f32
    %10 = vector.broadcast %cst_8 : f32 to vector<16x256xf32>
    %11 = arith.maximumf %9, %10 : vector<16x256xf32>
    %12 = arith.truncf %11 : vector<16x256xf32> to vector<16x256xbf16>
    %c0_9 = arith.constant 0 : index
    %c0_10 = arith.constant 0 : index
    %c0_11 = arith.constant 0 : index
    %13 = vector.load %arg5[%c0_9, %c0_10, %c0_11] : memref<1x16x256xbf16, #tpu.memory_space<vmem>>, vector<1x16x256xbf16>
    %14 = vector.shape_cast %13 : vector<1x16x256xbf16> to vector<16x256xbf16>
    %15 = vector.shape_cast %12 : vector<16x256xbf16> to vector<1x16x256xbf16>
    tpu.vector_store %arg5[%c0_9, %c0_10, %c0_11], %15 {strides = array<i32>} : memref<1x16x256xbf16, #tpu.memory_space<vmem>>, vector<1x16x256xbf16>,
    return
  }
  func.func @transform_0(%arg0: i32) -> (i32, i32, i32) {
    %c0_i32 = arith.constant 0 : i32
    %c0_i32_0 = arith.constant 0 : i32
    %c0_i32_1 = arith.constant 0 : i32
    return %arg0, %c0_i32, %c0_i32_0 : i32, i32, i32
  }
  func.func @transform_1(%arg0: i32) -> (i32, i32) {
    %c0_i32 = arith.constant 0 : i32
    %c0_i32_0 = arith.constant 0 : i32
    %c0_i32_1 = arith.constant 0 : i32
    return %c0_i32, %c0_i32_0 : i32, i32
  }
  func.func @transform_2(%arg0: i32) -> (i32, i32) {
    %c0_i32 = arith.constant 0 : i32
    %c0_i32_0 = arith.constant 0 : i32
    %c0_i32_1 = arith.constant 0 : i32
    return %c0_i32, %c0_i32_0 : i32, i32
  }
  func.func @transform_3(%arg0: i32) -> (i32, i32) {
    %c0_i32 = arith.constant 0 : i32
    %c0_i32_0 = arith.constant 0 : i32
    %c0_i32_1 = arith.constant 0 : i32
    return %c0_i32, %c0_i32_0 : i32, i32
  }
  func.func @transform_4(%arg0: i32) -> (i32, i32, i32) {
    %c0_i32 = arith.constant 0 : i32
    %c0_i32_0 = arith.constant 0 : i32
    %c0_i32_1 = arith.constant 0 : i32
    return %arg0, %c0_i32, %c0_i32_0 : i32, i32, i32
  }
}

module attributes {stable_mosaic.version = 11 : i64} {
  func.func @_convt_kernel(%arg0: i32, %arg1: memref<1x144x1024xbf16, #tpu.memory_space<vmem>>, %arg2: memref<8x144xbf16, #tpu.memory_space<vmem>>, %arg3: memref<8x1xf32, #tpu.memory_space<vmem>>, %arg4: memref<8x1xf32, #tpu.memory_space<vmem>>, %arg5: memref<1x8x1024xbf16, #tpu.memory_space<vmem>>) attributes {dimension_semantics = [#tpu.dimension_semantics<parallel>], iteration_bounds = array<i64: 2>, scalar_prefetch = 0 : i64, scratch_operands = 0 : i64, tpu.core_type = #tpu.core_type<tc>, window_params = [{transform_indices = @transform_0, window_bounds = array<i64: 1, 144, 1024>}, {pipeline_mode = #tpu.pipeline_mode<synchronous>, transform_indices = @transform_1, window_bounds = array<i64: 8, 144>}, {pipeline_mode = #tpu.pipeline_mode<synchronous>, transform_indices = @transform_2, window_bounds = array<i64: 8, 1>}, {pipeline_mode = #tpu.pipeline_mode<synchronous>, transform_indices = @transform_3, window_bounds = array<i64: 8, 1>}, {transform_indices = @transform_4, window_bounds = array<i64: 1, 8, 1024>}]} {
    %c0 = arith.constant 0 : index
    %c0_0 = arith.constant 0 : index
    %0 = vector.load %arg2[%c0, %c0_0] : memref<8x144xbf16, #tpu.memory_space<vmem>>, vector<8x144xbf16>
    %c0_1 = arith.constant 0 : index
    %c0_2 = arith.constant 0 : index
    %c0_3 = arith.constant 0 : index
    %1 = vector.load %arg1[%c0_1, %c0_2, %c0_3] : memref<1x144x1024xbf16, #tpu.memory_space<vmem>>, vector<1x144x1024xbf16>
    %2 = vector.shape_cast %1 : vector<1x144x1024xbf16> to vector<144x1024xbf16>
    %cst = arith.constant dense<0.000000e+00> : vector<8x1024xf32>
    %3 = tpu.matmul %0, %2, %cst {dimension_numbers = #tpu.dot_dimension_numbers<[1], [0], [0], [1], [0, 0, 1, 1], [], []>} : vector<8x144xbf16>, vector<144x1024xbf16>, vector<8x1024xf32> -> vector<8x1024xf32>
    %c0_4 = arith.constant 0 : index
    %c0_5 = arith.constant 0 : index
    %4 = vector.load %arg3[%c0_4, %c0_5] : memref<8x1xf32, #tpu.memory_space<vmem>>, vector<8x1xf32>
    %5 = vector.broadcast %4 : vector<8x1xf32> to vector<8x1024xf32>
    %6 = arith.mulf %3, %5 : vector<8x1024xf32>
    %c0_6 = arith.constant 0 : index
    %c0_7 = arith.constant 0 : index
    %7 = vector.load %arg4[%c0_6, %c0_7] : memref<8x1xf32, #tpu.memory_space<vmem>>, vector<8x1xf32>
    %8 = vector.broadcast %7 : vector<8x1xf32> to vector<8x1024xf32>
    %9 = arith.addf %6, %8 : vector<8x1024xf32>
    %cst_8 = arith.constant 0.000000e+00 : f32
    %10 = vector.broadcast %cst_8 : f32 to vector<8x1024xf32>
    %11 = arith.maximumf %9, %10 : vector<8x1024xf32>
    %12 = arith.truncf %11 : vector<8x1024xf32> to vector<8x1024xbf16>
    %c0_9 = arith.constant 0 : index
    %c0_10 = arith.constant 0 : index
    %c0_11 = arith.constant 0 : index
    %13 = vector.load %arg5[%c0_9, %c0_10, %c0_11] : memref<1x8x1024xbf16, #tpu.memory_space<vmem>>, vector<1x8x1024xbf16>
    %14 = vector.shape_cast %13 : vector<1x8x1024xbf16> to vector<8x1024xbf16>
    %15 = vector.shape_cast %12 : vector<8x1024xbf16> to vector<1x8x1024xbf16>
    tpu.vector_store %arg5[%c0_9, %c0_10, %c0_11], %15 {strides = array<i32>} : memref<1x8x1024xbf16, #tpu.memory_space<vmem>>, vector<1x8x1024xbf16>,
    return
  }
  func.func @transform_0(%arg0: i32) -> (i32, i32, i32) {
    %c0_i32 = arith.constant 0 : i32
    %c0_i32_0 = arith.constant 0 : i32
    %c0_i32_1 = arith.constant 0 : i32
    return %arg0, %c0_i32, %c0_i32_0 : i32, i32, i32
  }
  func.func @transform_1(%arg0: i32) -> (i32, i32) {
    %c0_i32 = arith.constant 0 : i32
    %c0_i32_0 = arith.constant 0 : i32
    %c0_i32_1 = arith.constant 0 : i32
    return %c0_i32, %c0_i32_0 : i32, i32
  }
  func.func @transform_2(%arg0: i32) -> (i32, i32) {
    %c0_i32 = arith.constant 0 : i32
    %c0_i32_0 = arith.constant 0 : i32
    %c0_i32_1 = arith.constant 0 : i32
    return %c0_i32, %c0_i32_0 : i32, i32
  }
  func.func @transform_3(%arg0: i32) -> (i32, i32) {
    %c0_i32 = arith.constant 0 : i32
    %c0_i32_0 = arith.constant 0 : i32
    %c0_i32_1 = arith.constant 0 : i32
    return %c0_i32, %c0_i32_0 : i32, i32
  }
  func.func @transform_4(%arg0: i32) -> (i32, i32, i32) {
    %c0_i32 = arith.constant 0 : i32
    %c0_i32_0 = arith.constant 0 : i32
    %c0_i32_1 = arith.constant 0 : i32
    return %arg0, %c0_i32, %c0_i32_0 : i32, i32, i32
  }
}

module attributes {stable_mosaic.version = 11 : i64} {
  func.func @_convt_kernel(%arg0: i32, %arg1: memref<1x72x3712xbf16, #tpu.memory_space<vmem>>, %arg2: memref<1x72xbf16, #tpu.memory_space<vmem>>, %arg3: memref<1x1xf32, #tpu.memory_space<vmem>>, %arg4: memref<1x1xf32, #tpu.memory_space<vmem>>, %arg5: memref<1x1x3712xf32, #tpu.memory_space<vmem>>) attributes {dimension_semantics = [#tpu.dimension_semantics<parallel>], iteration_bounds = array<i64: 2>, scalar_prefetch = 0 : i64, scratch_operands = 0 : i64, tpu.core_type = #tpu.core_type<tc>, window_params = [{transform_indices = @transform_0, window_bounds = array<i64: 1, 72, 3712>}, {pipeline_mode = #tpu.pipeline_mode<synchronous>, transform_indices = @transform_1, window_bounds = array<i64: 1, 72>}, {pipeline_mode = #tpu.pipeline_mode<synchronous>, transform_indices = @transform_2, window_bounds = array<i64: 1, 1>}, {pipeline_mode = #tpu.pipeline_mode<synchronous>, transform_indices = @transform_3, window_bounds = array<i64: 1, 1>}, {transform_indices = @transform_4, window_bounds = array<i64: 1, 1, 3712>}]} {
    %c0 = arith.constant 0 : index
    %c0_0 = arith.constant 0 : index
    %0 = vector.load %arg2[%c0, %c0_0] : memref<1x72xbf16, #tpu.memory_space<vmem>>, vector<1x72xbf16>
    %c0_1 = arith.constant 0 : index
    %c0_2 = arith.constant 0 : index
    %c0_3 = arith.constant 0 : index
    %1 = vector.load %arg1[%c0_1, %c0_2, %c0_3] : memref<1x72x3712xbf16, #tpu.memory_space<vmem>>, vector<1x72x3712xbf16>
    %2 = vector.shape_cast %1 : vector<1x72x3712xbf16> to vector<72x3712xbf16>
    %cst = arith.constant dense<0.000000e+00> : vector<1x3712xf32>
    %3 = tpu.matmul %0, %2, %cst {dimension_numbers = #tpu.dot_dimension_numbers<[1], [0], [0], [1], [0, 0, 1, 1], [], []>} : vector<1x72xbf16>, vector<72x3712xbf16>, vector<1x3712xf32> -> vector<1x3712xf32>
    %c0_4 = arith.constant 0 : index
    %c0_5 = arith.constant 0 : index
    %4 = vector.load %arg3[%c0_4, %c0_5] : memref<1x1xf32, #tpu.memory_space<vmem>>, vector<1x1xf32>
    %5 = vector.broadcast %4 : vector<1x1xf32> to vector<1x3712xf32>
    %6 = arith.mulf %3, %5 : vector<1x3712xf32>
    %c0_6 = arith.constant 0 : index
    %c0_7 = arith.constant 0 : index
    %7 = vector.load %arg4[%c0_6, %c0_7] : memref<1x1xf32, #tpu.memory_space<vmem>>, vector<1x1xf32>
    %8 = vector.broadcast %7 : vector<1x1xf32> to vector<1x3712xf32>
    %9 = arith.addf %6, %8 : vector<1x3712xf32>
    %10 = arith.negf %9 : vector<1x3712xf32>
    %11 = math.exp %10 : vector<1x3712xf32>
    %cst_8 = arith.constant 1.000000e+00 : f32
    %12 = vector.broadcast %cst_8 : f32 to vector<1x3712xf32>
    %13 = arith.addf %12, %11 : vector<1x3712xf32>
    %14 = arith.divf %12, %13 : vector<1x3712xf32>
    %c0_9 = arith.constant 0 : index
    %c0_10 = arith.constant 0 : index
    %c0_11 = arith.constant 0 : index
    %15 = vector.load %arg5[%c0_9, %c0_10, %c0_11] : memref<1x1x3712xf32, #tpu.memory_space<vmem>>, vector<1x1x3712xf32>
    %16 = vector.shape_cast %15 : vector<1x1x3712xf32> to vector<1x3712xf32>
    %17 = vector.shape_cast %14 : vector<1x3712xf32> to vector<1x1x3712xf32>
    tpu.vector_store %arg5[%c0_9, %c0_10, %c0_11], %17 {strides = array<i32>} : memref<1x1x3712xf32, #tpu.memory_space<vmem>>, vector<1x1x3712xf32>,
    return
  }
  func.func @transform_0(%arg0: i32) -> (i32, i32, i32) {
    %c0_i32 = arith.constant 0 : i32
    %c0_i32_0 = arith.constant 0 : i32
    %c0_i32_1 = arith.constant 0 : i32
    return %arg0, %c0_i32, %c0_i32_0 : i32, i32, i32
  }
  func.func @transform_1(%arg0: i32) -> (i32, i32) {
    %c0_i32 = arith.constant 0 : i32
    %c0_i32_0 = arith.constant 0 : i32
    %c0_i32_1 = arith.constant 0 : i32
    return %c0_i32, %c0_i32_0 : i32, i32
  }
  func.func @transform_2(%arg0: i32) -> (i32, i32) {
    %c0_i32 = arith.constant 0 : i32
    %c0_i32_0 = arith.constant 0 : i32
    %c0_i32_1 = arith.constant 0 : i32
    return %c0_i32, %c0_i32_0 : i32, i32
  }
  func.func @transform_3(%arg0: i32) -> (i32, i32) {
    %c0_i32 = arith.constant 0 : i32
    %c0_i32_0 = arith.constant 0 : i32
    %c0_i32_1 = arith.constant 0 : i32
    return %c0_i32, %c0_i32_0 : i32, i32
  }
  func.func @transform_4(%arg0: i32) -> (i32, i32, i32) {
    %c0_i32 = arith.constant 0 : i32
    %c0_i32_0 = arith.constant 0 : i32
    %c0_i32_1 = arith.constant 0 : i32
    return %arg0, %c0_i32, %c0_i32_0 : i32, i32, i32
  }
}

</mosaic_0001>

<llo_original>
// kernel: decoder_forward.5
$region0: #{decoder_forward.5}
  #allocation0 [shape = 'u32[]', space=smem, size = 0x4, offset = 0x4, fixed_abs, tag = 'smem constant byte address 0x4 - core index']
  #allocation1 [shape = 'u32[72,128]{1,0:T(1,128)}', space=vmem, size = 0x9000, scoped, tag = 'internal scratch']
  %s0 = inlined_call_operand.hbm [shape: f32[2,8], index: 0, kind: input, shape index: {}]
  %s1 = inlined_call_operand.hbm [shape: f32[8,128], index: 1, kind: input, shape index: {}]
  %s2 = inlined_call_operand.hbm [shape: f32[1,128], index: 2, kind: input, shape index: {}]
  %s3 = inlined_call_operand.vmem [shape: f32[128,576], index: 3, kind: input, shape index: {}]
  %s4 = inlined_call_operand.hbm [shape: f32[1,576], index: 4, kind: input, shape index: {}]
  %s5 = inlined_call_operand.vmem [shape: f32[2,576], index: 5, kind: output, shape index: {}]
  %s6 = sld [smem:[#allocation0]]
  $region46: #{decoder_forward.5} parent=0
    _
  %s8 = ssub.s32 1, %s6
  %s9 = scalar_select 0, %s8, %s6
  $region1: #{decoder_forward.5} parent=0
    #allocation2 [shape = 'u8[1024]{0}', space=vmem, size = 0x400, scoped, tag = 'input window, operand 0, single buffered']
    #allocation3 [shape = 's32[1]{0}', space=sflag, size = 0x4, scoped, tag = 'scoped memory for decoder_forward.5']
    #allocation4 [shape = 'u8[4096]{0}', space=vmem, size = 0x1000, scoped, tag = 'input window, operand 1, single buffered']
    #allocation5 [shape = 's32[1]{0}', space=sflag, size = 0x4, scoped, tag = 'scoped memory for decoder_forward.5']
    #allocation6 [shape = 'u8[512]{0}', space=vmem, size = 0x400, scoped, tag = 'input window, operand 2, single buffered']
    #allocation7 [shape = 'u8[2560]{0}', space=vmem, size = 0xc00, scoped, tag = 'input window, operand 4, single buffered']
    #allocation8 [shape = 's32[1]{0}', space=sflag, size = 0x4, scoped, tag = 'scoped memory for decoder_forward.5']
    %10 = vsyncpa [#allocation3], 0
    %11 = vsyncpa [#allocation5], 0
    %12 = vsyncpa [#allocation8], 0
    // Predicated region
    $region2: #{decoder_forward.5} parent=1 // pred_check
      _
    $region3: #{decoder_forward.5} parent=1 // pred_check_branch
      %14 = sbr.rel (0) target = $region5
    $region4: #{decoder_forward.5} parent=1 // pred_region
      %16 = vsyncadd [#allocation3], 0
      %s18 = sshll.u32 %s0, 4
      %s19 = int_to_ptr.hbm [resolvable:$true] %s18
      %s20 = sshll.u32 [#allocation2], 4
      %s21 = int_to_ptr.vmem [resolvable:$true] %s20
      %23 = dma.hbm_to_vmem [thread:$0]  %s19, 32, %s21, [#allocation3]
    $region5: #{decoder_forward.5} parent=1 // pred_fallthru
      _
    // Predicated region
    $region6: #{decoder_forward.5} parent=1 // pred_check
      _
    $region7: #{decoder_forward.5} parent=1 // pred_check_branch
      %25 = sbr.rel (0) target = $region9
    $region8: #{decoder_forward.5} parent=1 // pred_region
      %27 = vsyncadd [#allocation5], 0
      %s29 = sshll.u32 %s1, 4
      %s30 = int_to_ptr.hbm [resolvable:$true] %s29
      %s31 = sshll.u32 [#allocation4], 4
      %s32 = int_to_ptr.vmem [resolvable:$true] %s31
      %34 = dma.hbm_to_vmem [thread:$0]  %s30, 128, %s32, [#allocation5]
    $region9: #{decoder_forward.5} parent=1 // pred_fallthru
      _
    // Predicated region
    $region10: #{decoder_forward.5} parent=1 // pred_check
      _
    $region11: #{decoder_forward.5} parent=1 // pred_check_branch
      %36 = sbr.rel (0) target = $region13
    $region12: #{decoder_forward.5} parent=1 // pred_region
      %38 = vsyncadd [#allocation5], 0
      %s40 = sshll.u32 %s2, 4
      %s41 = int_to_ptr.hbm [resolvable:$true] %s40
      %s42 = sshll.u32 [#allocation6], 4
      %s43 = int_to_ptr.vmem [resolvable:$true] %s42
      %45 = dma.hbm_to_vmem [thread:$0]  %s41, 16, %s43, [#allocation5]
    $region13: #{decoder_forward.5} parent=1 // pred_fallthru
      _
    // Predicated region
    $region14: #{decoder_forward.5} parent=1 // pred_check
      _
    $region15: #{decoder_forward.5} parent=1 // pred_check_branch
      %47 = sbr.rel (0) target = $region17
    $region16: #{decoder_forward.5} parent=1 // pred_region
      _
    $region17: #{decoder_forward.5} parent=1 // pred_fallthru
      _
    // Predicated region
    $region18: #{decoder_forward.5} parent=1 // pred_check
      _
    $region19: #{decoder_forward.5} parent=1 // pred_check_branch
      %49 = sbr.rel (0) target = $region21
    $region20: #{decoder_forward.5} parent=1 // pred_region
      %51 = vsyncadd [#allocation8], 0
      %s53 = sshll.u32 %s4, 4
      %s54 = int_to_ptr.hbm [resolvable:$true] %s53
      %s55 = sshll.u32 [#allocation7], 4
      %s56 = int_to_ptr.vmem [resolvable:$true] %s55
      %58 = dma.hbm_to_vmem [thread:$0]  %s54, 80, %s56, [#allocation8]
    $region21: #{decoder_forward.5} parent=1 // pred_fallthru
      _
    // Predicated region
    $region22: #{decoder_forward.5} parent=1 // pred_check
      _
    $region23: #{decoder_forward.5} parent=1 // pred_check_branch
      %60 = sbr.rel (0) target = $region25
    $region24: #{decoder_forward.5} parent=1 // pred_region
      %62 = dma.done [#allocation3], 32
    $region25: #{decoder_forward.5} parent=1 // pred_fallthru
      _
    // Predicated region
    $region26: #{decoder_forward.5} parent=1 // pred_check
      _
    $region27: #{decoder_forward.5} parent=1 // pred_check_branch
      %64 = sbr.rel (0) target = $region29
    $region28: #{decoder_forward.5} parent=1 // pred_region
      %66 = dma.done [#allocation5], 128
    $region29: #{decoder_forward.5} parent=1 // pred_fallthru
      _
    // Predicated region
    $region30: #{decoder_forward.5} parent=1 // pred_check
      _
    $region31: #{decoder_forward.5} parent=1 // pred_check_branch
      %68 = sbr.rel (0) target = $region33
    $region32: #{decoder_forward.5} parent=1 // pred_region
      %70 = dma.done [#allocation5], 16
    $region33: #{decoder_forward.5} parent=1 // pred_fallthru
      _
    // Predicated region
    $region34: #{decoder_forward.5} parent=1 // pred_check
      _
    $region35: #{decoder_forward.5} parent=1 // pred_check_branch
      %72 = sbr.rel (0) target = $region37
    $region36: #{decoder_forward.5} parent=1 // pred_region
      %74 = dma.done [#allocation8], 80
    $region37: #{decoder_forward.5} parent=1 // pred_fallthru
      _
    %v75 = vld [vmem:[#allocation2] sm:$0x3]
    %v76 = vld [vmem:[#allocation4] sm:$0xff]
    %v77 = vld [vmem:[#allocation6] sm:$0x1]
    %v79 = vperm.slane %v77, 0
    %vm81 = vcmask 64512
    %v83 = vsel %vm81, %v75, 0
    %85 = vmatpush.msra.mxu0 0.0
    %86 = vmatpush.msra.mxu0 0.0
    %87 = vmatpush.msra.mxu0 0.0
    %88 = vmatpush.msra.mxu0 0.0
    %89 = vmatpush.msra.mxu0 0.0
    %90 = vmatpush.msra.mxu0 0.0
    %91 = vmatpush.msra.mxu0 0.0
    %92 = vmatpush.msra.mxu0 0.0
    %93 = vmatpush.msra.mxu0 0.0
    %94 = vmatpush.msra.mxu0 0.0
    %95 = vmatpush.msra.mxu0 0.0
    %96 = vmatpush.msra.mxu0 0.0
    %97 = vmatpush.msra.mxu0 0.0
    %98 = vmatpush.msra.mxu0 0.0
    %99 = vmatpush.msra.mxu0 0.0
    %100 = vmatpush.msra.mxu0 %v76
    %101 = vmatmul.f32.gmra.mxu0 %v83
    %v102 = vpop.f32.mrf.mxu0
    %v103 = vadd.f32 %v79, %v102
    %104 = vdwg.mxu0
    %v105 = vmax.f32 %v103, 0.0
    %v106 = vld [vmem:[%s3] sm:$0xff]
    %v107 = vld [vmem:[%s3 + $0x8] sm:$0xff]
    %v108 = vld [vmem:[%s3 + $0x10] sm:$0xff]
    %v109 = vld [vmem:[%s3 + $0x18] sm:$0xff]
    %v110 = vld [vmem:[%s3 + $0x20] sm:$0xff]
    %v111 = vld [vmem:[%s3 + $0x28] sm:$0xff]
    %v112 = vld [vmem:[%s3 + $0x30] sm:$0xff]
    %v113 = vld [vmem:[%s3 + $0x38] sm:$0xff]
    %v114 = vld [vmem:[%s3 + $0x40] sm:$0xff]
    %v115 = vld [vmem:[%s3 + $0x48] sm:$0xff]
    %v116 = vld [vmem:[%s3 + $0x50] sm:$0xff]
    %v117 = vld [vmem:[%s3 + $0x58] sm:$0xff]
    %v118 = vld [vmem:[%s3 + $0x60] sm:$0xff]
    %v119 = vld [vmem:[%s3 + $0x68] sm:$0xff]
    %v120 = vld [vmem:[%s3 + $0x70] sm:$0xff]
    %v121 = vld [vmem:[%s3 + $0x78] sm:$0xff]
    %v122 = vld [vmem:[%s3 + $0x80] sm:$0xff]
    %v123 = vld [vmem:[%s3 + $0x88] sm:$0xff]
    %v124 = vld [vmem:[%s3 + $0x90] sm:$0xff]
    %v125 = vld [vmem:[%s3 + $0x98] sm:$0xff]
    %v126 = vld [vmem:[%s3 + $0xa0] sm:$0xff]
    %v127 = vld [vmem:[%s3 + $0xa8] sm:$0xff]
    %v128 = vld [vmem:[%s3 + $0xb0] sm:$0xff]
    %v129 = vld [vmem:[%s3 + $0xb8] sm:$0xff]
    %v130 = vld [vmem:[%s3 + $0xc0] sm:$0xff]
    %v131 = vld [vmem:[%s3 + $0xc8] sm:$0xff]
    %v132 = vld [vmem:[%s3 + $0xd0] sm:$0xff]
    %v133 = vld [vmem:[%s3 + $0xd8] sm:$0xff]
    %v134 = vld [vmem:[%s3 + $0xe0] sm:$0xff]
    %v135 = vld [vmem:[%s3 + $0xe8] sm:$0xff]
    %v136 = vld [vmem:[%s3 + $0xf0] sm:$0xff]
    %v137 = vld [vmem:[%s3 + $0xf8] sm:$0xff]
    %v138 = vld [vmem:[%s3 + $0x100] sm:$0xff]
    %v139 = vld [vmem:[%s3 + $0x108] sm:$0xff]
    %v140 = vld [vmem:[%s3 + $0x110] sm:$0xff]
    %v141 = vld [vmem:[%s3 + $0x118] sm:$0xff]
    %v142 = vld [vmem:[%s3 + $0x120] sm:$0xff]
    %v143 = vld [vmem:[%s3 + $0x128] sm:$0xff]
    %v144 = vld [vmem:[%s3 + $0x130] sm:$0xff]
    %v145 = vld [vmem:[%s3 + $0x138] sm:$0xff]
    %v146 = vld [vmem:[%s3 + $0x140] sm:$0xff]
    %v147 = vld [vmem:[%s3 + $0x148] sm:$0xff]
    %v148 = vld [vmem:[%s3 + $0x150] sm:$0xff]
    %v149 = vld [vmem:[%s3 + $0x158] sm:$0xff]
    %v150 = vld [vmem:[%s3 + $0x160] sm:$0xff]
    %v151 = vld [vmem:[%s3 + $0x168] sm:$0xff]
    %v152 = vld [vmem:[%s3 + $0x170] sm:$0xff]
    %v153 = vld [vmem:[%s3 + $0x178] sm:$0xff]
    %v154 = vld [vmem:[%s3 + $0x180] sm:$0xff]
    %v155 = vld [vmem:[%s3 + $0x188] sm:$0xff]
    %v156 = vld [vmem:[%s3 + $0x190] sm:$0xff]
    %v157 = vld [vmem:[%s3 + $0x198] sm:$0xff]
    %v158 = vld [vmem:[%s3 + $0x1a0] sm:$0xff]
    %v159 = vld [vmem:[%s3 + $0x1a8] sm:$0xff]
    %v160 = vld [vmem:[%s3 + $0x1b0] sm:$0xff]
    %v161 = vld [vmem:[%s3 + $0x1b8] sm:$0xff]
    %v162 = vld [vmem:[%s3 + $0x1c0] sm:$0xff]
    %v163 = vld [vmem:[%s3 + $0x1c8] sm:$0xff]
    %v164 = vld [vmem:[%s3 + $0x1d0] sm:$0xff]
    %v165 = vld [vmem:[%s3 + $0x1d8] sm:$0xff]
    %v166 = vld [vmem:[%s3 + $0x1e0] sm:$0xff]
    %v167 = vld [vmem:[%s3 + $0x1e8] sm:$0xff]
    %v168 = vld [vmem:[%s3 + $0x1f0] sm:$0xff]
    %v169 = vld [vmem:[%s3 + $0x1f8] sm:$0xff]
    %v170 = vld [vmem:[%s3 + $0x200] sm:$0xff]
    %v171 = vld [vmem:[%s3 + $0x208] sm:$0xff]
    %v172 = vld [vmem:[%s3 + $0x210] sm:$0xff]
    %v173 = vld [vmem:[%s3 + $0x218] sm:$0xff]
    %v174 = vld [vmem:[%s3 + $0x220] sm:$0xff]
    %v175 = vld [vmem:[%s3 + $0x228] sm:$0xff]
    %v176 = vld [vmem:[%s3 + $0x230] sm:$0xff]
    %v177 = vld [vmem:[%s3 + $0x238] sm:$0xff]
    %v178 = vld [vmem:[%s3 + $0x240] sm:$0xff]
    %v179 = vld [vmem:[%s3 + $0x248] sm:$0xff]
    %v180 = vld [vmem:[%s3 + $0x250] sm:$0xff]
    %v181 = vld [vmem:[%s3 + $0x258] sm:$0xff]
    %v182 = vld [vmem:[%s3 + $0x260] sm:$0xff]
    %v183 = vld [vmem:[%s3 + $0x268] sm:$0xff]
    %v184 = vld [vmem:[%s3 + $0x270] sm:$0xff]
    %v185 = vld [vmem:[%s3 + $0x278] sm:$0xff]
    %v186 = vld [vmem:[#allocation7] sm:$0x1f]
    %v188 = vperm.slane %v186, 0
    %v189 = vperm.slane %v186, 1
    %v190 = vperm.slane %v186, 2
    %v191 = vperm.slane %v186, 3
    %v192 = vperm.slane %v186, 4
    %198 = vmatpush.msra.mxu0 %v181
    %199 = vmatpush.msra.mxu0 %v176
    %200 = vmatpush.msra.mxu0 %v171
    %201 = vmatpush.msra.mxu0 %v166
    %202 = vmatpush.msra.mxu0 %v161
    %203 = vmatpush.msra.mxu0 %v156
    %204 = vmatpush.msra.mxu0 %v151
    %205 = vmatpush.msra.mxu0 %v146
    %206 = vmatpush.msra.mxu0 %v141
    %207 = vmatpush.msra.mxu0 %v136
    %208 = vmatpush.msra.mxu0 %v131
    %209 = vmatpush.msra.mxu0 %v126
    %210 = vmatpush.msra.mxu0 %v121
    %211 = vmatpush.msra.mxu0 %v116
    %212 = vmatpush.msra.mxu0 %v111
    %213 = vmatpush.msra.mxu0 %v106
    %214 = vmatmul.f32.gmra.mxu0 %v105
    %v215 = vpop.f32.mrf.mxu0
    %v216 = vadd.f32 %v188, %v215
    %217 = vdwg.mxu0
    %218 = vmatpush.msra.mxu0 %v182
    %219 = vmatpush.msra.mxu0 %v177
    %220 = vmatpush.msra.mxu0 %v172
    %221 = vmatpush.msra.mxu0 %v167
    %222 = vmatpush.msra.mxu0 %v162
    %223 = vmatpush.msra.mxu0 %v157
    %224 = vmatpush.msra.mxu0 %v152
    %225 = vmatpush.msra.mxu0 %v147
    %226 = vmatpush.msra.mxu0 %v142
    %227 = vmatpush.msra.mxu0 %v137
    %228 = vmatpush.msra.mxu0 %v132
    %229 = vmatpush.msra.mxu0 %v127
    %230 = vmatpush.msra.mxu0 %v122
    %231 = vmatpush.msra.mxu0 %v117
    %232 = vmatpush.msra.mxu0 %v112
    %233 = vmatpush.msra.mxu0 %v107
    %234 = vmatmul.f32.gmra.mxu0 %v105
    %v235 = vpop.f32.mrf.mxu0
    %v236 = vadd.f32 %v189, %v235
    %237 = vdwg.mxu0
    %238 = vmatpush.msra.mxu0 %v183
    %239 = vmatpush.msra.mxu0 %v178
    %240 = vmatpush.msra.mxu0 %v173
    %241 = vmatpush.msra.mxu0 %v168
    %242 = vmatpush.msra.mxu0 %v163
    %243 = vmatpush.msra.mxu0 %v158
    %244 = vmatpush.msra.mxu0 %v153
    %245 = vmatpush.msra.mxu0 %v148
    %246 = vmatpush.msra.mxu0 %v143
    %247 = vmatpush.msra.mxu0 %v138
    %248 = vmatpush.msra.mxu0 %v133
    %249 = vmatpush.msra.mxu0 %v128
    %250 = vmatpush.msra.mxu0 %v123
    %251 = vmatpush.msra.mxu0 %v118
    %252 = vmatpush.msra.mxu0 %v113
    %253 = vmatpush.msra.mxu0 %v108
    %254 = vmatmul.f32.gmra.mxu0 %v105
    %v255 = vpop.f32.mrf.mxu0
    %v256 = vadd.f32 %v190, %v255
    %257 = vdwg.mxu0
    %258 = vmatpush.msra.mxu0 %v184
    %259 = vmatpush.msra.mxu0 %v179
    %260 = vmatpush.msra.mxu0 %v174
    %261 = vmatpush.msra.mxu0 %v169
    %262 = vmatpush.msra.mxu0 %v164
    %263 = vmatpush.msra.mxu0 %v159
    %264 = vmatpush.msra.mxu0 %v154
    %265 = vmatpush.msra.mxu0 %v149
    %266 = vmatpush.msra.mxu0 %v144
    %267 = vmatpush.msra.mxu0 %v139
    %268 = vmatpush.msra.mxu0 %v134
    %269 = vmatpush.msra.mxu0 %v129
    %270 = vmatpush.msra.mxu0 %v124
    %271 = vmatpush.msra.mxu0 %v119
    %272 = vmatpush.msra.mxu0 %v114
    %273 = vmatpush.msra.mxu0 %v109
    %274 = vmatmul.f32.gmra.mxu0 %v105
    %v275 = vpop.f32.mrf.mxu0
    %v276 = vadd.f32 %v191, %v275
    %277 = vdwg.mxu0
    %278 = vmatpush.msra.mxu0 %v185
    %279 = vmatpush.msra.mxu0 %v180
    %280 = vmatpush.msra.mxu0 %v175
    %281 = vmatpush.msra.mxu0 %v170
    %282 = vmatpush.msra.mxu0 %v165
    %283 = vmatpush.msra.mxu0 %v160
    %284 = vmatpush.msra.mxu0 %v155
    %285 = vmatpush.msra.mxu0 %v150
    %286 = vmatpush.msra.mxu0 %v145
    %287 = vmatpush.msra.mxu0 %v140
    %288 = vmatpush.msra.mxu0 %v135
    %289 = vmatpush.msra.mxu0 %v130
    %290 = vmatpush.msra.mxu0 %v125
    %291 = vmatpush.msra.mxu0 %v120
    %292 = vmatpush.msra.mxu0 %v115
    %293 = vmatpush.msra.mxu0 %v110
    %294 = vmatmul.f32.gmra.mxu0 %v105
    %v295 = vpop.f32.mrf.mxu0
    %v296 = vadd.f32 %v192, %v295
    %297 = vdwg.mxu0
    %v298 = vmax.f32 %v216, 0.0
    %v299 = vmax.f32 %v236, 0.0
    %v300 = vmax.f32 %v256, 0.0
    %v301 = vmax.f32 %v276, 0.0
    %v302 = vmax.f32 %v296, 0.0
    %v307 = vrot.slane %v299, 6
    %v308 = vrot.slane %v300, 4
    %v309 = vrot.slane %v301, 2
    %vm310 = vcmask 1041408
    %v311 = vsel %vm310, %v298, %v307
    %vm312 = vcmask 1045508
    %v313 = vsel %vm312, %v308, %v309
    %vm314 = vcmask 1043456
    %v315 = vsel %vm314, %v311, %v313
    %317 = vst [vmem:[%s5] sm:$0xff] %v315
    %vm318 = vcmask 517120
    %319 = vst.msk [vmem:[%s5 + $0x8] sm:$0x3] %vm318, %v302
    // Predicated region
    $region38: #{decoder_forward.5} parent=1 // pred_check
      _
    $region39: #{decoder_forward.5} parent=1 // pred_check_branch
      %321 = sbr.rel (0) target = $region41
    $region40: #{decoder_forward.5} parent=1 // pred_region
      _
    $region41: #{decoder_forward.5} parent=1 // pred_fallthru
      _
    // Predicated region
    $region42: #{decoder_forward.5} parent=1 // pred_check
      _
    $region43: #{decoder_forward.5} parent=1 // pred_check_branch
      %323 = sbr.rel (0) target = $region45
    $region44: #{decoder_forward.5} parent=1 // pred_region
      _
    $region45: #{decoder_forward.5} parent=1 // pred_fallthru
      _
    %324 = vsyncpa [#allocation3], 1
    %325 = vsyncpa [#allocation5], 1
    %326 = vsyncpa [#allocation8], 1

// kernel: decoder_forward.6
$region0: #{decoder_forward.6}
  #allocation0 [shape = 'u32[]', space=smem, size = 0x4, offset = 0x4, fixed_abs, tag = 'smem constant byte address 0x4 - core index']
  #allocation1 [shape = 'u32[72,128]{1,0:T(1,128)}', space=vmem, size = 0x9000, scoped, tag = 'internal scratch']
  %s0 = inlined_call_operand.vmem [shape: bf16[2,576,128], index: 0, kind: input, shape index: {}]
  %s1 = inlined_call_operand.vmem [shape: bf16[32,576], index: 1, kind: input, shape index: {}]
  %s2 = inlined_call_operand.vmem [shape: f32[32,1], index: 2, kind: input, shape index: {}]
  %s3 = inlined_call_operand.vmem [shape: f32[32,1], index: 3, kind: input, shape index: {}]
  %s4 = inlined_call_operand.vmem [shape: bf16[2,32,128], index: 4, kind: output, shape index: {}]
  %s5 = sld [smem:[#allocation0]]
  $region49: #{decoder_forward.6} parent=0
    _
  %s7 = ssub.s32 1, %s5
  %s8 = scalar_select 0, %s7, %s5
  loop: start=0, step=1, limit=4
  $region2: #{decoder_forward.6} parent=0 // loop_pre_header
    _
  $region3: #{decoder_forward.6} parent=0 // loop_header
    %s10 = sphi 0, %s14
    %p11 = scmp.ge.s32.totalorder %s10, 4
    %s20 = sphi 0, %s22
    %s23 = sphi 0, %s20
    %s24 = sphi 0, %s23
    %s40 = sphi 0, %s24
    %s44 = sphi 0, %s44
    %s46 = sphi 0, %s44
    %s47 = sphi 0, %s46
    %s61 = sphi 0, %s47
    %s65 = sphi 0, %s65
    %s67 = sphi 0, %s65
    %s68 = sphi 0, %s67
    %s82 = sphi 0, %s68
    %s86 = sphi 0, %s86
    %s88 = sphi 0, %s86
    %s89 = sphi 0, %s88
    %s103 = sphi 0, %s89
    %s109 = sphi 0, %s111
    %s112 = sphi 0, %s109
    %s113 = sphi 0, %s112
    %s129 = sphi 0, %s113
  $region4: #{decoder_forward.6} parent=0 // loop_header_branch
    %13 = sbr.rel (%p11) target = $region8
  $region5: #{decoder_forward.6} parent=0 // loop_body
    %s15 = ssub.s32 %s10, 1
    %s16 = ssub.s32 %s10, 2
    %s17 = sadd.s32 %s10, 1
    %s18 = ssub.s32 %s10, %s17
    %p19 = scmp.eq.s32.totalorder %s18, 0
    %s21 = sadd.s32 %s20, 1
    %s22 = scalar_select %p19, %s20, %s21
    %p25 = pneg %p19
    %p26 = scmp.eq.s32.totalorder %s10, 1
    %p27 = por %p25, %p26
    %p28 = scmp.ne.s32.totalorder %s20, %s23
    %p29 = scmp.eq.s32.totalorder %s10, 0
    %p30 = por %p28, %p29
    %p31 = scmp.ne.s32.totalorder %s20, %s23
    %p32 = scmp.eq.s32.totalorder %s15, 1
    %p33 = por %p31, %p32
    %p34 = scmp.ne.s32.totalorder %s23, %s24
    %p35 = scmp.eq.s32.totalorder %s15, 0
    %p36 = por %p34, %p35
    %p37 = scmp.ne.s32.totalorder %s23, %s24
    %p38 = scmp.eq.s32.totalorder %s16, 1
    %p39 = por %p37, %p38
    %p41 = scmp.ne.s32.totalorder %s24, %s40
    %p42 = scmp.eq.s32.totalorder %s16, 0
    %p43 = por %p41, %p42
    %s45 = sadd.s32 %s44, 1
    %p48 = scmp.eq.s32.totalorder %s10, 1
    %p49 = scmp.ne.s32.totalorder %s44, %s46
    %p50 = scmp.eq.s32.totalorder %s10, 0
    %p51 = por %p49, %p50
    %p52 = scmp.ne.s32.totalorder %s44, %s46
    %p53 = scmp.eq.s32.totalorder %s15, 1
    %p54 = por %p52, %p53
    %p55 = scmp.ne.s32.totalorder %s46, %s47
    %p56 = scmp.eq.s32.totalorder %s15, 0
    %p57 = por %p55, %p56
    %p58 = scmp.ne.s32.totalorder %s46, %s47
    %p59 = scmp.eq.s32.totalorder %s16, 1
    %p60 = por %p58, %p59
    %p62 = scmp.ne.s32.totalorder %s47, %s61
    %p63 = scmp.eq.s32.totalorder %s16, 0
    %p64 = por %p62, %p63
    %s66 = sadd.s32 %s65, 1
    %p69 = scmp.eq.s32.totalorder %s10, 1
    %p70 = scmp.ne.s32.totalorder %s65, %s67
    %p71 = scmp.eq.s32.totalorder %s10, 0
    %p72 = por %p70, %p71
    %p73 = scmp.ne.s32.totalorder %s65, %s67
    %p74 = scmp.eq.s32.totalorder %s15, 1
    %p75 = por %p73, %p74
    %p76 = scmp.ne.s32.totalorder %s67, %s68
    %p77 = scmp.eq.s32.totalorder %s15, 0
    %p78 = por %p76, %p77
    %p79 = scmp.ne.s32.totalorder %s67, %s68
    %p80 = scmp.eq.s32.totalorder %s16, 1
    %p81 = por %p79, %p80
    %p83 = scmp.ne.s32.totalorder %s68, %s82
    %p84 = scmp.eq.s32.totalorder %s16, 0
    %p85 = por %p83, %p84
    %s87 = sadd.s32 %s86, 1
    %p90 = scmp.eq.s32.totalorder %s10, 1
    %p91 = scmp.ne.s32.totalorder %s86, %s88
    %p92 = scmp.eq.s32.totalorder %s10, 0
    %p93 = por %p91, %p92
    %p94 = scmp.ne.s32.totalorder %s86, %s88
    %p95 = scmp.eq.s32.totalorder %s15, 1
    %p96 = por %p94, %p95
    %p97 = scmp.ne.s32.totalorder %s88, %s89
    %p98 = scmp.eq.s32.totalorder %s15, 0
    %p99 = por %p97, %p98
    %p100 = scmp.ne.s32.totalorder %s88, %s89
    %p101 = scmp.eq.s32.totalorder %s16, 1
    %p102 = por %p100, %p101
    %p104 = scmp.ne.s32.totalorder %s89, %s103
    %p105 = scmp.eq.s32.totalorder %s16, 0
    %p106 = por %p104, %p105
    %s107 = ssub.s32 %s10, %s17
    %p108 = scmp.eq.s32.totalorder %s107, 0
    %s110 = sadd.s32 %s109, 1
    %s111 = scalar_select %p108, %s109, %s110
    %p114 = pneg %p108
    %p115 = scmp.eq.s32.totalorder %s10, 1
    %p116 = por %p114, %p115
    %p117 = scmp.ne.s32.totalorder %s109, %s112
    %p118 = scmp.eq.s32.totalorder %s10, 0
    %p119 = por %p117, %p118
    %p120 = scmp.ne.s32.totalorder %s109, %s112
    %p121 = scmp.eq.s32.totalorder %s15, 1
    %p122 = por %p120, %p121
    %p123 = scmp.ne.s32.totalorder %s112, %s113
    %p124 = scmp.eq.s32.totalorder %s15, 0
    %p125 = por %p123, %p124
    %p126 = scmp.ne.s32.totalorder %s112, %s113
    %p127 = scmp.eq.s32.totalorder %s16, 1
    %p128 = por %p126, %p127
    %p130 = scmp.ne.s32.totalorder %s113, %s129
    %p131 = scmp.eq.s32.totalorder %s16, 0
    %p132 = por %p130, %p131
    %p133 = scmp.le.s32.totalorder 1, %s10
    %p134 = scmp.lt.s32.totalorder %s10, 3
    %p135 = pnand %p133, %p134
    %p136 = pneg %p135
    // Predicated region
    $region9: #{decoder_forward.6} parent=5 // pred_check
      _
    $region10: #{decoder_forward.6} parent=5 // pred_check_branch
      %138 = sbr.rel (%p135) target = $region12
    $region11: #{decoder_forward.6} parent=5 // pred_region
      %s139 = ssub.s32 %s10, 1
      // Predicated region
      $region13: #{decoder_forward.6} parent=11 // pred_check
        %p140 = pneg %p57
      $region14: #{decoder_forward.6} parent=11 // pred_check_branch
        %142 = sbr.rel (%p140) target = $region16
      $region15: #{decoder_forward.6} parent=11 // pred_region
        _
      $region16: #{decoder_forward.6} parent=11 // pred_fallthru
        _
      // Predicated region
      $region17: #{decoder_forward.6} parent=11 // pred_check
        %p143 = pneg %p78
      $region18: #{decoder_forward.6} parent=11 // pred_check_branch
        %145 = sbr.rel (%p143) target = $region20
      $region19: #{decoder_forward.6} parent=11 // pred_region
        _
      $region20: #{decoder_forward.6} parent=11 // pred_fallthru
        _
      // Predicated region
      $region21: #{decoder_forward.6} parent=11 // pred_check
        %p146 = pneg %p99
      $region22: #{decoder_forward.6} parent=11 // pred_check_branch
        %148 = sbr.rel (%p146) target = $region24
      $region23: #{decoder_forward.6} parent=11 // pred_region
        _
      $region24: #{decoder_forward.6} parent=11 // pred_fallthru
        _
    $region12: #{decoder_forward.6} parent=5 // pred_fallthru
      _
    %p149 = scmp.lt.s32.totalorder %s10, 2
    // Predicated region
    $region25: #{decoder_forward.6} parent=5 // pred_check
      %p150 = pneg %p149
    $region26: #{decoder_forward.6} parent=5 // pred_check_branch
      %152 = sbr.rel (%p150) target = $region28
    $region27: #{decoder_forward.6} parent=5 // pred_region
      // Predicated region
      $region29: #{decoder_forward.6} parent=27 // pred_check
        %p153 = pneg %p30
      $region30: #{decoder_forward.6} parent=27 // pred_check_branch
        %155 = sbr.rel (%p153) target = $region32
      $region31: #{decoder_forward.6} parent=27 // pred_region
        %p156 = scmp.lt.s32.totalorder %s10, 1
        %s157 = scalar_select %p156, %s10, 1
        %s158 = smul.addr %s157, 72
        %s159 = smul.addr %s158, 4
        %s160 = scalar_lea.vmem %s0, %s159
      $region32: #{decoder_forward.6} parent=27 // pred_fallthru
        _
    $region28: #{decoder_forward.6} parent=5 // pred_fallthru
      _
    %p161 = scmp.le.s32.totalorder 1, %s10
    %p162 = scmp.lt.s32.totalorder %s10, 3
    %p163 = pnand %p161, %p162
    %p164 = pneg %p163
    // Predicated region
    $region33: #{decoder_forward.6} parent=5 // pred_check
      _
    $region34: #{decoder_forward.6} parent=5 // pred_check_branch
      %166 = sbr.rel (%p163) target = $region36
    $region35: #{decoder_forward.6} parent=5 // pred_region
      %s167 = ssub.s32 %s10, 1
      %p168 = scmp.lt.s32.totalorder %s15, 1
      %s169 = scalar_select %p168, %s15, 1
      %s170 = smul.addr %s169, 72
      %s171 = smul.addr %s170, 4
      %s172 = scalar_lea.vmem %s0, %s171
      %p173 = pneg %p36
      %p174 = pneg %p33
      %p175 = pneg %p57
      %p176 = pneg %p54
      %p177 = pneg %p78
      %p178 = pneg %p75
      %p179 = pneg %p99
      %p180 = pneg %p96
      %p181 = pneg %p125
      %p182 = pneg %p122
      %p183 = scmp.lt.s32.totalorder %s15, 1
      %s184 = scalar_select %p183, %s15, 1
      %s185 = smul.addr %s184, 4
      %s186 = smul.addr %s185, 4
      %s187 = scalar_lea.vmem %s4, %s186
      %p188 = scmp.lt.s32.totalorder %s15, 1
      %s189 = scalar_select %p188, %s15, 1
      %s190 = smul.addr %s189, 72
      %s191 = smul.addr %s190, 4
      %s192 = scalar_lea.vmem %s0, %s191
      %p193 = scmp.lt.s32.totalorder %s15, 1
      %s194 = scalar_select %p193, %s15, 1
      %s195 = smul.addr %s194, 4
      %s196 = smul.addr %s195, 4
      %s197 = scalar_lea.vmem %s4, %s196
      %v199 = vld [vmem:[%s1] sm:$0xff]
      %v200 = vld [vmem:[%s1 + $0x8] sm:$0xff]
      %v201 = vld [vmem:[%s1 + $0x10] sm:$0xf]
      %v202 = vld [vmem:[%s1 + $0x14] sm:$0xff]
      %v203 = vld [vmem:[%s1 + $0x1c] sm:$0xff]
      %v204 = vld [vmem:[%s1 + $0x24] sm:$0xf]
      %v205 = vld [vmem:[%s1 + $0x28] sm:$0xff]
      %v206 = vld [vmem:[%s1 + $0x30] sm:$0xff]
      %v207 = vld [vmem:[%s1 + $0x38] sm:$0xf]
      %v208 = vld [vmem:[%s1 + $0x3c] sm:$0xff]
      %v209 = vld [vmem:[%s1 + $0x44] sm:$0xff]
      %v210 = vld [vmem:[%s1 + $0x4c] sm:$0xf]
      %v211 = vld [vmem:[%s192] sm:$0xf]
      %v212 = vld [vmem:[%s192 + $0x4] sm:$0xf]
      %v213 = vld [vmem:[%s192 + $0x8] sm:$0xf]
      %v214 = vld [vmem:[%s192 + $0xc] sm:$0xf]
      %v215 = vld [vmem:[%s192 + $0x10] sm:$0xf]
      %v216 = vld [vmem:[%s192 + $0x14] sm:$0xf]
      %v217 = vld [vmem:[%s192 + $0x18] sm:$0xf]
      %v218 = vld [vmem:[%s192 + $0x1c] sm:$0xf]
      %v219 = vld [vmem:[%s192 + $0x20] sm:$0xf]
      %v220 = vld [vmem:[%s192 + $0x24] sm:$0xf]
      %v221 = vld [vmem:[%s192 + $0x28] sm:$0xf]
      %v222 = vld [vmem:[%s192 + $0x2c] sm:$0xf]
      %v223 = vld [vmem:[%s192 + $0x30] sm:$0xf]
      %v224 = vld [vmem:[%s192 + $0x34] sm:$0xf]
      %v225 = vld [vmem:[%s192 + $0x38] sm:$0xf]
      %v226 = vld [vmem:[%s192 + $0x3c] sm:$0xf]
      %v227 = vld [vmem:[%s192 + $0x40] sm:$0xf]
      %v228 = vld [vmem:[%s192 + $0x44] sm:$0xf]
      %v229 = vld [vmem:[%s192 + $0x48] sm:$0xf]
      %v230 = vld [vmem:[%s192 + $0x4c] sm:$0xf]
      %v231 = vld [vmem:[%s192 + $0x50] sm:$0xf]
      %v232 = vld [vmem:[%s192 + $0x54] sm:$0xf]
      %v233 = vld [vmem:[%s192 + $0x58] sm:$0xf]
      %v234 = vld [vmem:[%s192 + $0x5c] sm:$0xf]
      %v235 = vld [vmem:[%s192 + $0x60] sm:$0xf]
      %v236 = vld [vmem:[%s192 + $0x64] sm:$0xf]
      %v237 = vld [vmem:[%s192 + $0x68] sm:$0xf]
      %v238 = vld [vmem:[%s192 + $0x6c] sm:$0xf]
      %v239 = vld [vmem:[%s192 + $0x70] sm:$0xf]
      %v240 = vld [vmem:[%s192 + $0x74] sm:$0xf]
      %v241 = vld [vmem:[%s192 + $0x78] sm:$0xf]
      %v242 = vld [vmem:[%s192 + $0x7c] sm:$0xf]
      %v243 = vld [vmem:[%s192 + $0x80] sm:$0xf]
      %v244 = vld [vmem:[%s192 + $0x84] sm:$0xf]
      %v245 = vld [vmem:[%s192 + $0x88] sm:$0xf]
      %v246 = vld [vmem:[%s192 + $0x8c] sm:$0xf]
      %v247 = vld [vmem:[%s192 + $0x90] sm:$0xf]
      %v248 = vld [vmem:[%s192 + $0x94] sm:$0xf]
      %v249 = vld [vmem:[%s192 + $0x98] sm:$0xf]
      %v250 = vld [vmem:[%s192 + $0x9c] sm:$0xf]
      %v251 = vld [vmem:[%s192 + $0xa0] sm:$0xf]
      %v252 = vld [vmem:[%s192 + $0xa4] sm:$0xf]
      %v253 = vld [vmem:[%s192 + $0xa8] sm:$0xf]
      %v254 = vld [vmem:[%s192 + $0xac] sm:$0xf]
      %v255 = vld [vmem:[%s192 + $0xb0] sm:$0xf]
      %v256 = vld [vmem:[%s192 + $0xb4] sm:$0xf]
      %v257 = vld [vmem:[%s192 + $0xb8] sm:$0xf]
      %v258 = vld [vmem:[%s192 + $0xbc] sm:$0xf]
      %v259 = vld [vmem:[%s192 + $0xc0] sm:$0xf]
      %v260 = vld [vmem:[%s192 + $0xc4] sm:$0xf]
      %v261 = vld [vmem:[%s192 + $0xc8] sm:$0xf]
      %v262 = vld [vmem:[%s192 + $0xcc] sm:$0xf]
      %v263 = vld [vmem:[%s192 + $0xd0] sm:$0xf]
      %v264 = vld [vmem:[%s192 + $0xd4] sm:$0xf]
      %v265 = vld [vmem:[%s192 + $0xd8] sm:$0xf]
      %v266 = vld [vmem:[%s192 + $0xdc] sm:$0xf]
      %v267 = vld [vmem:[%s192 + $0xe0] sm:$0xf]
      %v268 = vld [vmem:[%s192 + $0xe4] sm:$0xf]
      %v269 = vld [vmem:[%s192 + $0xe8] sm:$0xf]
      %v270 = vld [vmem:[%s192 + $0xec] sm:$0xf]
      %v271 = vld [vmem:[%s192 + $0xf0] sm:$0xf]
      %v272 = vld [vmem:[%s192 + $0xf4] sm:$0xf]
      %v273 = vld [vmem:[%s192 + $0xf8] sm:$0xf]
      %v274 = vld [vmem:[%s192 + $0xfc] sm:$0xf]
      %v275 = vld [vmem:[%s192 + $0x100] sm:$0xf]
      %v276 = vld [vmem:[%s192 + $0x104] sm:$0xf]
      %v277 = vld [vmem:[%s192 + $0x108] sm:$0xf]
      %v278 = vld [vmem:[%s192 + $0x10c] sm:$0xf]
      %v279 = vld [vmem:[%s192 + $0x110] sm:$0xf]
      %v280 = vld [vmem:[%s192 + $0x114] sm:$0xf]
      %v281 = vld [vmem:[%s192 + $0x118] sm:$0xf]
      %v282 = vld [vmem:[%s192 + $0x11c] sm:$0xf]
      %v295 = vunpack.c.l.b16 %v199
      %v296 = vunpack.c.h.b16 %v199
      %v297 = vunpack.c.l.b16 %v200
      %v298 = vunpack.c.h.b16 %v200
      %v299 = vunpack.c.l.b16 %v201
      %v300 = vunpack.c.l.b16 %v202
      %v301 = vunpack.c.h.b16 %v202
      %v302 = vunpack.c.l.b16 %v203
      %v303 = vunpack.c.h.b16 %v203
      %v304 = vunpack.c.l.b16 %v204
      %v305 = vunpack.c.l.b16 %v205
      %v306 = vunpack.c.h.b16 %v205
      %v307 = vunpack.c.l.b16 %v206
      %v308 = vunpack.c.h.b16 %v206
      %v309 = vunpack.c.l.b16 %v207
      %v310 = vunpack.c.l.b16 %v208
      %v311 = vunpack.c.h.b16 %v208
      %v312 = vunpack.c.l.b16 %v209
      %v313 = vunpack.c.h.b16 %v209
      %v314 = vunpack.c.l.b16 %v210
      %v315 = vpack.c.b16 %v300, %v295
      %v316 = vpack.c.b16 %v301, %v296
      %v317 = vpack.c.b16 %v302, %v297
      %v318 = vpack.c.b16 %v303, %v298
      %v319 = vpack.c.b16 %v304, %v299
      %v320 = vpack.c.b16 %v310, %v305
      %v321 = vpack.c.b16 %v311, %v306
      %v322 = vpack.c.b16 %v312, %v307
      %v323 = vpack.c.b16 %v313, %v308
      %v324 = vpack.c.b16 %v314, %v309
      %v405 = vunpack.c.l.b16 %v211
      %v406 = vunpack.c.l.b16 %v212
      %v407 = vunpack.c.l.b16 %v213
      %v408 = vunpack.c.l.b16 %v214
      %v409 = vunpack.c.l.b16 %v215
      %v410 = vunpack.c.l.b16 %v216
      %v411 = vunpack.c.l.b16 %v217
      %v412 = vunpack.c.l.b16 %v218
      %v413 = vunpack.c.l.b16 %v219
      %v414 = vunpack.c.l.b16 %v220
      %v415 = vunpack.c.l.b16 %v221
      %v416 = vunpack.c.l.b16 %v222
      %v417 = vunpack.c.l.b16 %v223
      %v418 = vunpack.c.l.b16 %v224
      %v419 = vunpack.c.l.b16 %v225
      %v420 = vunpack.c.l.b16 %v226
      %v421 = vunpack.c.l.b16 %v227
      %v422 = vunpack.c.l.b16 %v228
      %v423 = vunpack.c.l.b16 %v229
      %v424 = vunpack.c.l.b16 %v230
      %v425 = vunpack.c.l.b16 %v231
      %v426 = vunpack.c.l.b16 %v232
      %v427 = vunpack.c.l.b16 %v233
      %v428 = vunpack.c.l.b16 %v234
      %v429 = vunpack.c.l.b16 %v235
      %v430 = vunpack.c.l.b16 %v236
      %v431 = vunpack.c.l.b16 %v237
      %v432 = vunpack.c.l.b16 %v238
      %v433 = vunpack.c.l.b16 %v239
      %v434 = vunpack.c.l.b16 %v240
      %v435 = vunpack.c.l.b16 %v241
      %v436 = vunpack.c.l.b16 %v242
      %v437 = vunpack.c.l.b16 %v243
      %v438 = vunpack.c.l.b16 %v244
      %v439 = vunpack.c.l.b16 %v245
      %v440 = vunpack.c.l.b16 %v246
      %v441 = vunpack.c.l.b16 %v247
      %v442 = vunpack.c.l.b16 %v248
      %v443 = vunpack.c.l.b16 %v249
      %v444 = vunpack.c.l.b16 %v250
      %v445 = vunpack.c.l.b16 %v251
      %v446 = vunpack.c.l.b16 %v252
      %v447 = vunpack.c.l.b16 %v253
      %v448 = vunpack.c.l.b16 %v254
      %v449 = vunpack.c.l.b16 %v255
      %v450 = vunpack.c.l.b16 %v256
      %v451 = vunpack.c.l.b16 %v257
      %v452 = vunpack.c.l.b16 %v258
      %v453 = vunpack.c.l.b16 %v259
      %v454 = vunpack.c.l.b16 %v260
      %v455 = vunpack.c.l.b16 %v261
      %v456 = vunpack.c.l.b16 %v262
      %v457 = vunpack.c.l.b16 %v263
      %v458 = vunpack.c.l.b16 %v264
      %v459 = vunpack.c.l.b16 %v265
      %v460 = vunpack.c.l.b16 %v266
      %v461 = vunpack.c.l.b16 %v267
      %v462 = vunpack.c.l.b16 %v268
      %v463 = vunpack.c.l.b16 %v269
      %v464 = vunpack.c.l.b16 %v270
      %v465 = vunpack.c.l.b16 %v271
      %v466 = vunpack.c.l.b16 %v272
      %v467 = vunpack.c.l.b16 %v273
      %v468 = vunpack.c.l.b16 %v274
      %v469 = vunpack.c.l.b16 %v275
      %v470 = vunpack.c.l.b16 %v276
      %v471 = vunpack.c.l.b16 %v277
      %v472 = vunpack.c.l.b16 %v278
      %v473 = vunpack.c.l.b16 %v279
      %v474 = vunpack.c.l.b16 %v280
      %v475 = vunpack.c.l.b16 %v281
      %v476 = vunpack.c.l.b16 %v282
      %v477 = vpack.c.b16 %v406, %v405
      %v478 = vpack.c.b16 %v408, %v407
      %v479 = vpack.c.b16 %v410, %v409
      %v480 = vpack.c.b16 %v412, %v411
      %v481 = vpack.c.b16 %v414, %v413
      %v482 = vpack.c.b16 %v416, %v415
      %v483 = vpack.c.b16 %v418, %v417
      %v484 = vpack.c.b16 %v420, %v419
      %v485 = vpack.c.b16 %v422, %v421
      %v486 = vpack.c.b16 %v424, %v423
      %v487 = vpack.c.b16 %v426, %v425
      %v488 = vpack.c.b16 %v428, %v427
      %v489 = vpack.c.b16 %v430, %v429
      %v490 = vpack.c.b16 %v432, %v431
      %v491 = vpack.c.b16 %v434, %v433
      %v492 = vpack.c.b16 %v436, %v435
      %v493 = vpack.c.b16 %v438, %v437
      %v494 = vpack.c.b16 %v440, %v439
      %v495 = vpack.c.b16 %v442, %v441
      %v496 = vpack.c.b16 %v444, %v443
      %v497 = vpack.c.b16 %v446, %v445
      %v498 = vpack.c.b16 %v448, %v447
      %v499 = vpack.c.b16 %v450, %v449
      %v500 = vpack.c.b16 %v452, %v451
      %v501 = vpack.c.b16 %v454, %v453
      %v502 = vpack.c.b16 %v456, %v455
      %v503 = vpack.c.b16 %v458, %v457
      %v504 = vpack.c.b16 %v460, %v459
      %v505 = vpack.c.b16 %v462, %v461
      %v506 = vpack.c.b16 %v464, %v463
      %v507 = vpack.c.b16 %v466, %v465
      %v508 = vpack.c.b16 %v468, %v467
      %v509 = vpack.c.b16 %v470, %v469
      %v510 = vpack.c.b16 %v472, %v471
      %v511 = vpack.c.b16 %v474, %v473
      %v512 = vpack.c.b16 %v476, %v475
      %vm549 = vcmask 523264
      %v551 = vsel %vm549, %v319, 0
      %v554 = vsel %vm549, %v324, 0
      %556 = vmatpush.bf16.msra.mxu0 %v484
      %557 = vmatpush.bf16.msra.mxu0 %v483
      %558 = vmatpush.bf16.msra.mxu0 %v482
      %559 = vmatpush.bf16.msra.mxu0 %v481
      %560 = vmatpush.bf16.msra.mxu0 %v480
      %561 = vmatpush.bf16.msra.mxu0 %v479
      %562 = vmatpush.bf16.msra.mxu0 %v478
      %563 = vmatpush.bf16.msra.mxu0 %v477
      %564 = vmatmul.bf16.gmra.mxu0 %v315
      %v565 = vpop.f32.mrf.mxu0
      %v566 = vadd.f32 0.0, %v565
      %v567 = vpop.f32.mrf.mxu0
      %v568 = vadd.f32 0.0, %v567
      %569 = vmatmul.bf16.gmra.mxu0 %v320
      %v570 = vpop.f32.mrf.mxu0
      %v571 = vadd.f32 0.0, %v570
      %v572 = vpop.f32.mrf.mxu0
      %v573 = vadd.f32 0.0, %v572
      %574 = vdwg.mxu0
      %575 = vmatpush.bf16.msra.mxu0 %v492
      %576 = vmatpush.bf16.msra.mxu0 %v491
      %577 = vmatpush.bf16.msra.mxu0 %v490
      %578 = vmatpush.bf16.msra.mxu0 %v489
      %579 = vmatpush.bf16.msra.mxu0 %v488
      %580 = vmatpush.bf16.msra.mxu0 %v487
      %581 = vmatpush.bf16.msra.mxu0 %v486
      %582 = vmatpush.bf16.msra.mxu0 %v485
      %583 = vmatmul.bf16.gmra.mxu0 %v316
      %v584 = vpop.f32.mrf.mxu0
      %v585 = vadd.f32 %v566, %v584
      %v586 = vpop.f32.mrf.mxu0
      %v587 = vadd.f32 %v568, %v586
      %588 = vmatmul.bf16.gmra.mxu0 %v321
      %v589 = vpop.f32.mrf.mxu0
      %v590 = vadd.f32 %v571, %v589
      %v591 = vpop.f32.mrf.mxu0
      %v592 = vadd.f32 %v573, %v591
      %593 = vdwg.mxu0
      %594 = vmatpush.bf16.msra.mxu0 %v500
      %595 = vmatpush.bf16.msra.mxu0 %v499
      %596 = vmatpush.bf16.msra.mxu0 %v498
      %597 = vmatpush.bf16.msra.mxu0 %v497
      %598 = vmatpush.bf16.msra.mxu0 %v496
      %599 = vmatpush.bf16.msra.mxu0 %v495
      %600 = vmatpush.bf16.msra.mxu0 %v494
      %601 = vmatpush.bf16.msra.mxu0 %v493
      %602 = vmatmul.bf16.gmra.mxu0 %v317
      %v603 = vpop.f32.mrf.mxu0
      %v604 = vadd.f32 %v585, %v603
      %v605 = vpop.f32.mrf.mxu0
      %v606 = vadd.f32 %v587, %v605
      %607 = vmatmul.bf16.gmra.mxu0 %v322
      %v608 = vpop.f32.mrf.mxu0
      %v609 = vadd.f32 %v590, %v608
      %v610 = vpop.f32.mrf.mxu0
      %v611 = vadd.f32 %v592, %v610
      %612 = vdwg.mxu0
      %613 = vmatpush.bf16.msra.mxu0 %v508
      %614 = vmatpush.bf16.msra.mxu0 %v507
      %615 = vmatpush.bf16.msra.mxu0 %v506
      %616 = vmatpush.bf16.msra.mxu0 %v505
      %617 = vmatpush.bf16.msra.mxu0 %v504
      %618 = vmatpush.bf16.msra.mxu0 %v503
      %619 = vmatpush.bf16.msra.mxu0 %v502
      %620 = vmatpush.bf16.msra.mxu0 %v501
      %621 = vmatmul.bf16.gmra.mxu0 %v318
      %v622 = vpop.f32.mrf.mxu0
      %v623 = vadd.f32 %v604, %v622
      %v624 = vpop.f32.mrf.mxu0
      %v625 = vadd.f32 %v606, %v624
      %626 = vmatmul.bf16.gmra.mxu0 %v323
      %v627 = vpop.f32.mrf.mxu0
      %v628 = vadd.f32 %v609, %v627
      %v629 = vpop.f32.mrf.mxu0
      %v630 = vadd.f32 %v611, %v629
      %631 = vdwg.mxu0
      %632 = vmatpush.bf16.msra.mxu0 0
      %633 = vmatpush.bf16.msra.mxu0 0
      %634 = vmatpush.bf16.msra.mxu0 0
      %635 = vmatpush.bf16.msra.mxu0 0
      %636 = vmatpush.bf16.msra.mxu0 %v512
      %637 = vmatpush.bf16.msra.mxu0 %v511
      %638 = vmatpush.bf16.msra.mxu0 %v510
      %639 = vmatpush.bf16.msra.mxu0 %v509
      %640 = vmatmul.bf16.gmra.mxu0 %v551
      %v641 = vpop.f32.mrf.mxu0
      %v642 = vadd.f32 %v623, %v641
      %v643 = vpop.f32.mrf.mxu0
      %v644 = vadd.f32 %v625, %v643
      %645 = vmatmul.bf16.gmra.mxu0 %v554
      %v646 = vpop.f32.mrf.mxu0
      %v647 = vadd.f32 %v628, %v646
      %v648 = vpop.f32.mrf.mxu0
      %v649 = vadd.f32 %v630, %v648
      %650 = vdwg.mxu0
      %v651 = vld [vmem:[%s2] sm:$0xff]
      %v652 = vld [vmem:[%s2 + $0x8] sm:$0xff]
      %v653 = vld [vmem:[%s2 + $0x10] sm:$0xff]
      %v654 = vld [vmem:[%s2 + $0x18] sm:$0xff]
      %656 = vset.pattern.permute.xlu0 0
      %657 = vperm.xlu0 %656, %v651
      %v658 = vpop.permute.xlu0 %657
      %661 = vset.pattern.permute.xlu0 0
      %662 = vperm.xlu0 %661, %v652
      %v663 = vpop.permute.xlu0 %662
      %666 = vset.pattern.permute.xlu0 0
      %667 = vperm.xlu0 %666, %v653
      %v668 = vpop.permute.xlu0 %667
      %671 = vset.pattern.permute.xlu0 0
      %672 = vperm.xlu0 %671, %v654
      %v673 = vpop.permute.xlu0 %672
      %v675 = vmul.f32 %v642, %v658
      %v676 = vmul.f32 %v644, %v663
      %v677 = vmul.f32 %v647, %v668
      %v678 = vmul.f32 %v649, %v673
      %v679 = vld [vmem:[%s3] sm:$0xff]
      %v680 = vld [vmem:[%s3 + $0x8] sm:$0xff]
      %v681 = vld [vmem:[%s3 + $0x10] sm:$0xff]
      %v682 = vld [vmem:[%s3 + $0x18] sm:$0xff]
      %684 = vset.pattern.permute.xlu0 0
      %685 = vperm.xlu0 %684, %v679
      %v686 = vpop.permute.xlu0 %685
      %689 = vset.pattern.permute.xlu0 0
      %690 = vperm.xlu0 %689, %v680
      %v691 = vpop.permute.xlu0 %690
      %694 = vset.pattern.permute.xlu0 0
      %695 = vperm.xlu0 %694, %v681
      %v696 = vpop.permute.xlu0 %695
      %699 = vset.pattern.permute.xlu0 0
      %700 = vperm.xlu0 %699, %v682
      %v701 = vpop.permute.xlu0 %700
      %v703 = vadd.f32 %v675, %v686
      %v704 = vadd.f32 %v676, %v691
      %v705 = vadd.f32 %v677, %v696
      %v706 = vadd.f32 %v678, %v701
      %v707 = vmax.f32 %v703, 0.0
      %v708 = vmax.f32 %v704, 0.0
      %v709 = vmax.f32 %v705, 0.0
      %v710 = vmax.f32 %v706, 0.0
      %v711 = vpack.c.bf16 %v707, %v707
      %v712 = vpack.c.bf16 %v708, %v708
      %v713 = vpack.c.bf16 %v709, %v709
      %v714 = vpack.c.bf16 %v710, %v710
      %715 = vst [vmem:[%s197] sm:$0xf] %v711
      %716 = vst [vmem:[%s197 + $0x4] sm:$0xf] %v712
      %717 = vst [vmem:[%s197 + $0x8] sm:$0xf] %v713
      %718 = vst [vmem:[%s197 + $0xc] sm:$0xf] %v714
      %p719 = scmp.lt.s32.totalorder %s15, 1
      %s720 = scalar_select %p719, %s15, 1
      %s721 = smul.addr %s720, 4
      %s722 = smul.addr %s721, 4
      %s723 = scalar_lea.vmem %s4, %s722
      // Predicated region
      $region37: #{decoder_forward.6} parent=35 // pred_check
        %p724 = pneg %p122
      $region38: #{decoder_forward.6} parent=35 // pred_check_branch
        %726 = sbr.rel (%p724) target = $region40
      $region39: #{decoder_forward.6} parent=35 // pred_region
        _
      $region40: #{decoder_forward.6} parent=35 // pred_fallthru
        _
    $region36: #{decoder_forward.6} parent=5 // pred_fallthru
      _
    %p727 = scmp.le.s32.totalorder 2, %s10
    // Predicated region
    $region41: #{decoder_forward.6} parent=5 // pred_check
      %p728 = pneg %p727
    $region42: #{decoder_forward.6} parent=5 // pred_check_branch
      %730 = sbr.rel (%p728) target = $region44
    $region43: #{decoder_forward.6} parent=5 // pred_region
      %s731 = ssub.s32 %s10, 2
      // Predicated region
      $region45: #{decoder_forward.6} parent=43 // pred_check
        %p732 = pneg %p128
      $region46: #{decoder_forward.6} parent=43 // pred_check_branch
        %734 = sbr.rel (%p732) target = $region48
      $region47: #{decoder_forward.6} parent=43 // pred_region
        %p735 = scmp.lt.s32.totalorder %s16, 1
        %s736 = scalar_select %p735, %s16, 1
        %s737 = smul.addr %s736, 4
        %s738 = smul.addr %s737, 4
        %s739 = scalar_lea.vmem %s4, %s738
      $region48: #{decoder_forward.6} parent=43 // pred_fallthru
        _
    $region44: #{decoder_forward.6} parent=5 // pred_fallthru
      _
  $region6: #{decoder_forward.6} parent=0 // loop_footer
    %s14 = sadd.s32 1, %s10
  $region7: #{decoder_forward.6} parent=0 // loop_footer_branch
    %9 = sbr.rel target = $region3
  $region8: #{decoder_forward.6} parent=0 // loop_exit
    _

// kernel: decoder_forward.7
$region0: #{decoder_forward.7}
  #allocation0 [shape = 'u32[]', space=smem, size = 0x4, offset = 0x4, fixed_abs, tag = 'smem constant byte address 0x4 - core index']
  #allocation1 [shape = 'u32[72,128]{1,0:T(1,128)}', space=vmem, size = 0x9000, scoped, tag = 'internal scratch']
  %s0 = inlined_call_operand.vmem [shape: bf16[2,288,256], index: 0, kind: input, shape index: {}]
  %s1 = inlined_call_operand.vmem [shape: bf16[16,288], index: 1, kind: input, shape index: {}]
  %s2 = inlined_call_operand.vmem [shape: f32[16,1], index: 2, kind: input, shape index: {}]
  %s3 = inlined_call_operand.vmem [shape: f32[16,1], index: 3, kind: input, shape index: {}]
  %s4 = inlined_call_operand.vmem [shape: bf16[2,16,256], index: 4, kind: output, shape index: {}]
  %s5 = sld [smem:[#allocation0]]
  $region49: #{decoder_forward.7} parent=0
    _
  %s7 = ssub.s32 1, %s5
  %s8 = scalar_select 0, %s7, %s5
  loop: start=0, step=1, limit=4
  $region2: #{decoder_forward.7} parent=0 // loop_pre_header
    _
  $region3: #{decoder_forward.7} parent=0 // loop_header
    %s10 = sphi 0, %s14
    %p11 = scmp.ge.s32.totalorder %s10, 4
    %s20 = sphi 0, %s22
    %s23 = sphi 0, %s20
    %s24 = sphi 0, %s23
    %s40 = sphi 0, %s24
    %s44 = sphi 0, %s44
    %s46 = sphi 0, %s44
    %s47 = sphi 0, %s46
    %s61 = sphi 0, %s47
    %s65 = sphi 0, %s65
    %s67 = sphi 0, %s65
    %s68 = sphi 0, %s67
    %s82 = sphi 0, %s68
    %s86 = sphi 0, %s86
    %s88 = sphi 0, %s86
    %s89 = sphi 0, %s88
    %s103 = sphi 0, %s89
    %s109 = sphi 0, %s111
    %s112 = sphi 0, %s109
    %s113 = sphi 0, %s112
    %s129 = sphi 0, %s113
  $region4: #{decoder_forward.7} parent=0 // loop_header_branch
    %13 = sbr.rel (%p11) target = $region8
  $region5: #{decoder_forward.7} parent=0 // loop_body
    %s15 = ssub.s32 %s10, 1
    %s16 = ssub.s32 %s10, 2
    %s17 = sadd.s32 %s10, 1
    %s18 = ssub.s32 %s10, %s17
    %p19 = scmp.eq.s32.totalorder %s18, 0
    %s21 = sadd.s32 %s20, 1
    %s22 = scalar_select %p19, %s20, %s21
    %p25 = pneg %p19
    %p26 = scmp.eq.s32.totalorder %s10, 1
    %p27 = por %p25, %p26
    %p28 = scmp.ne.s32.totalorder %s20, %s23
    %p29 = scmp.eq.s32.totalorder %s10, 0
    %p30 = por %p28, %p29
    %p31 = scmp.ne.s32.totalorder %s20, %s23
    %p32 = scmp.eq.s32.totalorder %s15, 1
    %p33 = por %p31, %p32
    %p34 = scmp.ne.s32.totalorder %s23, %s24
    %p35 = scmp.eq.s32.totalorder %s15, 0
    %p36 = por %p34, %p35
    %p37 = scmp.ne.s32.totalorder %s23, %s24
    %p38 = scmp.eq.s32.totalorder %s16, 1
    %p39 = por %p37, %p38
    %p41 = scmp.ne.s32.totalorder %s24, %s40
    %p42 = scmp.eq.s32.totalorder %s16, 0
    %p43 = por %p41, %p42
    %s45 = sadd.s32 %s44, 1
    %p48 = scmp.eq.s32.totalorder %s10, 1
    %p49 = scmp.ne.s32.totalorder %s44, %s46
    %p50 = scmp.eq.s32.totalorder %s10, 0
    %p51 = por %p49, %p50
    %p52 = scmp.ne.s32.totalorder %s44, %s46
    %p53 = scmp.eq.s32.totalorder %s15, 1
    %p54 = por %p52, %p53
    %p55 = scmp.ne.s32.totalorder %s46, %s47
    %p56 = scmp.eq.s32.totalorder %s15, 0
    %p57 = por %p55, %p56
    %p58 = scmp.ne.s32.totalorder %s46, %s47
    %p59 = scmp.eq.s32.totalorder %s16, 1
    %p60 = por %p58, %p59
    %p62 = scmp.ne.s32.totalorder %s47, %s61
    %p63 = scmp.eq.s32.totalorder %s16, 0
    %p64 = por %p62, %p63
    %s66 = sadd.s32 %s65, 1
    %p69 = scmp.eq.s32.totalorder %s10, 1
    %p70 = scmp.ne.s32.totalorder %s65, %s67
    %p71 = scmp.eq.s32.totalorder %s10, 0
    %p72 = por %p70, %p71
    %p73 = scmp.ne.s32.totalorder %s65, %s67
    %p74 = scmp.eq.s32.totalorder %s15, 1
    %p75 = por %p73, %p74
    %p76 = scmp.ne.s32.totalorder %s67, %s68
    %p77 = scmp.eq.s32.totalorder %s15, 0
    %p78 = por %p76, %p77
    %p79 = scmp.ne.s32.totalorder %s67, %s68
    %p80 = scmp.eq.s32.totalorder %s16, 1
    %p81 = por %p79, %p80
    %p83 = scmp.ne.s32.totalorder %s68, %s82
    %p84 = scmp.eq.s32.totalorder %s16, 0
    %p85 = por %p83, %p84
    %s87 = sadd.s32 %s86, 1
    %p90 = scmp.eq.s32.totalorder %s10, 1
    %p91 = scmp.ne.s32.totalorder %s86, %s88
    %p92 = scmp.eq.s32.totalorder %s10, 0
    %p93 = por %p91, %p92
    %p94 = scmp.ne.s32.totalorder %s86, %s88
    %p95 = scmp.eq.s32.totalorder %s15, 1
    %p96 = por %p94, %p95
    %p97 = scmp.ne.s32.totalorder %s88, %s89
    %p98 = scmp.eq.s32.totalorder %s15, 0
    %p99 = por %p97, %p98
    %p100 = scmp.ne.s32.totalorder %s88, %s89
    %p101 = scmp.eq.s32.totalorder %s16, 1
    %p102 = por %p100, %p101
    %p104 = scmp.ne.s32.totalorder %s89, %s103
    %p105 = scmp.eq.s32.totalorder %s16, 0
    %p106 = por %p104, %p105
    %s107 = ssub.s32 %s10, %s17
    %p108 = scmp.eq.s32.totalorder %s107, 0
    %s110 = sadd.s32 %s109, 1
    %s111 = scalar_select %p108, %s109, %s110
    %p114 = pneg %p108
    %p115 = scmp.eq.s32.totalorder %s10, 1
    %p116 = por %p114, %p115
    %p117 = scmp.ne.s32.totalorder %s109, %s112
    %p118 = scmp.eq.s32.totalorder %s10, 0
    %p119 = por %p117, %p118
    %p120 = scmp.ne.s32.totalorder %s109, %s112
    %p121 = scmp.eq.s32.totalorder %s15, 1
    %p122 = por %p120, %p121
    %p123 = scmp.ne.s32.totalorder %s112, %s113
    %p124 = scmp.eq.s32.totalorder %s15, 0
    %p125 = por %p123, %p124
    %p126 = scmp.ne.s32.totalorder %s112, %s113
    %p127 = scmp.eq.s32.totalorder %s16, 1
    %p128 = por %p126, %p127
    %p130 = scmp.ne.s32.totalorder %s113, %s129
    %p131 = scmp.eq.s32.totalorder %s16, 0
    %p132 = por %p130, %p131
    %p133 = scmp.le.s32.totalorder 1, %s10
    %p134 = scmp.lt.s32.totalorder %s10, 3
    %p135 = pnand %p133, %p134
    %p136 = pneg %p135
    // Predicated region
    $region9: #{decoder_forward.7} parent=5 // pred_check
      _
    $region10: #{decoder_forward.7} parent=5 // pred_check_branch
      %138 = sbr.rel (%p135) target = $region12
    $region11: #{decoder_forward.7} parent=5 // pred_region
      %s139 = ssub.s32 %s10, 1
      // Predicated region
      $region13: #{decoder_forward.7} parent=11 // pred_check
        %p140 = pneg %p57
      $region14: #{decoder_forward.7} parent=11 // pred_check_branch
        %142 = sbr.rel (%p140) target = $region16
      $region15: #{decoder_forward.7} parent=11 // pred_region
        _
      $region16: #{decoder_forward.7} parent=11 // pred_fallthru
        _
      // Predicated region
      $region17: #{decoder_forward.7} parent=11 // pred_check
        %p143 = pneg %p78
      $region18: #{decoder_forward.7} parent=11 // pred_check_branch
        %145 = sbr.rel (%p143) target = $region20
      $region19: #{decoder_forward.7} parent=11 // pred_region
        _
      $region20: #{decoder_forward.7} parent=11 // pred_fallthru
        _
      // Predicated region
      $region21: #{decoder_forward.7} parent=11 // pred_check
        %p146 = pneg %p99
      $region22: #{decoder_forward.7} parent=11 // pred_check_branch
        %148 = sbr.rel (%p146) target = $region24
      $region23: #{decoder_forward.7} parent=11 // pred_region
        _
      $region24: #{decoder_forward.7} parent=11 // pred_fallthru
        _
    $region12: #{decoder_forward.7} parent=5 // pred_fallthru
      _
    %p149 = scmp.lt.s32.totalorder %s10, 2
    // Predicated region
    $region25: #{decoder_forward.7} parent=5 // pred_check
      %p150 = pneg %p149
    $region26: #{decoder_forward.7} parent=5 // pred_check_branch
      %152 = sbr.rel (%p150) target = $region28
    $region27: #{decoder_forward.7} parent=5 // pred_region
      // Predicated region
      $region29: #{decoder_forward.7} parent=27 // pred_check
        %p153 = pneg %p30
      $region30: #{decoder_forward.7} parent=27 // pred_check_branch
        %155 = sbr.rel (%p153) target = $region32
      $region31: #{decoder_forward.7} parent=27 // pred_region
        %p156 = scmp.lt.s32.totalorder %s10, 1
        %s157 = scalar_select %p156, %s10, 1
        %s158 = smul.addr %s157, 72
        %s159 = smul.addr %s158, 4
        %s160 = scalar_lea.vmem %s0, %s159
      $region32: #{decoder_forward.7} parent=27 // pred_fallthru
        _
    $region28: #{decoder_forward.7} parent=5 // pred_fallthru
      _
    %p161 = scmp.le.s32.totalorder 1, %s10
    %p162 = scmp.lt.s32.totalorder %s10, 3
    %p163 = pnand %p161, %p162
    %p164 = pneg %p163
    // Predicated region
    $region33: #{decoder_forward.7} parent=5 // pred_check
      _
    $region34: #{decoder_forward.7} parent=5 // pred_check_branch
      %166 = sbr.rel (%p163) target = $region36
    $region35: #{decoder_forward.7} parent=5 // pred_region
      %s167 = ssub.s32 %s10, 1
      %p168 = scmp.lt.s32.totalorder %s15, 1
      %s169 = scalar_select %p168, %s15, 1
      %s170 = smul.addr %s169, 72
      %s171 = smul.addr %s170, 4
      %s172 = scalar_lea.vmem %s0, %s171
      %p173 = pneg %p36
      %p174 = pneg %p33
      %p175 = pneg %p57
      %p176 = pneg %p54
      %p177 = pneg %p78
      %p178 = pneg %p75
      %p179 = pneg %p99
      %p180 = pneg %p96
      %p181 = pneg %p125
      %p182 = pneg %p122
      %p183 = scmp.lt.s32.totalorder %s15, 1
      %s184 = scalar_select %p183, %s15, 1
      %s185 = smul.addr %s184, 4
      %s186 = smul.addr %s185, 4
      %s187 = scalar_lea.vmem %s4, %s186
      %p188 = scmp.lt.s32.totalorder %s15, 1
      %s189 = scalar_select %p188, %s15, 1
      %s190 = smul.addr %s189, 72
      %s191 = smul.addr %s190, 4
      %s192 = scalar_lea.vmem %s0, %s191
      %p193 = scmp.lt.s32.totalorder %s15, 1
      %s194 = scalar_select %p193, %s15, 1
      %s195 = smul.addr %s194, 4
      %s196 = smul.addr %s195, 4
      %s197 = scalar_lea.vmem %s4, %s196
      %v199 = vld [vmem:[%s1] sm:$0xff]
      %v200 = vld [vmem:[%s1 + $0x8] sm:$0xf]
      %v201 = vld [vmem:[%s1 + $0xc] sm:$0xff]
      %v202 = vld [vmem:[%s1 + $0x14] sm:$0xf]
      %v203 = vld [vmem:[%s192] sm:$0xff]
      %v204 = vld [vmem:[%s192 + $0x8] sm:$0xff]
      %v205 = vld [vmem:[%s192 + $0x10] sm:$0xff]
      %v206 = vld [vmem:[%s192 + $0x18] sm:$0xff]
      %v207 = vld [vmem:[%s192 + $0x20] sm:$0xff]
      %v208 = vld [vmem:[%s192 + $0x28] sm:$0xff]
      %v209 = vld [vmem:[%s192 + $0x30] sm:$0xff]
      %v210 = vld [vmem:[%s192 + $0x38] sm:$0xff]
      %v211 = vld [vmem:[%s192 + $0x40] sm:$0xff]
      %v212 = vld [vmem:[%s192 + $0x48] sm:$0xff]
      %v213 = vld [vmem:[%s192 + $0x50] sm:$0xff]
      %v214 = vld [vmem:[%s192 + $0x58] sm:$0xff]
      %v215 = vld [vmem:[%s192 + $0x60] sm:$0xff]
      %v216 = vld [vmem:[%s192 + $0x68] sm:$0xff]
      %v217 = vld [vmem:[%s192 + $0x70] sm:$0xff]
      %v218 = vld [vmem:[%s192 + $0x78] sm:$0xff]
      %v219 = vld [vmem:[%s192 + $0x80] sm:$0xff]
      %v220 = vld [vmem:[%s192 + $0x88] sm:$0xff]
      %v221 = vld [vmem:[%s192 + $0x90] sm:$0xff]
      %v222 = vld [vmem:[%s192 + $0x98] sm:$0xff]
      %v223 = vld [vmem:[%s192 + $0xa0] sm:$0xff]
      %v224 = vld [vmem:[%s192 + $0xa8] sm:$0xff]
      %v225 = vld [vmem:[%s192 + $0xb0] sm:$0xff]
      %v226 = vld [vmem:[%s192 + $0xb8] sm:$0xff]
      %v227 = vld [vmem:[%s192 + $0xc0] sm:$0xff]
      %v228 = vld [vmem:[%s192 + $0xc8] sm:$0xff]
      %v229 = vld [vmem:[%s192 + $0xd0] sm:$0xff]
      %v230 = vld [vmem:[%s192 + $0xd8] sm:$0xff]
      %v231 = vld [vmem:[%s192 + $0xe0] sm:$0xff]
      %v232 = vld [vmem:[%s192 + $0xe8] sm:$0xff]
      %v233 = vld [vmem:[%s192 + $0xf0] sm:$0xff]
      %v234 = vld [vmem:[%s192 + $0xf8] sm:$0xff]
      %v235 = vld [vmem:[%s192 + $0x100] sm:$0xff]
      %v236 = vld [vmem:[%s192 + $0x108] sm:$0xff]
      %v237 = vld [vmem:[%s192 + $0x110] sm:$0xff]
      %v238 = vld [vmem:[%s192 + $0x118] sm:$0xff]
      %v243 = vunpack.c.l.b16 %v199
      %v244 = vunpack.c.h.b16 %v199
      %v245 = vunpack.c.l.b16 %v200
      %v246 = vunpack.c.l.b16 %v201
      %v247 = vunpack.c.h.b16 %v201
      %v248 = vunpack.c.l.b16 %v202
      %v249 = vpack.c.b16 %v246, %v243
      %v250 = vpack.c.b16 %v247, %v244
      %v251 = vpack.c.b16 %v248, %v245
      %v290 = vunpack.c.l.b16 %v203
      %v291 = vunpack.c.h.b16 %v203
      %v292 = vunpack.c.l.b16 %v204
      %v293 = vunpack.c.h.b16 %v204
      %v294 = vunpack.c.l.b16 %v205
      %v295 = vunpack.c.h.b16 %v205
      %v296 = vunpack.c.l.b16 %v206
      %v297 = vunpack.c.h.b16 %v206
      %v298 = vunpack.c.l.b16 %v207
      %v299 = vunpack.c.h.b16 %v207
      %v300 = vunpack.c.l.b16 %v208
      %v301 = vunpack.c.h.b16 %v208
      %v302 = vunpack.c.l.b16 %v209
      %v303 = vunpack.c.h.b16 %v209
      %v304 = vunpack.c.l.b16 %v210
      %v305 = vunpack.c.h.b16 %v210
      %v306 = vunpack.c.l.b16 %v211
      %v307 = vunpack.c.h.b16 %v211
      %v308 = vunpack.c.l.b16 %v212
      %v309 = vunpack.c.h.b16 %v212
      %v310 = vunpack.c.l.b16 %v213
      %v311 = vunpack.c.h.b16 %v213
      %v312 = vunpack.c.l.b16 %v214
      %v313 = vunpack.c.h.b16 %v214
      %v314 = vunpack.c.l.b16 %v215
      %v315 = vunpack.c.h.b16 %v215
      %v316 = vunpack.c.l.b16 %v216
      %v317 = vunpack.c.h.b16 %v216
      %v318 = vunpack.c.l.b16 %v217
      %v319 = vunpack.c.h.b16 %v217
      %v320 = vunpack.c.l.b16 %v218
      %v321 = vunpack.c.h.b16 %v218
      %v322 = vunpack.c.l.b16 %v219
      %v323 = vunpack.c.h.b16 %v219
      %v324 = vunpack.c.l.b16 %v220
      %v325 = vunpack.c.h.b16 %v220
      %v326 = vunpack.c.l.b16 %v221
      %v327 = vunpack.c.h.b16 %v221
      %v328 = vunpack.c.l.b16 %v222
      %v329 = vunpack.c.h.b16 %v222
      %v330 = vunpack.c.l.b16 %v223
      %v331 = vunpack.c.h.b16 %v223
      %v332 = vunpack.c.l.b16 %v224
      %v333 = vunpack.c.h.b16 %v224
      %v334 = vunpack.c.l.b16 %v225
      %v335 = vunpack.c.h.b16 %v225
      %v336 = vunpack.c.l.b16 %v226
      %v337 = vunpack.c.h.b16 %v226
      %v338 = vunpack.c.l.b16 %v227
      %v339 = vunpack.c.h.b16 %v227
      %v340 = vunpack.c.l.b16 %v228
      %v341 = vunpack.c.h.b16 %v228
      %v342 = vunpack.c.l.b16 %v229
      %v343 = vunpack.c.h.b16 %v229
      %v344 = vunpack.c.l.b16 %v230
      %v345 = vunpack.c.h.b16 %v230
      %v346 = vunpack.c.l.b16 %v231
      %v347 = vunpack.c.h.b16 %v231
      %v348 = vunpack.c.l.b16 %v232
      %v349 = vunpack.c.h.b16 %v232
      %v350 = vunpack.c.l.b16 %v233
      %v351 = vunpack.c.h.b16 %v233
      %v352 = vunpack.c.l.b16 %v234
      %v353 = vunpack.c.h.b16 %v234
      %v354 = vunpack.c.l.b16 %v235
      %v355 = vunpack.c.h.b16 %v235
      %v356 = vunpack.c.l.b16 %v236
      %v357 = vunpack.c.h.b16 %v236
      %v358 = vunpack.c.l.b16 %v237
      %v359 = vunpack.c.h.b16 %v237
      %v360 = vunpack.c.l.b16 %v238
      %v361 = vunpack.c.h.b16 %v238
      %v362 = vpack.c.b16 %v292, %v290
      %v363 = vpack.c.b16 %v293, %v291
      %v364 = vpack.c.b16 %v296, %v294
      %v365 = vpack.c.b16 %v297, %v295
      %v366 = vpack.c.b16 %v300, %v298
      %v367 = vpack.c.b16 %v301, %v299
      %v368 = vpack.c.b16 %v304, %v302
      %v369 = vpack.c.b16 %v305, %v303
      %v370 = vpack.c.b16 %v308, %v306
      %v371 = vpack.c.b16 %v309, %v307
      %v372 = vpack.c.b16 %v312, %v310
      %v373 = vpack.c.b16 %v313, %v311
      %v374 = vpack.c.b16 %v316, %v314
      %v375 = vpack.c.b16 %v317, %v315
      %v376 = vpack.c.b16 %v320, %v318
      %v377 = vpack.c.b16 %v321, %v319
      %v378 = vpack.c.b16 %v324, %v322
      %v379 = vpack.c.b16 %v325, %v323
      %v380 = vpack.c.b16 %v328, %v326
      %v381 = vpack.c.b16 %v329, %v327
      %v382 = vpack.c.b16 %v332, %v330
      %v383 = vpack.c.b16 %v333, %v331
      %v384 = vpack.c.b16 %v336, %v334
      %v385 = vpack.c.b16 %v337, %v335
      %v386 = vpack.c.b16 %v340, %v338
      %v387 = vpack.c.b16 %v341, %v339
      %v388 = vpack.c.b16 %v344, %v342
      %v389 = vpack.c.b16 %v345, %v343
      %v390 = vpack.c.b16 %v348, %v346
      %v391 = vpack.c.b16 %v349, %v347
      %v392 = vpack.c.b16 %v352, %v350
      %v393 = vpack.c.b16 %v353, %v351
      %v394 = vpack.c.b16 %v356, %v354
      %v395 = vpack.c.b16 %v357, %v355
      %v396 = vpack.c.b16 %v360, %v358
      %v397 = vpack.c.b16 %v361, %v359
      %vm434 = vcmask 261120
      %v436 = vsel %vm434, %v251, 0
      %438 = vmatpush.bf16.msra.mxu0 %v376
      %439 = vmatpush.bf16.msra.mxu0 %v374
      %440 = vmatpush.bf16.msra.mxu0 %v372
      %441 = vmatpush.bf16.msra.mxu0 %v370
      %442 = vmatpush.bf16.msra.mxu0 %v368
      %443 = vmatpush.bf16.msra.mxu0 %v366
      %444 = vmatpush.bf16.msra.mxu0 %v364
      %445 = vmatpush.bf16.msra.mxu0 %v362
      %446 = vmatmul.bf16.gmra.mxu0 %v249
      %v447 = vpop.f32.mrf.mxu0
      %v448 = vadd.f32 0.0, %v447
      %v449 = vpop.f32.mrf.mxu0
      %v450 = vadd.f32 0.0, %v449
      %451 = vdwg.mxu0
      %452 = vmatpush.bf16.msra.mxu0 %v392
      %453 = vmatpush.bf16.msra.mxu0 %v390
      %454 = vmatpush.bf16.msra.mxu0 %v388
      %455 = vmatpush.bf16.msra.mxu0 %v386
      %456 = vmatpush.bf16.msra.mxu0 %v384
      %457 = vmatpush.bf16.msra.mxu0 %v382
      %458 = vmatpush.bf16.msra.mxu0 %v380
      %459 = vmatpush.bf16.msra.mxu0 %v378
      %460 = vmatmul.bf16.gmra.mxu0 %v250
      %v461 = vpop.f32.mrf.mxu0
      %v462 = vadd.f32 %v448, %v461
      %v463 = vpop.f32.mrf.mxu0
      %v464 = vadd.f32 %v450, %v463
      %465 = vdwg.mxu0
      %466 = vmatpush.bf16.msra.mxu0 0
      %467 = vmatpush.bf16.msra.mxu0 0
      %468 = vmatpush.bf16.msra.mxu0 0
      %469 = vmatpush.bf16.msra.mxu0 0
      %470 = vmatpush.bf16.msra.mxu0 0
      %471 = vmatpush.bf16.msra.mxu0 0
      %472 = vmatpush.bf16.msra.mxu0 %v396
      %473 = vmatpush.bf16.msra.mxu0 %v394
      %474 = vmatmul.bf16.gmra.mxu0 %v436
      %v475 = vpop.f32.mrf.mxu0
      %v476 = vadd.f32 %v462, %v475
      %v477 = vpop.f32.mrf.mxu0
      %v478 = vadd.f32 %v464, %v477
      %479 = vdwg.mxu0
      %480 = vmatpush.bf16.msra.mxu0 %v377
      %481 = vmatpush.bf16.msra.mxu0 %v375
      %482 = vmatpush.bf16.msra.mxu0 %v373
      %483 = vmatpush.bf16.msra.mxu0 %v371
      %484 = vmatpush.bf16.msra.mxu0 %v369
      %485 = vmatpush.bf16.msra.mxu0 %v367
      %486 = vmatpush.bf16.msra.mxu0 %v365
      %487 = vmatpush.bf16.msra.mxu0 %v363
      %488 = vmatmul.bf16.gmra.mxu0 %v249
      %v489 = vpop.f32.mrf.mxu0
      %v490 = vadd.f32 0.0, %v489
      %v491 = vpop.f32.mrf.mxu0
      %v492 = vadd.f32 0.0, %v491
      %493 = vdwg.mxu0
      %494 = vmatpush.bf16.msra.mxu0 %v393
      %495 = vmatpush.bf16.msra.mxu0 %v391
      %496 = vmatpush.bf16.msra.mxu0 %v389
      %497 = vmatpush.bf16.msra.mxu0 %v387
      %498 = vmatpush.bf16.msra.mxu0 %v385
      %499 = vmatpush.bf16.msra.mxu0 %v383
      %500 = vmatpush.bf16.msra.mxu0 %v381
      %501 = vmatpush.bf16.msra.mxu0 %v379
      %502 = vmatmul.bf16.gmra.mxu0 %v250
      %v503 = vpop.f32.mrf.mxu0
      %v504 = vadd.f32 %v490, %v503
      %v505 = vpop.f32.mrf.mxu0
      %v506 = vadd.f32 %v492, %v505
      %507 = vdwg.mxu0
      %508 = vmatpush.bf16.msra.mxu0 0
      %509 = vmatpush.bf16.msra.mxu0 0
      %510 = vmatpush.bf16.msra.mxu0 0
      %511 = vmatpush.bf16.msra.mxu0 0
      %512 = vmatpush.bf16.msra.mxu0 0
      %513 = vmatpush.bf16.msra.mxu0 0
      %514 = vmatpush.bf16.msra.mxu0 %v397
      %515 = vmatpush.bf16.msra.mxu0 %v395
      %516 = vmatmul.bf16.gmra.mxu0 %v436
      %v517 = vpop.f32.mrf.mxu0
      %v518 = vadd.f32 %v504, %v517
      %v519 = vpop.f32.mrf.mxu0
      %v520 = vadd.f32 %v506, %v519
      %521 = vdwg.mxu0
      %v522 = vld [vmem:[%s2] sm:$0xff]
      %v523 = vld [vmem:[%s2 + $0x8] sm:$0xff]
      %525 = vset.pattern.permute.xlu0 0
      %526 = vperm.xlu0 %525, %v522
      %v527 = vpop.permute.xlu0 %526
      %530 = vset.pattern.permute.xlu0 0
      %531 = vperm.xlu0 %530, %v523
      %v532 = vpop.permute.xlu0 %531
      %v534 = vmul.f32 %v476, %v527
      %v535 = vmul.f32 %v518, %v527
      %v536 = vmul.f32 %v478, %v532
      %v537 = vmul.f32 %v520, %v532
      %v538 = vld [vmem:[%s3] sm:$0xff]
      %v539 = vld [vmem:[%s3 + $0x8] sm:$0xff]
      %541 = vset.pattern.permute.xlu0 0
      %542 = vperm.xlu0 %541, %v538
      %v543 = vpop.permute.xlu0 %542
      %546 = vset.pattern.permute.xlu0 0
      %547 = vperm.xlu0 %546, %v539
      %v548 = vpop.permute.xlu0 %547
      %v550 = vadd.f32 %v534, %v543
      %v551 = vadd.f32 %v535, %v543
      %v552 = vadd.f32 %v536, %v548
      %v553 = vadd.f32 %v537, %v548
      %v554 = vmax.f32 %v550, 0.0
      %v555 = vmax.f32 %v551, 0.0
      %v556 = vmax.f32 %v552, 0.0
      %v557 = vmax.f32 %v553, 0.0
      %v558 = vpack.c.bf16 %v555, %v554
      %v559 = vpack.c.bf16 %v557, %v556
      %560 = vst [vmem:[%s197] sm:$0xff] %v558
      %561 = vst [vmem:[%s197 + $0x8] sm:$0xff] %v559
      %p562 = scmp.lt.s32.totalorder %s15, 1
      %s563 = scalar_select %p562, %s15, 1
      %s564 = smul.addr %s563, 4
      %s565 = smul.addr %s564, 4
      %s566 = scalar_lea.vmem %s4, %s565
      // Predicated region
      $region37: #{decoder_forward.7} parent=35 // pred_check
        %p567 = pneg %p122
      $region38: #{decoder_forward.7} parent=35 // pred_check_branch
        %569 = sbr.rel (%p567) target = $region40
      $region39: #{decoder_forward.7} parent=35 // pred_region
        _
      $region40: #{decoder_forward.7} parent=35 // pred_fallthru
        _
    $region36: #{decoder_forward.7} parent=5 // pred_fallthru
      _
    %p570 = scmp.le.s32.totalorder 2, %s10
    // Predicated region
    $region41: #{decoder_forward.7} parent=5 // pred_check
      %p571 = pneg %p570
    $region42: #{decoder_forward.7} parent=5 // pred_check_branch
      %573 = sbr.rel (%p571) target = $region44
    $region43: #{decoder_forward.7} parent=5 // pred_region
      %s574 = ssub.s32 %s10, 2
      // Predicated region
      $region45: #{decoder_forward.7} parent=43 // pred_check
        %p575 = pneg %p128
      $region46: #{decoder_forward.7} parent=43 // pred_check_branch
        %577 = sbr.rel (%p575) target = $region48
      $region47: #{decoder_forward.7} parent=43 // pred_region
        %p578 = scmp.lt.s32.totalorder %s16, 1
        %s579 = scalar_select %p578, %s16, 1
        %s580 = smul.addr %s579, 4
        %s581 = smul.addr %s580, 4
        %s582 = scalar_lea.vmem %s4, %s581
      $region48: #{decoder_forward.7} parent=43 // pred_fallthru
        _
    $region44: #{decoder_forward.7} parent=5 // pred_fallthru
      _
  $region6: #{decoder_forward.7} parent=0 // loop_footer
    %s14 = sadd.s32 1, %s10
  $region7: #{decoder_forward.7} parent=0 // loop_footer_branch
    %9 = sbr.rel target = $region3
  $region8: #{decoder_forward.7} parent=0 // loop_exit
    _

// kernel: decoder_forward.8
$region0: #{decoder_forward.8}
  #allocation0 [shape = 'u32[]', space=smem, size = 0x4, offset = 0x4, fixed_abs, tag = 'smem constant byte address 0x4 - core index']
  #allocation1 [shape = 'u32[72,128]{1,0:T(1,128)}', space=vmem, size = 0x9000, scoped, tag = 'internal scratch']
  %s0 = inlined_call_operand.vmem [shape: bf16[2,144,1024], index: 0, kind: input, shape index: {}]
  %s1 = inlined_call_operand.vmem [shape: bf16[8,144], index: 1, kind: input, shape index: {}]
  %s2 = inlined_call_operand.vmem [shape: f32[8,1], index: 2, kind: input, shape index: {}]
  %s3 = inlined_call_operand.vmem [shape: f32[8,1], index: 3, kind: input, shape index: {}]
  %s4 = inlined_call_operand.vmem [shape: bf16[2,8,1024], index: 4, kind: output, shape index: {}]
  %s5 = sld [smem:[#allocation0]]
  $region49: #{decoder_forward.8} parent=0
    _
  %s7 = ssub.s32 1, %s5
  %s8 = scalar_select 0, %s7, %s5
  loop: start=0, step=1, limit=4
  $region2: #{decoder_forward.8} parent=0 // loop_pre_header
    _
  $region3: #{decoder_forward.8} parent=0 // loop_header
    %s10 = sphi 0, %s14
    %p11 = scmp.ge.s32.totalorder %s10, 4
    %s20 = sphi 0, %s22
    %s23 = sphi 0, %s20
    %s24 = sphi 0, %s23
    %s40 = sphi 0, %s24
    %s44 = sphi 0, %s44
    %s46 = sphi 0, %s44
    %s47 = sphi 0, %s46
    %s61 = sphi 0, %s47
    %s65 = sphi 0, %s65
    %s67 = sphi 0, %s65
    %s68 = sphi 0, %s67
    %s82 = sphi 0, %s68
    %s86 = sphi 0, %s86
    %s88 = sphi 0, %s86
    %s89 = sphi 0, %s88
    %s103 = sphi 0, %s89
    %s109 = sphi 0, %s111
    %s112 = sphi 0, %s109
    %s113 = sphi 0, %s112
    %s129 = sphi 0, %s113
  $region4: #{decoder_forward.8} parent=0 // loop_header_branch
    %13 = sbr.rel (%p11) target = $region8
  $region5: #{decoder_forward.8} parent=0 // loop_body
    %s15 = ssub.s32 %s10, 1
    %s16 = ssub.s32 %s10, 2
    %s17 = sadd.s32 %s10, 1
    %s18 = ssub.s32 %s10, %s17
    %p19 = scmp.eq.s32.totalorder %s18, 0
    %s21 = sadd.s32 %s20, 1
    %s22 = scalar_select %p19, %s20, %s21
    %p25 = pneg %p19
    %p26 = scmp.eq.s32.totalorder %s10, 1
    %p27 = por %p25, %p26
    %p28 = scmp.ne.s32.totalorder %s20, %s23
    %p29 = scmp.eq.s32.totalorder %s10, 0
    %p30 = por %p28, %p29
    %p31 = scmp.ne.s32.totalorder %s20, %s23
    %p32 = scmp.eq.s32.totalorder %s15, 1
    %p33 = por %p31, %p32
    %p34 = scmp.ne.s32.totalorder %s23, %s24
    %p35 = scmp.eq.s32.totalorder %s15, 0
    %p36 = por %p34, %p35
    %p37 = scmp.ne.s32.totalorder %s23, %s24
    %p38 = scmp.eq.s32.totalorder %s16, 1
    %p39 = por %p37, %p38
    %p41 = scmp.ne.s32.totalorder %s24, %s40
    %p42 = scmp.eq.s32.totalorder %s16, 0
    %p43 = por %p41, %p42
    %s45 = sadd.s32 %s44, 1
    %p48 = scmp.eq.s32.totalorder %s10, 1
    %p49 = scmp.ne.s32.totalorder %s44, %s46
    %p50 = scmp.eq.s32.totalorder %s10, 0
    %p51 = por %p49, %p50
    %p52 = scmp.ne.s32.totalorder %s44, %s46
    %p53 = scmp.eq.s32.totalorder %s15, 1
    %p54 = por %p52, %p53
    %p55 = scmp.ne.s32.totalorder %s46, %s47
    %p56 = scmp.eq.s32.totalorder %s15, 0
    %p57 = por %p55, %p56
    %p58 = scmp.ne.s32.totalorder %s46, %s47
    %p59 = scmp.eq.s32.totalorder %s16, 1
    %p60 = por %p58, %p59
    %p62 = scmp.ne.s32.totalorder %s47, %s61
    %p63 = scmp.eq.s32.totalorder %s16, 0
    %p64 = por %p62, %p63
    %s66 = sadd.s32 %s65, 1
    %p69 = scmp.eq.s32.totalorder %s10, 1
    %p70 = scmp.ne.s32.totalorder %s65, %s67
    %p71 = scmp.eq.s32.totalorder %s10, 0
    %p72 = por %p70, %p71
    %p73 = scmp.ne.s32.totalorder %s65, %s67
    %p74 = scmp.eq.s32.totalorder %s15, 1
    %p75 = por %p73, %p74
    %p76 = scmp.ne.s32.totalorder %s67, %s68
    %p77 = scmp.eq.s32.totalorder %s15, 0
    %p78 = por %p76, %p77
    %p79 = scmp.ne.s32.totalorder %s67, %s68
    %p80 = scmp.eq.s32.totalorder %s16, 1
    %p81 = por %p79, %p80
    %p83 = scmp.ne.s32.totalorder %s68, %s82
    %p84 = scmp.eq.s32.totalorder %s16, 0
    %p85 = por %p83, %p84
    %s87 = sadd.s32 %s86, 1
    %p90 = scmp.eq.s32.totalorder %s10, 1
    %p91 = scmp.ne.s32.totalorder %s86, %s88
    %p92 = scmp.eq.s32.totalorder %s10, 0
    %p93 = por %p91, %p92
    %p94 = scmp.ne.s32.totalorder %s86, %s88
    %p95 = scmp.eq.s32.totalorder %s15, 1
    %p96 = por %p94, %p95
    %p97 = scmp.ne.s32.totalorder %s88, %s89
    %p98 = scmp.eq.s32.totalorder %s15, 0
    %p99 = por %p97, %p98
    %p100 = scmp.ne.s32.totalorder %s88, %s89
    %p101 = scmp.eq.s32.totalorder %s16, 1
    %p102 = por %p100, %p101
    %p104 = scmp.ne.s32.totalorder %s89, %s103
    %p105 = scmp.eq.s32.totalorder %s16, 0
    %p106 = por %p104, %p105
    %s107 = ssub.s32 %s10, %s17
    %p108 = scmp.eq.s32.totalorder %s107, 0
    %s110 = sadd.s32 %s109, 1
    %s111 = scalar_select %p108, %s109, %s110
    %p114 = pneg %p108
    %p115 = scmp.eq.s32.totalorder %s10, 1
    %p116 = por %p114, %p115
    %p117 = scmp.ne.s32.totalorder %s109, %s112
    %p118 = scmp.eq.s32.totalorder %s10, 0
    %p119 = por %p117, %p118
    %p120 = scmp.ne.s32.totalorder %s109, %s112
    %p121 = scmp.eq.s32.totalorder %s15, 1
    %p122 = por %p120, %p121
    %p123 = scmp.ne.s32.totalorder %s112, %s113
    %p124 = scmp.eq.s32.totalorder %s15, 0
    %p125 = por %p123, %p124
    %p126 = scmp.ne.s32.totalorder %s112, %s113
    %p127 = scmp.eq.s32.totalorder %s16, 1
    %p128 = por %p126, %p127
    %p130 = scmp.ne.s32.totalorder %s113, %s129
    %p131 = scmp.eq.s32.totalorder %s16, 0
    %p132 = por %p130, %p131
    %p133 = scmp.le.s32.totalorder 1, %s10
    %p134 = scmp.lt.s32.totalorder %s10, 3
    %p135 = pnand %p133, %p134
    %p136 = pneg %p135
    // Predicated region
    $region9: #{decoder_forward.8} parent=5 // pred_check
      _
    $region10: #{decoder_forward.8} parent=5 // pred_check_branch
      %138 = sbr.rel (%p135) target = $region12
    $region11: #{decoder_forward.8} parent=5 // pred_region
      %s139 = ssub.s32 %s10, 1
      // Predicated region
      $region13: #{decoder_forward.8} parent=11 // pred_check
        %p140 = pneg %p57
      $region14: #{decoder_forward.8} parent=11 // pred_check_branch
        %142 = sbr.rel (%p140) target = $region16
      $region15: #{decoder_forward.8} parent=11 // pred_region
        _
      $region16: #{decoder_forward.8} parent=11 // pred_fallthru
        _
      // Predicated region
      $region17: #{decoder_forward.8} parent=11 // pred_check
        %p143 = pneg %p78
      $region18: #{decoder_forward.8} parent=11 // pred_check_branch
        %145 = sbr.rel (%p143) target = $region20
      $region19: #{decoder_forward.8} parent=11 // pred_region
        _
      $region20: #{decoder_forward.8} parent=11 // pred_fallthru
        _
      // Predicated region
      $region21: #{decoder_forward.8} parent=11 // pred_check
        %p146 = pneg %p99
      $region22: #{decoder_forward.8} parent=11 // pred_check_branch
        %148 = sbr.rel (%p146) target = $region24
      $region23: #{decoder_forward.8} parent=11 // pred_region
        _
      $region24: #{decoder_forward.8} parent=11 // pred_fallthru
        _
    $region12: #{decoder_forward.8} parent=5 // pred_fallthru
      _
    %p149 = scmp.lt.s32.totalorder %s10, 2
    // Predicated region
    $region25: #{decoder_forward.8} parent=5 // pred_check
      %p150 = pneg %p149
    $region26: #{decoder_forward.8} parent=5 // pred_check_branch
      %152 = sbr.rel (%p150) target = $region28
    $region27: #{decoder_forward.8} parent=5 // pred_region
      // Predicated region
      $region29: #{decoder_forward.8} parent=27 // pred_check
        %p153 = pneg %p30
      $region30: #{decoder_forward.8} parent=27 // pred_check_branch
        %155 = sbr.rel (%p153) target = $region32
      $region31: #{decoder_forward.8} parent=27 // pred_region
        %p156 = scmp.lt.s32.totalorder %s10, 1
        %s157 = scalar_select %p156, %s10, 1
        %s158 = smul.addr %s157, 144
        %s159 = smul.addr %s158, 4
        %s160 = scalar_lea.vmem %s0, %s159
      $region32: #{decoder_forward.8} parent=27 // pred_fallthru
        _
    $region28: #{decoder_forward.8} parent=5 // pred_fallthru
      _
    %p161 = scmp.le.s32.totalorder 1, %s10
    %p162 = scmp.lt.s32.totalorder %s10, 3
    %p163 = pnand %p161, %p162
    %p164 = pneg %p163
    // Predicated region
    $region33: #{decoder_forward.8} parent=5 // pred_check
      _
    $region34: #{decoder_forward.8} parent=5 // pred_check_branch
      %166 = sbr.rel (%p163) target = $region36
    $region35: #{decoder_forward.8} parent=5 // pred_region
      %s167 = ssub.s32 %s10, 1
      %p168 = scmp.lt.s32.totalorder %s15, 1
      %s169 = scalar_select %p168, %s15, 1
      %s170 = smul.addr %s169, 144
      %s171 = smul.addr %s170, 4
      %s172 = scalar_lea.vmem %s0, %s171
      %p173 = pneg %p36
      %p174 = pneg %p33
      %p175 = pneg %p57
      %p176 = pneg %p54
      %p177 = pneg %p78
      %p178 = pneg %p75
      %p179 = pneg %p99
      %p180 = pneg %p96
      %p181 = pneg %p125
      %p182 = pneg %p122
      %p183 = scmp.lt.s32.totalorder %s15, 1
      %s184 = scalar_select %p183, %s15, 1
      %s185 = smul.addr %s184, 8
      %s186 = smul.addr %s185, 4
      %s187 = scalar_lea.vmem %s4, %s186
      %p188 = scmp.lt.s32.totalorder %s15, 1
      %s189 = scalar_select %p188, %s15, 1
      %s190 = smul.addr %s189, 144
      %s191 = smul.addr %s190, 4
      %s192 = scalar_lea.vmem %s0, %s191
      %p193 = scmp.lt.s32.totalorder %s15, 1
      %s194 = scalar_select %p193, %s15, 1
      %s195 = smul.addr %s194, 8
      %s196 = smul.addr %s195, 4
      %s197 = scalar_lea.vmem %s4, %s196
      %v199 = vld [vmem:[%s1] sm:$0xff]
      %v200 = vld [vmem:[%s192] sm:$0xff]
      %v201 = vld [vmem:[%s192 + $0x8] sm:$0xff]
      %v202 = vld [vmem:[%s192 + $0x10] sm:$0xff]
      %v203 = vld [vmem:[%s192 + $0x18] sm:$0xff]
      %v204 = vld [vmem:[%s192 + $0x20] sm:$0xff]
      %v205 = vld [vmem:[%s192 + $0x28] sm:$0xff]
      %v206 = vld [vmem:[%s192 + $0x30] sm:$0xff]
      %v207 = vld [vmem:[%s192 + $0x38] sm:$0xff]
      %v208 = vld [vmem:[%s192 + $0x40] sm:$0xff]
      %v209 = vld [vmem:[%s192 + $0x48] sm:$0xff]
      %v210 = vld [vmem:[%s192 + $0x50] sm:$0xff]
      %v211 = vld [vmem:[%s192 + $0x58] sm:$0xff]
      %v212 = vld [vmem:[%s192 + $0x60] sm:$0xff]
      %v213 = vld [vmem:[%s192 + $0x68] sm:$0xff]
      %v214 = vld [vmem:[%s192 + $0x70] sm:$0xff]
      %v215 = vld [vmem:[%s192 + $0x78] sm:$0xff]
      %v216 = vld [vmem:[%s192 + $0x80] sm:$0xff]
      %v217 = vld [vmem:[%s192 + $0x88] sm:$0xff]
      %v218 = vld [vmem:[%s192 + $0x90] sm:$0xff]
      %v219 = vld [vmem:[%s192 + $0x98] sm:$0xff]
      %v220 = vld [vmem:[%s192 + $0xa0] sm:$0xff]
      %v221 = vld [vmem:[%s192 + $0xa8] sm:$0xff]
      %v222 = vld [vmem:[%s192 + $0xb0] sm:$0xff]
      %v223 = vld [vmem:[%s192 + $0xb8] sm:$0xff]
      %v224 = vld [vmem:[%s192 + $0xc0] sm:$0xff]
      %v225 = vld [vmem:[%s192 + $0xc8] sm:$0xff]
      %v226 = vld [vmem:[%s192 + $0xd0] sm:$0xff]
      %v227 = vld [vmem:[%s192 + $0xd8] sm:$0xff]
      %v228 = vld [vmem:[%s192 + $0xe0] sm:$0xff]
      %v229 = vld [vmem:[%s192 + $0xe8] sm:$0xff]
      %v230 = vld [vmem:[%s192 + $0xf0] sm:$0xff]
      %v231 = vld [vmem:[%s192 + $0xf8] sm:$0xff]
      %v232 = vld [vmem:[%s192 + $0x100] sm:$0xff]
      %v233 = vld [vmem:[%s192 + $0x108] sm:$0xff]
      %v234 = vld [vmem:[%s192 + $0x110] sm:$0xff]
      %v235 = vld [vmem:[%s192 + $0x118] sm:$0xff]
      %v236 = vld [vmem:[%s192 + $0x120] sm:$0xff]
      %v237 = vld [vmem:[%s192 + $0x128] sm:$0xff]
      %v238 = vld [vmem:[%s192 + $0x130] sm:$0xff]
      %v239 = vld [vmem:[%s192 + $0x138] sm:$0xff]
      %v240 = vld [vmem:[%s192 + $0x140] sm:$0xff]
      %v241 = vld [vmem:[%s192 + $0x148] sm:$0xff]
      %v242 = vld [vmem:[%s192 + $0x150] sm:$0xff]
      %v243 = vld [vmem:[%s192 + $0x158] sm:$0xff]
      %v244 = vld [vmem:[%s192 + $0x160] sm:$0xff]
      %v245 = vld [vmem:[%s192 + $0x168] sm:$0xff]
      %v246 = vld [vmem:[%s192 + $0x170] sm:$0xff]
      %v247 = vld [vmem:[%s192 + $0x178] sm:$0xff]
      %v248 = vld [vmem:[%s192 + $0x180] sm:$0xff]
      %v249 = vld [vmem:[%s192 + $0x188] sm:$0xff]
      %v250 = vld [vmem:[%s192 + $0x190] sm:$0xff]
      %v251 = vld [vmem:[%s192 + $0x198] sm:$0xff]
      %v252 = vld [vmem:[%s192 + $0x1a0] sm:$0xff]
      %v253 = vld [vmem:[%s192 + $0x1a8] sm:$0xff]
      %v254 = vld [vmem:[%s192 + $0x1b0] sm:$0xff]
      %v255 = vld [vmem:[%s192 + $0x1b8] sm:$0xff]
      %v256 = vld [vmem:[%s192 + $0x1c0] sm:$0xff]
      %v257 = vld [vmem:[%s192 + $0x1c8] sm:$0xff]
      %v258 = vld [vmem:[%s192 + $0x1d0] sm:$0xff]
      %v259 = vld [vmem:[%s192 + $0x1d8] sm:$0xff]
      %v260 = vld [vmem:[%s192 + $0x1e0] sm:$0xff]
      %v261 = vld [vmem:[%s192 + $0x1e8] sm:$0xff]
      %v262 = vld [vmem:[%s192 + $0x1f0] sm:$0xff]
      %v263 = vld [vmem:[%s192 + $0x1f8] sm:$0xff]
      %v264 = vld [vmem:[%s192 + $0x200] sm:$0xff]
      %v265 = vld [vmem:[%s192 + $0x208] sm:$0xff]
      %v266 = vld [vmem:[%s192 + $0x210] sm:$0xff]
      %v267 = vld [vmem:[%s192 + $0x218] sm:$0xff]
      %v268 = vld [vmem:[%s192 + $0x220] sm:$0xff]
      %v269 = vld [vmem:[%s192 + $0x228] sm:$0xff]
      %v270 = vld [vmem:[%s192 + $0x230] sm:$0xff]
      %v271 = vld [vmem:[%s192 + $0x238] sm:$0xff]
      %v273 = vunpack.c.l.b16 %v199
      %v274 = vunpack.c.h.b16 %v199
      %v275 = vpack.c.b16 %v273, %v273
      %v276 = vpack.c.b16 %v274, %v274
      %v350 = vunpack.c.l.b16 %v200
      %v351 = vunpack.c.h.b16 %v200
      %v352 = vunpack.c.l.b16 %v201
      %v353 = vunpack.c.h.b16 %v201
      %v354 = vunpack.c.l.b16 %v202
      %v355 = vunpack.c.h.b16 %v202
      %v356 = vunpack.c.l.b16 %v203
      %v357 = vunpack.c.h.b16 %v203
      %v358 = vunpack.c.l.b16 %v204
      %v359 = vunpack.c.h.b16 %v204
      %v360 = vunpack.c.l.b16 %v205
      %v361 = vunpack.c.h.b16 %v205
      %v362 = vunpack.c.l.b16 %v206
      %v363 = vunpack.c.h.b16 %v206
      %v364 = vunpack.c.l.b16 %v207
      %v365 = vunpack.c.h.b16 %v207
      %v366 = vunpack.c.l.b16 %v208
      %v367 = vunpack.c.h.b16 %v208
      %v368 = vunpack.c.l.b16 %v209
      %v369 = vunpack.c.h.b16 %v209
      %v370 = vunpack.c.l.b16 %v210
      %v371 = vunpack.c.h.b16 %v210
      %v372 = vunpack.c.l.b16 %v211
      %v373 = vunpack.c.h.b16 %v211
      %v374 = vunpack.c.l.b16 %v212
      %v375 = vunpack.c.h.b16 %v212
      %v376 = vunpack.c.l.b16 %v213
      %v377 = vunpack.c.h.b16 %v213
      %v378 = vunpack.c.l.b16 %v214
      %v379 = vunpack.c.h.b16 %v214
      %v380 = vunpack.c.l.b16 %v215
      %v381 = vunpack.c.h.b16 %v215
      %v382 = vunpack.c.l.b16 %v216
      %v383 = vunpack.c.h.b16 %v216
      %v384 = vunpack.c.l.b16 %v217
      %v385 = vunpack.c.h.b16 %v217
      %v386 = vunpack.c.l.b16 %v218
      %v387 = vunpack.c.h.b16 %v218
      %v388 = vunpack.c.l.b16 %v219
      %v389 = vunpack.c.h.b16 %v219
      %v390 = vunpack.c.l.b16 %v220
      %v391 = vunpack.c.h.b16 %v220
      %v392 = vunpack.c.l.b16 %v221
      %v393 = vunpack.c.h.b16 %v221
      %v394 = vunpack.c.l.b16 %v222
      %v395 = vunpack.c.h.b16 %v222
      %v396 = vunpack.c.l.b16 %v223
      %v397 = vunpack.c.h.b16 %v223
      %v398 = vunpack.c.l.b16 %v224
      %v399 = vunpack.c.h.b16 %v224
      %v400 = vunpack.c.l.b16 %v225
      %v401 = vunpack.c.h.b16 %v225
      %v402 = vunpack.c.l.b16 %v226
      %v403 = vunpack.c.h.b16 %v226
      %v404 = vunpack.c.l.b16 %v227
      %v405 = vunpack.c.h.b16 %v227
      %v406 = vunpack.c.l.b16 %v228
      %v407 = vunpack.c.h.b16 %v228
      %v408 = vunpack.c.l.b16 %v229
      %v409 = vunpack.c.h.b16 %v229
      %v410 = vunpack.c.l.b16 %v230
      %v411 = vunpack.c.h.b16 %v230
      %v412 = vunpack.c.l.b16 %v231
      %v413 = vunpack.c.h.b16 %v231
      %v414 = vunpack.c.l.b16 %v232
      %v415 = vunpack.c.h.b16 %v232
      %v416 = vunpack.c.l.b16 %v233
      %v417 = vunpack.c.h.b16 %v233
      %v418 = vunpack.c.l.b16 %v234
      %v419 = vunpack.c.h.b16 %v234
      %v420 = vunpack.c.l.b16 %v235
      %v421 = vunpack.c.h.b16 %v235
      %v422 = vunpack.c.l.b16 %v236
      %v423 = vunpack.c.h.b16 %v236
      %v424 = vunpack.c.l.b16 %v237
      %v425 = vunpack.c.h.b16 %v237
      %v426 = vunpack.c.l.b16 %v238
      %v427 = vunpack.c.h.b16 %v238
      %v428 = vunpack.c.l.b16 %v239
      %v429 = vunpack.c.h.b16 %v239
      %v430 = vunpack.c.l.b16 %v240
      %v431 = vunpack.c.h.b16 %v240
      %v432 = vunpack.c.l.b16 %v241
      %v433 = vunpack.c.h.b16 %v241
      %v434 = vunpack.c.l.b16 %v242
      %v435 = vunpack.c.h.b16 %v242
      %v436 = vunpack.c.l.b16 %v243
      %v437 = vunpack.c.h.b16 %v243
      %v438 = vunpack.c.l.b16 %v244
      %v439 = vunpack.c.h.b16 %v244
      %v440 = vunpack.c.l.b16 %v245
      %v441 = vunpack.c.h.b16 %v245
      %v442 = vunpack.c.l.b16 %v246
      %v443 = vunpack.c.h.b16 %v246
      %v444 = vunpack.c.l.b16 %v247
      %v445 = vunpack.c.h.b16 %v247
      %v446 = vunpack.c.l.b16 %v248
      %v447 = vunpack.c.h.b16 %v248
      %v448 = vunpack.c.l.b16 %v249
      %v449 = vunpack.c.h.b16 %v249
      %v450 = vunpack.c.l.b16 %v250
      %v451 = vunpack.c.h.b16 %v250
      %v452 = vunpack.c.l.b16 %v251
      %v453 = vunpack.c.h.b16 %v251
      %v454 = vunpack.c.l.b16 %v252
      %v455 = vunpack.c.h.b16 %v252
      %v456 = vunpack.c.l.b16 %v253
      %v457 = vunpack.c.h.b16 %v253
      %v458 = vunpack.c.l.b16 %v254
      %v459 = vunpack.c.h.b16 %v254
      %v460 = vunpack.c.l.b16 %v255
      %v461 = vunpack.c.h.b16 %v255
      %v462 = vunpack.c.l.b16 %v256
      %v463 = vunpack.c.h.b16 %v256
      %v464 = vunpack.c.l.b16 %v257
      %v465 = vunpack.c.h.b16 %v257
      %v466 = vunpack.c.l.b16 %v258
      %v467 = vunpack.c.h.b16 %v258
      %v468 = vunpack.c.l.b16 %v259
      %v469 = vunpack.c.h.b16 %v259
      %v470 = vunpack.c.l.b16 %v260
      %v471 = vunpack.c.h.b16 %v260
      %v472 = vunpack.c.l.b16 %v261
      %v473 = vunpack.c.h.b16 %v261
      %v474 = vunpack.c.l.b16 %v262
      %v475 = vunpack.c.h.b16 %v262
      %v476 = vunpack.c.l.b16 %v263
      %v477 = vunpack.c.h.b16 %v263
      %v478 = vunpack.c.l.b16 %v264
      %v479 = vunpack.c.h.b16 %v264
      %v480 = vunpack.c.l.b16 %v265
      %v481 = vunpack.c.h.b16 %v265
      %v482 = vunpack.c.l.b16 %v266
      %v483 = vunpack.c.h.b16 %v266
      %v484 = vunpack.c.l.b16 %v267
      %v485 = vunpack.c.h.b16 %v267
      %v486 = vunpack.c.l.b16 %v268
      %v487 = vunpack.c.h.b16 %v268
      %v488 = vunpack.c.l.b16 %v269
      %v489 = vunpack.c.h.b16 %v269
      %v490 = vunpack.c.l.b16 %v270
      %v491 = vunpack.c.h.b16 %v270
      %v492 = vunpack.c.l.b16 %v271
      %v493 = vunpack.c.h.b16 %v271
      %v494 = vpack.c.b16 %v358, %v350
      %v495 = vpack.c.b16 %v359, %v351
      %v496 = vpack.c.b16 %v360, %v352
      %v497 = vpack.c.b16 %v361, %v353
      %v498 = vpack.c.b16 %v362, %v354
      %v499 = vpack.c.b16 %v363, %v355
      %v500 = vpack.c.b16 %v364, %v356
      %v501 = vpack.c.b16 %v365, %v357
      %v502 = vpack.c.b16 %v374, %v366
      %v503 = vpack.c.b16 %v375, %v367
      %v504 = vpack.c.b16 %v376, %v368
      %v505 = vpack.c.b16 %v377, %v369
      %v506 = vpack.c.b16 %v378, %v370
      %v507 = vpack.c.b16 %v379, %v371
      %v508 = vpack.c.b16 %v380, %v372
      %v509 = vpack.c.b16 %v381, %v373
      %v510 = vpack.c.b16 %v390, %v382
      %v511 = vpack.c.b16 %v391, %v383
      %v512 = vpack.c.b16 %v392, %v384
      %v513 = vpack.c.b16 %v393, %v385
      %v514 = vpack.c.b16 %v394, %v386
      %v515 = vpack.c.b16 %v395, %v387
      %v516 = vpack.c.b16 %v396, %v388
      %v517 = vpack.c.b16 %v397, %v389
      %v518 = vpack.c.b16 %v406, %v398
      %v519 = vpack.c.b16 %v407, %v399
      %v520 = vpack.c.b16 %v408, %v400
      %v521 = vpack.c.b16 %v409, %v401
      %v522 = vpack.c.b16 %v410, %v402
      %v523 = vpack.c.b16 %v411, %v403
      %v524 = vpack.c.b16 %v412, %v404
      %v525 = vpack.c.b16 %v413, %v405
      %v526 = vpack.c.b16 %v422, %v414
      %v527 = vpack.c.b16 %v423, %v415
      %v528 = vpack.c.b16 %v424, %v416
      %v529 = vpack.c.b16 %v425, %v417
      %v530 = vpack.c.b16 %v426, %v418
      %v531 = vpack.c.b16 %v427, %v419
      %v532 = vpack.c.b16 %v428, %v420
      %v533 = vpack.c.b16 %v429, %v421
      %v534 = vpack.c.b16 %v438, %v430
      %v535 = vpack.c.b16 %v439, %v431
      %v536 = vpack.c.b16 %v440, %v432
      %v537 = vpack.c.b16 %v441, %v433
      %v538 = vpack.c.b16 %v442, %v434
      %v539 = vpack.c.b16 %v443, %v435
      %v540 = vpack.c.b16 %v444, %v436
      %v541 = vpack.c.b16 %v445, %v437
      %v542 = vpack.c.b16 %v454, %v446
      %v543 = vpack.c.b16 %v455, %v447
      %v544 = vpack.c.b16 %v456, %v448
      %v545 = vpack.c.b16 %v457, %v449
      %v546 = vpack.c.b16 %v458, %v450
      %v547 = vpack.c.b16 %v459, %v451
      %v548 = vpack.c.b16 %v460, %v452
      %v549 = vpack.c.b16 %v461, %v453
      %v550 = vpack.c.b16 %v470, %v462
      %v551 = vpack.c.b16 %v471, %v463
      %v552 = vpack.c.b16 %v472, %v464
      %v553 = vpack.c.b16 %v473, %v465
      %v554 = vpack.c.b16 %v474, %v466
      %v555 = vpack.c.b16 %v475, %v467
      %v556 = vpack.c.b16 %v476, %v468
      %v557 = vpack.c.b16 %v477, %v469
      %v558 = vpack.c.b16 %v486, %v478
      %v559 = vpack.c.b16 %v487, %v479
      %v560 = vpack.c.b16 %v488, %v480
      %v561 = vpack.c.b16 %v489, %v481
      %v562 = vpack.c.b16 %v490, %v482
      %v563 = vpack.c.b16 %v491, %v483
      %v564 = vpack.c.b16 %v492, %v484
      %v565 = vpack.c.b16 %v493, %v485
      %vm638 = vcmask 130048
      %v640 = vsel %vm638, %v276, 0
      %642 = vmatpush.bf16.msra.mxu0 %v550
      %643 = vmatpush.bf16.msra.mxu0 %v542
      %644 = vmatpush.bf16.msra.mxu0 %v534
      %645 = vmatpush.bf16.msra.mxu0 %v526
      %646 = vmatpush.bf16.msra.mxu0 %v518
      %647 = vmatpush.bf16.msra.mxu0 %v510
      %648 = vmatpush.bf16.msra.mxu0 %v502
      %649 = vmatpush.bf16.msra.mxu0 %v494
      %650 = vmatmul.bf16.gmra.mxu0 %v275
      %v651 = vpop.f32.mrf.mxu0
      %v652 = vadd.f32 0.0, %v651
      %v653 = vpop.f32.mrf.mxu0
      %654 = vdwg.mxu0
      %655 = vmatpush.bf16.msra.mxu0 0
      %656 = vmatpush.bf16.msra.mxu0 0
      %657 = vmatpush.bf16.msra.mxu0 0
      %658 = vmatpush.bf16.msra.mxu0 0
      %659 = vmatpush.bf16.msra.mxu0 0
      %660 = vmatpush.bf16.msra.mxu0 0
      %661 = vmatpush.bf16.msra.mxu0 0
      %662 = vmatpush.bf16.msra.mxu0 %v558
      %663 = vmatmul.bf16.gmra.mxu0 %v640
      %v664 = vpop.f32.mrf.mxu0
      %v665 = vadd.f32 %v652, %v664
      %v666 = vpop.f32.mrf.mxu0
      %667 = vdwg.mxu0
      %668 = vmatpush.bf16.msra.mxu0 %v551
      %669 = vmatpush.bf16.msra.mxu0 %v543
      %670 = vmatpush.bf16.msra.mxu0 %v535
      %671 = vmatpush.bf16.msra.mxu0 %v527
      %672 = vmatpush.bf16.msra.mxu0 %v519
      %673 = vmatpush.bf16.msra.mxu0 %v511
      %674 = vmatpush.bf16.msra.mxu0 %v503
      %675 = vmatpush.bf16.msra.mxu0 %v495
      %676 = vmatmul.bf16.gmra.mxu0 %v275
      %v677 = vpop.f32.mrf.mxu0
      %v678 = vadd.f32 0.0, %v677
      %v679 = vpop.f32.mrf.mxu0
      %680 = vdwg.mxu0
      %681 = vmatpush.bf16.msra.mxu0 0
      %682 = vmatpush.bf16.msra.mxu0 0
      %683 = vmatpush.bf16.msra.mxu0 0
      %684 = vmatpush.bf16.msra.mxu0 0
      %685 = vmatpush.bf16.msra.mxu0 0
      %686 = vmatpush.bf16.msra.mxu0 0
      %687 = vmatpush.bf16.msra.mxu0 0
      %688 = vmatpush.bf16.msra.mxu0 %v559
      %689 = vmatmul.bf16.gmra.mxu0 %v640
      %v690 = vpop.f32.mrf.mxu0
      %v691 = vadd.f32 %v678, %v690
      %v692 = vpop.f32.mrf.mxu0
      %693 = vdwg.mxu0
      %694 = vmatpush.bf16.msra.mxu0 %v552
      %695 = vmatpush.bf16.msra.mxu0 %v544
      %696 = vmatpush.bf16.msra.mxu0 %v536
      %697 = vmatpush.bf16.msra.mxu0 %v528
      %698 = vmatpush.bf16.msra.mxu0 %v520
      %699 = vmatpush.bf16.msra.mxu0 %v512
      %700 = vmatpush.bf16.msra.mxu0 %v504
      %701 = vmatpush.bf16.msra.mxu0 %v496
      %702 = vmatmul.bf16.gmra.mxu0 %v275
      %v703 = vpop.f32.mrf.mxu0
      %v704 = vadd.f32 0.0, %v703
      %v705 = vpop.f32.mrf.mxu0
      %706 = vdwg.mxu0
      %707 = vmatpush.bf16.msra.mxu0 0
      %708 = vmatpush.bf16.msra.mxu0 0
      %709 = vmatpush.bf16.msra.mxu0 0
      %710 = vmatpush.bf16.msra.mxu0 0
      %711 = vmatpush.bf16.msra.mxu0 0
      %712 = vmatpush.bf16.msra.mxu0 0
      %713 = vmatpush.bf16.msra.mxu0 0
      %714 = vmatpush.bf16.msra.mxu0 %v560
      %715 = vmatmul.bf16.gmra.mxu0 %v640
      %v716 = vpop.f32.mrf.mxu0
      %v717 = vadd.f32 %v704, %v716
      %v718 = vpop.f32.mrf.mxu0
      %719 = vdwg.mxu0
      %720 = vmatpush.bf16.msra.mxu0 %v553
      %721 = vmatpush.bf16.msra.mxu0 %v545
      %722 = vmatpush.bf16.msra.mxu0 %v537
      %723 = vmatpush.bf16.msra.mxu0 %v529
      %724 = vmatpush.bf16.msra.mxu0 %v521
      %725 = vmatpush.bf16.msra.mxu0 %v513
      %726 = vmatpush.bf16.msra.mxu0 %v505
      %727 = vmatpush.bf16.msra.mxu0 %v497
      %728 = vmatmul.bf16.gmra.mxu0 %v275
      %v729 = vpop.f32.mrf.mxu0
      %v730 = vadd.f32 0.0, %v729
      %v731 = vpop.f32.mrf.mxu0
      %732 = vdwg.mxu0
      %733 = vmatpush.bf16.msra.mxu0 0
      %734 = vmatpush.bf16.msra.mxu0 0
      %735 = vmatpush.bf16.msra.mxu0 0
      %736 = vmatpush.bf16.msra.mxu0 0
      %737 = vmatpush.bf16.msra.mxu0 0
      %738 = vmatpush.bf16.msra.mxu0 0
      %739 = vmatpush.bf16.msra.mxu0 0
      %740 = vmatpush.bf16.msra.mxu0 %v561
      %741 = vmatmul.bf16.gmra.mxu0 %v640
      %v742 = vpop.f32.mrf.mxu0
      %v743 = vadd.f32 %v730, %v742
      %v744 = vpop.f32.mrf.mxu0
      %745 = vdwg.mxu0
      %746 = vmatpush.bf16.msra.mxu0 %v554
      %747 = vmatpush.bf16.msra.mxu0 %v546
      %748 = vmatpush.bf16.msra.mxu0 %v538
      %749 = vmatpush.bf16.msra.mxu0 %v530
      %750 = vmatpush.bf16.msra.mxu0 %v522
      %751 = vmatpush.bf16.msra.mxu0 %v514
      %752 = vmatpush.bf16.msra.mxu0 %v506
      %753 = vmatpush.bf16.msra.mxu0 %v498
      %754 = vmatmul.bf16.gmra.mxu0 %v275
      %v755 = vpop.f32.mrf.mxu0
      %v756 = vadd.f32 0.0, %v755
      %v757 = vpop.f32.mrf.mxu0
      %758 = vdwg.mxu0
      %759 = vmatpush.bf16.msra.mxu0 0
      %760 = vmatpush.bf16.msra.mxu0 0
      %761 = vmatpush.bf16.msra.mxu0 0
      %762 = vmatpush.bf16.msra.mxu0 0
      %763 = vmatpush.bf16.msra.mxu0 0
      %764 = vmatpush.bf16.msra.mxu0 0
      %765 = vmatpush.bf16.msra.mxu0 0
      %766 = vmatpush.bf16.msra.mxu0 %v562
      %767 = vmatmul.bf16.gmra.mxu0 %v640
      %v768 = vpop.f32.mrf.mxu0
      %v769 = vadd.f32 %v756, %v768
      %v770 = vpop.f32.mrf.mxu0
      %771 = vdwg.mxu0
      %772 = vmatpush.bf16.msra.mxu0 %v555
      %773 = vmatpush.bf16.msra.mxu0 %v547
      %774 = vmatpush.bf16.msra.mxu0 %v539
      %775 = vmatpush.bf16.msra.mxu0 %v531
      %776 = vmatpush.bf16.msra.mxu0 %v523
      %777 = vmatpush.bf16.msra.mxu0 %v515
      %778 = vmatpush.bf16.msra.mxu0 %v507
      %779 = vmatpush.bf16.msra.mxu0 %v499
      %780 = vmatmul.bf16.gmra.mxu0 %v275
      %v781 = vpop.f32.mrf.mxu0
      %v782 = vadd.f32 0.0, %v781
      %v783 = vpop.f32.mrf.mxu0
      %784 = vdwg.mxu0
      %785 = vmatpush.bf16.msra.mxu0 0
      %786 = vmatpush.bf16.msra.mxu0 0
      %787 = vmatpush.bf16.msra.mxu0 0
      %788 = vmatpush.bf16.msra.mxu0 0
      %789 = vmatpush.bf16.msra.mxu0 0
      %790 = vmatpush.bf16.msra.mxu0 0
      %791 = vmatpush.bf16.msra.mxu0 0
      %792 = vmatpush.bf16.msra.mxu0 %v563
      %793 = vmatmul.bf16.gmra.mxu0 %v640
      %v794 = vpop.f32.mrf.mxu0
      %v795 = vadd.f32 %v782, %v794
      %v796 = vpop.f32.mrf.mxu0
      %797 = vdwg.mxu0
      %798 = vmatpush.bf16.msra.mxu0 %v556
      %799 = vmatpush.bf16.msra.mxu0 %v548
      %800 = vmatpush.bf16.msra.mxu0 %v540
      %801 = vmatpush.bf16.msra.mxu0 %v532
      %802 = vmatpush.bf16.msra.mxu0 %v524
      %803 = vmatpush.bf16.msra.mxu0 %v516
      %804 = vmatpush.bf16.msra.mxu0 %v508
      %805 = vmatpush.bf16.msra.mxu0 %v500
      %806 = vmatmul.bf16.gmra.mxu0 %v275
      %v807 = vpop.f32.mrf.mxu0
      %v808 = vadd.f32 0.0, %v807
      %v809 = vpop.f32.mrf.mxu0
      %810 = vdwg.mxu0
      %811 = vmatpush.bf16.msra.mxu0 0
      %812 = vmatpush.bf16.msra.mxu0 0
      %813 = vmatpush.bf16.msra.mxu0 0
      %814 = vmatpush.bf16.msra.mxu0 0
      %815 = vmatpush.bf16.msra.mxu0 0
      %816 = vmatpush.bf16.msra.mxu0 0
      %817 = vmatpush.bf16.msra.mxu0 0
      %818 = vmatpush.bf16.msra.mxu0 %v564
      %819 = vmatmul.bf16.gmra.mxu0 %v640
      %v820 = vpop.f32.mrf.mxu0
      %v821 = vadd.f32 %v808, %v820
      %v822 = vpop.f32.mrf.mxu0
      %823 = vdwg.mxu0
      %824 = vmatpush.bf16.msra.mxu0 %v557
      %825 = vmatpush.bf16.msra.mxu0 %v549
      %826 = vmatpush.bf16.msra.mxu0 %v541
      %827 = vmatpush.bf16.msra.mxu0 %v533
      %828 = vmatpush.bf16.msra.mxu0 %v525
      %829 = vmatpush.bf16.msra.mxu0 %v517
      %830 = vmatpush.bf16.msra.mxu0 %v509
      %831 = vmatpush.bf16.msra.mxu0 %v501
      %832 = vmatmul.bf16.gmra.mxu0 %v275
      %v833 = vpop.f32.mrf.mxu0
      %v834 = vadd.f32 0.0, %v833
      %v835 = vpop.f32.mrf.mxu0
      %836 = vdwg.mxu0
      %837 = vmatpush.bf16.msra.mxu0 0
      %838 = vmatpush.bf16.msra.mxu0 0
      %839 = vmatpush.bf16.msra.mxu0 0
      %840 = vmatpush.bf16.msra.mxu0 0
      %841 = vmatpush.bf16.msra.mxu0 0
      %842 = vmatpush.bf16.msra.mxu0 0
      %843 = vmatpush.bf16.msra.mxu0 0
      %844 = vmatpush.bf16.msra.mxu0 %v565
      %845 = vmatmul.bf16.gmra.mxu0 %v640
      %v846 = vpop.f32.mrf.mxu0
      %v847 = vadd.f32 %v834, %v846
      %v848 = vpop.f32.mrf.mxu0
      %849 = vdwg.mxu0
      %v850 = vld [vmem:[%s2] sm:$0xff]
      %852 = vset.pattern.permute.xlu0 0
      %853 = vperm.xlu0 %852, %v850
      %v854 = vpop.permute.xlu0 %853
      %v856 = vmul.f32 %v665, %v854
      %v857 = vmul.f32 %v691, %v854
      %v858 = vmul.f32 %v717, %v854
      %v859 = vmul.f32 %v743, %v854
      %v860 = vmul.f32 %v769, %v854
      %v861 = vmul.f32 %v795, %v854
      %v862 = vmul.f32 %v821, %v854
      %v863 = vmul.f32 %v847, %v854
      %v864 = vld [vmem:[%s3] sm:$0xff]
      %866 = vset.pattern.permute.xlu0 0
      %867 = vperm.xlu0 %866, %v864
      %v868 = vpop.permute.xlu0 %867
      %v870 = vadd.f32 %v856, %v868
      %v871 = vadd.f32 %v857, %v868
      %v872 = vadd.f32 %v858, %v868
      %v873 = vadd.f32 %v859, %v868
      %v874 = vadd.f32 %v860, %v868
      %v875 = vadd.f32 %v861, %v868
      %v876 = vadd.f32 %v862, %v868
      %v877 = vadd.f32 %v863, %v868
      %v878 = vmax.f32 %v870, 0.0
      %v879 = vmax.f32 %v871, 0.0
      %v880 = vmax.f32 %v872, 0.0
      %v881 = vmax.f32 %v873, 0.0
      %v882 = vmax.f32 %v874, 0.0
      %v883 = vmax.f32 %v875, 0.0
      %v884 = vmax.f32 %v876, 0.0
      %v885 = vmax.f32 %v877, 0.0
      %v886 = vpack.c.bf16 %v879, %v878
      %v887 = vpack.c.bf16 %v881, %v880
      %v888 = vpack.c.bf16 %v883, %v882
      %v889 = vpack.c.bf16 %v885, %v884
      %890 = vst [vmem:[%s197] sm:$0xff] %v886
      %891 = vst [vmem:[%s197 + $0x8] sm:$0xff] %v887
      %892 = vst [vmem:[%s197 + $0x10] sm:$0xff] %v888
      %893 = vst [vmem:[%s197 + $0x18] sm:$0xff] %v889
      %p894 = scmp.lt.s32.totalorder %s15, 1
      %s895 = scalar_select %p894, %s15, 1
      %s896 = smul.addr %s895, 8
      %s897 = smul.addr %s896, 4
      %s898 = scalar_lea.vmem %s4, %s897
      // Predicated region
      $region37: #{decoder_forward.8} parent=35 // pred_check
        %p899 = pneg %p122
      $region38: #{decoder_forward.8} parent=35 // pred_check_branch
        %901 = sbr.rel (%p899) target = $region40
      $region39: #{decoder_forward.8} parent=35 // pred_region
        _
      $region40: #{decoder_forward.8} parent=35 // pred_fallthru
        _
    $region36: #{decoder_forward.8} parent=5 // pred_fallthru
      _
    %p902 = scmp.le.s32.totalorder 2, %s10
    // Predicated region
    $region41: #{decoder_forward.8} parent=5 // pred_check
      %p903 = pneg %p902
    $region42: #{decoder_forward.8} parent=5 // pred_check_branch
      %905 = sbr.rel (%p903) target = $region44
    $region43: #{decoder_forward.8} parent=5 // pred_region
      %s906 = ssub.s32 %s10, 2
      // Predicated region
      $region45: #{decoder_forward.8} parent=43 // pred_check
        %p907 = pneg %p128
      $region46: #{decoder_forward.8} parent=43 // pred_check_branch
        %909 = sbr.rel (%p907) target = $region48
      $region47: #{decoder_forward.8} parent=43 // pred_region
        %p910 = scmp.lt.s32.totalorder %s16, 1
        %s911 = scalar_select %p910, %s16, 1
        %s912 = smul.addr %s911, 8
        %s913 = smul.addr %s912, 4
        %s914 = scalar_lea.vmem %s4, %s913
      $region48: #{decoder_forward.8} parent=43 // pred_fallthru
        _
    $region44: #{decoder_forward.8} parent=5 // pred_fallthru
      _
  $region6: #{decoder_forward.8} parent=0 // loop_footer
    %s14 = sadd.s32 1, %s10
  $region7: #{decoder_forward.8} parent=0 // loop_footer_branch
    %9 = sbr.rel target = $region3
  $region8: #{decoder_forward.8} parent=0 // loop_exit
    _

// kernel: decoder_forward.9
$region0: #{decoder_forward.9}
  #allocation0 [shape = 'u32[]', space=smem, size = 0x4, offset = 0x4, fixed_abs, tag = 'smem constant byte address 0x4 - core index']
  #allocation1 [shape = 'u32[72,128]{1,0:T(1,128)}', space=vmem, size = 0x9000, scoped, tag = 'internal scratch']
  #allocation2 [shape = 'f32[1,1]{1,0:T(1,128)S(1)}', space=vmem, size = 0x200, scoped, tag = 'scoped memory for decoder_forward.9']
  #allocation3 [shape = 'f32[1,1]{1,0:T(1,128)S(1)}', space=vmem, size = 0x200, scoped, tag = 'scoped memory for decoder_forward.9']
  %s0 = inlined_call_operand.vmem [shape: bf16[2,72,3712], index: 0, kind: input, shape index: {}]
  %s1 = inlined_call_operand.vmem [shape: bf16[1,72], index: 1, kind: input, shape index: {}]
  %s2 = inlined_call_operand.<no memory space> [shape: f32[1,1], index: 2, kind: input, shape index: {}]
  %s3 = inlined_call_operand.<no memory space> [shape: f32[1,1], index: 3, kind: input, shape index: {}]
  %s4 = inlined_call_operand.vmem [shape: f32[2,1,3712], index: 4, kind: output, shape index: {}]
  %s5 = sld [smem:[#allocation0]]
  $region49: #{decoder_forward.9} parent=0
    _
  %s7 = ssub.s32 1, %s5
  %s8 = scalar_select 0, %s7, %s5
  %v9 = vstv %s2
  %10 = vst [vmem:[#allocation2] sm:$0x1] %v9
  %v11 = vstv %s3
  %12 = vst [vmem:[#allocation3] sm:$0x1] %v11
  loop: start=0, step=1, limit=4
  $region2: #{decoder_forward.9} parent=0 // loop_pre_header
    _
  $region3: #{decoder_forward.9} parent=0 // loop_header
    %s14 = sphi 0, %s18
    %p15 = scmp.ge.s32.totalorder %s14, 4
    %s24 = sphi 0, %s26
    %s27 = sphi 0, %s24
    %s28 = sphi 0, %s27
    %s44 = sphi 0, %s28
    %s48 = sphi 0, %s48
    %s50 = sphi 0, %s48
    %s51 = sphi 0, %s50
    %s65 = sphi 0, %s51
    %s69 = sphi 0, %s69
    %s71 = sphi 0, %s69
    %s72 = sphi 0, %s71
    %s86 = sphi 0, %s72
    %s90 = sphi 0, %s90
    %s92 = sphi 0, %s90
    %s93 = sphi 0, %s92
    %s107 = sphi 0, %s93
    %s113 = sphi 0, %s115
    %s116 = sphi 0, %s113
    %s117 = sphi 0, %s116
    %s133 = sphi 0, %s117
  $region4: #{decoder_forward.9} parent=0 // loop_header_branch
    %17 = sbr.rel (%p15) target = $region8
  $region5: #{decoder_forward.9} parent=0 // loop_body
    %s19 = ssub.s32 %s14, 1
    %s20 = ssub.s32 %s14, 2
    %s21 = sadd.s32 %s14, 1
    %s22 = ssub.s32 %s14, %s21
    %p23 = scmp.eq.s32.totalorder %s22, 0
    %s25 = sadd.s32 %s24, 1
    %s26 = scalar_select %p23, %s24, %s25
    %p29 = pneg %p23
    %p30 = scmp.eq.s32.totalorder %s14, 1
    %p31 = por %p29, %p30
    %p32 = scmp.ne.s32.totalorder %s24, %s27
    %p33 = scmp.eq.s32.totalorder %s14, 0
    %p34 = por %p32, %p33
    %p35 = scmp.ne.s32.totalorder %s24, %s27
    %p36 = scmp.eq.s32.totalorder %s19, 1
    %p37 = por %p35, %p36
    %p38 = scmp.ne.s32.totalorder %s27, %s28
    %p39 = scmp.eq.s32.totalorder %s19, 0
    %p40 = por %p38, %p39
    %p41 = scmp.ne.s32.totalorder %s27, %s28
    %p42 = scmp.eq.s32.totalorder %s20, 1
    %p43 = por %p41, %p42
    %p45 = scmp.ne.s32.totalorder %s28, %s44
    %p46 = scmp.eq.s32.totalorder %s20, 0
    %p47 = por %p45, %p46
    %s49 = sadd.s32 %s48, 1
    %p52 = scmp.eq.s32.totalorder %s14, 1
    %p53 = scmp.ne.s32.totalorder %s48, %s50
    %p54 = scmp.eq.s32.totalorder %s14, 0
    %p55 = por %p53, %p54
    %p56 = scmp.ne.s32.totalorder %s48, %s50
    %p57 = scmp.eq.s32.totalorder %s19, 1
    %p58 = por %p56, %p57
    %p59 = scmp.ne.s32.totalorder %s50, %s51
    %p60 = scmp.eq.s32.totalorder %s19, 0
    %p61 = por %p59, %p60
    %p62 = scmp.ne.s32.totalorder %s50, %s51
    %p63 = scmp.eq.s32.totalorder %s20, 1
    %p64 = por %p62, %p63
    %p66 = scmp.ne.s32.totalorder %s51, %s65
    %p67 = scmp.eq.s32.totalorder %s20, 0
    %p68 = por %p66, %p67
    %s70 = sadd.s32 %s69, 1
    %p73 = scmp.eq.s32.totalorder %s14, 1
    %p74 = scmp.ne.s32.totalorder %s69, %s71
    %p75 = scmp.eq.s32.totalorder %s14, 0
    %p76 = por %p74, %p75
    %p77 = scmp.ne.s32.totalorder %s69, %s71
    %p78 = scmp.eq.s32.totalorder %s19, 1
    %p79 = por %p77, %p78
    %p80 = scmp.ne.s32.totalorder %s71, %s72
    %p81 = scmp.eq.s32.totalorder %s19, 0
    %p82 = por %p80, %p81
    %p83 = scmp.ne.s32.totalorder %s71, %s72
    %p84 = scmp.eq.s32.totalorder %s20, 1
    %p85 = por %p83, %p84
    %p87 = scmp.ne.s32.totalorder %s72, %s86
    %p88 = scmp.eq.s32.totalorder %s20, 0
    %p89 = por %p87, %p88
    %s91 = sadd.s32 %s90, 1
    %p94 = scmp.eq.s32.totalorder %s14, 1
    %p95 = scmp.ne.s32.totalorder %s90, %s92
    %p96 = scmp.eq.s32.totalorder %s14, 0
    %p97 = por %p95, %p96
    %p98 = scmp.ne.s32.totalorder %s90, %s92
    %p99 = scmp.eq.s32.totalorder %s19, 1
    %p100 = por %p98, %p99
    %p101 = scmp.ne.s32.totalorder %s92, %s93
    %p102 = scmp.eq.s32.totalorder %s19, 0
    %p103 = por %p101, %p102
    %p104 = scmp.ne.s32.totalorder %s92, %s93
    %p105 = scmp.eq.s32.totalorder %s20, 1
    %p106 = por %p104, %p105
    %p108 = scmp.ne.s32.totalorder %s93, %s107
    %p109 = scmp.eq.s32.totalorder %s20, 0
    %p110 = por %p108, %p109
    %s111 = ssub.s32 %s14, %s21
    %p112 = scmp.eq.s32.totalorder %s111, 0
    %s114 = sadd.s32 %s113, 1
    %s115 = scalar_select %p112, %s113, %s114
    %p118 = pneg %p112
    %p119 = scmp.eq.s32.totalorder %s14, 1
    %p120 = por %p118, %p119
    %p121 = scmp.ne.s32.totalorder %s113, %s116
    %p122 = scmp.eq.s32.totalorder %s14, 0
    %p123 = por %p121, %p122
    %p124 = scmp.ne.s32.totalorder %s113, %s116
    %p125 = scmp.eq.s32.totalorder %s19, 1
    %p126 = por %p124, %p125
    %p127 = scmp.ne.s32.totalorder %s116, %s117
    %p128 = scmp.eq.s32.totalorder %s19, 0
    %p129 = por %p127, %p128
    %p130 = scmp.ne.s32.totalorder %s116, %s117
    %p131 = scmp.eq.s32.totalorder %s20, 1
    %p132 = por %p130, %p131
    %p134 = scmp.ne.s32.totalorder %s117, %s133
    %p135 = scmp.eq.s32.totalorder %s20, 0
    %p136 = por %p134, %p135
    %p137 = scmp.le.s32.totalorder 1, %s14
    %p138 = scmp.lt.s32.totalorder %s14, 3
    %p139 = pnand %p137, %p138
    %p140 = pneg %p139
    // Predicated region
    $region9: #{decoder_forward.9} parent=5 // pred_check
      _
    $region10: #{decoder_forward.9} parent=5 // pred_check_branch
      %142 = sbr.rel (%p139) target = $region12
    $region11: #{decoder_forward.9} parent=5 // pred_region
      %s143 = ssub.s32 %s14, 1
      // Predicated region
      $region13: #{decoder_forward.9} parent=11 // pred_check
        %p144 = pneg %p61
      $region14: #{decoder_forward.9} parent=11 // pred_check_branch
        %146 = sbr.rel (%p144) target = $region16
      $region15: #{decoder_forward.9} parent=11 // pred_region
        _
      $region16: #{decoder_forward.9} parent=11 // pred_fallthru
        _
      // Predicated region
      $region17: #{decoder_forward.9} parent=11 // pred_check
        %p147 = pneg %p82
      $region18: #{decoder_forward.9} parent=11 // pred_check_branch
        %149 = sbr.rel (%p147) target = $region20
      $region19: #{decoder_forward.9} parent=11 // pred_region
        _
      $region20: #{decoder_forward.9} parent=11 // pred_fallthru
        _
      // Predicated region
      $region21: #{decoder_forward.9} parent=11 // pred_check
        %p150 = pneg %p103
      $region22: #{decoder_forward.9} parent=11 // pred_check_branch
        %152 = sbr.rel (%p150) target = $region24
      $region23: #{decoder_forward.9} parent=11 // pred_region
        _
      $region24: #{decoder_forward.9} parent=11 // pred_fallthru
        _
    $region12: #{decoder_forward.9} parent=5 // pred_fallthru
      _
    %p153 = scmp.lt.s32.totalorder %s14, 2
    // Predicated region
    $region25: #{decoder_forward.9} parent=5 // pred_check
      %p154 = pneg %p153
    $region26: #{decoder_forward.9} parent=5 // pred_check_branch
      %156 = sbr.rel (%p154) target = $region28
    $region27: #{decoder_forward.9} parent=5 // pred_region
      // Predicated region
      $region29: #{decoder_forward.9} parent=27 // pred_check
        %p157 = pneg %p34
      $region30: #{decoder_forward.9} parent=27 // pred_check_branch
        %159 = sbr.rel (%p157) target = $region32
      $region31: #{decoder_forward.9} parent=27 // pred_region
        %p160 = scmp.lt.s32.totalorder %s14, 1
        %s161 = scalar_select %p160, %s14, 1
        %s162 = smul.addr %s161, 261
        %s163 = smul.addr %s162, 4
        %s164 = scalar_lea.vmem %s0, %s163
      $region32: #{decoder_forward.9} parent=27 // pred_fallthru
        _
    $region28: #{decoder_forward.9} parent=5 // pred_fallthru
      _
    %p165 = scmp.le.s32.totalorder 1, %s14
    %p166 = scmp.lt.s32.totalorder %s14, 3
    %p167 = pnand %p165, %p166
    %p168 = pneg %p167
    // Predicated region
    $region33: #{decoder_forward.9} parent=5 // pred_check
      _
    $region34: #{decoder_forward.9} parent=5 // pred_check_branch
      %170 = sbr.rel (%p167) target = $region36
    $region35: #{decoder_forward.9} parent=5 // pred_region
      %s171 = ssub.s32 %s14, 1
      %p172 = scmp.lt.s32.totalorder %s19, 1
      %s173 = scalar_select %p172, %s19, 1
      %s174 = smul.addr %s173, 261
      %s175 = smul.addr %s174, 4
      %s176 = scalar_lea.vmem %s0, %s175
      %p177 = pneg %p40
      %p178 = pneg %p37
      %p179 = pneg %p61
      %p180 = pneg %p58
      %p181 = pneg %p82
      %p182 = pneg %p79
      %p183 = pneg %p103
      %p184 = pneg %p100
      %p185 = pneg %p129
      %p186 = pneg %p126
      %p187 = scmp.lt.s32.totalorder %s19, 1
      %s188 = scalar_select %p187, %s19, 1
      %s189 = smul.addr %s188, 29
      %s190 = scalar_lea.vmem %s4, %s189
      %p191 = scmp.lt.s32.totalorder %s19, 1
      %s192 = scalar_select %p191, %s19, 1
      %s193 = smul.addr %s192, 261
      %s194 = smul.addr %s193, 4
      %s195 = scalar_lea.vmem %s0, %s194
      %p196 = scmp.lt.s32.totalorder %s19, 1
      %s197 = scalar_select %p196, %s19, 1
      %s198 = smul.addr %s197, 29
      %s199 = scalar_lea.vmem %s4, %s198
      %v201 = vld [vmem:[%s1] sm:$0x1]
      %v202 = vld [vmem:[%s195] sm:$0xff]
      %v203 = vld [vmem:[%s195 + $0x8] sm:$0xff]
      %v204 = vld [vmem:[%s195 + $0x10] sm:$0xff]
      %v205 = vld [vmem:[%s195 + $0x18] sm:$0xff]
      %v206 = vld [vmem:[%s195 + $0x20] sm:$0xff]
      %v207 = vld [vmem:[%s195 + $0x28] sm:$0xff]
      %v208 = vld [vmem:[%s195 + $0x30] sm:$0xff]
      %v209 = vld [vmem:[%s195 + $0x38] sm:$0xff]
      %v210 = vld [vmem:[%s195 + $0x40] sm:$0xff]
      %v211 = vld [vmem:[%s195 + $0x48] sm:$0xff]
      %v212 = vld [vmem:[%s195 + $0x50] sm:$0xff]
      %v213 = vld [vmem:[%s195 + $0x58] sm:$0xff]
      %v214 = vld [vmem:[%s195 + $0x60] sm:$0xff]
      %v215 = vld [vmem:[%s195 + $0x68] sm:$0xff]
      %v216 = vld [vmem:[%s195 + $0x70] sm:$0xf]
      %v217 = vld [vmem:[%s195 + $0x74] sm:$0xff]
      %v218 = vld [vmem:[%s195 + $0x7c] sm:$0xff]
      %v219 = vld [vmem:[%s195 + $0x84] sm:$0xff]
      %v220 = vld [vmem:[%s195 + $0x8c] sm:$0xff]
      %v221 = vld [vmem:[%s195 + $0x94] sm:$0xff]
      %v222 = vld [vmem:[%s195 + $0x9c] sm:$0xff]
      %v223 = vld [vmem:[%s195 + $0xa4] sm:$0xff]
      %v224 = vld [vmem:[%s195 + $0xac] sm:$0xff]
      %v225 = vld [vmem:[%s195 + $0xb4] sm:$0xff]
      %v226 = vld [vmem:[%s195 + $0xbc] sm:$0xff]
      %v227 = vld [vmem:[%s195 + $0xc4] sm:$0xff]
      %v228 = vld [vmem:[%s195 + $0xcc] sm:$0xff]
      %v229 = vld [vmem:[%s195 + $0xd4] sm:$0xff]
      %v230 = vld [vmem:[%s195 + $0xdc] sm:$0xff]
      %v231 = vld [vmem:[%s195 + $0xe4] sm:$0xf]
      %v232 = vld [vmem:[%s195 + $0xe8] sm:$0xff]
      %v233 = vld [vmem:[%s195 + $0xf0] sm:$0xff]
      %v234 = vld [vmem:[%s195 + $0xf8] sm:$0xff]
      %v235 = vld [vmem:[%s195 + $0x100] sm:$0xff]
      %v236 = vld [vmem:[%s195 + $0x108] sm:$0xff]
      %v237 = vld [vmem:[%s195 + $0x110] sm:$0xff]
      %v238 = vld [vmem:[%s195 + $0x118] sm:$0xff]
      %v239 = vld [vmem:[%s195 + $0x120] sm:$0xff]
      %v240 = vld [vmem:[%s195 + $0x128] sm:$0xff]
      %v241 = vld [vmem:[%s195 + $0x130] sm:$0xff]
      %v242 = vld [vmem:[%s195 + $0x138] sm:$0xff]
      %v243 = vld [vmem:[%s195 + $0x140] sm:$0xff]
      %v244 = vld [vmem:[%s195 + $0x148] sm:$0xff]
      %v245 = vld [vmem:[%s195 + $0x150] sm:$0xff]
      %v246 = vld [vmem:[%s195 + $0x158] sm:$0xf]
      %v247 = vld [vmem:[%s195 + $0x15c] sm:$0xff]
      %v248 = vld [vmem:[%s195 + $0x164] sm:$0xff]
      %v249 = vld [vmem:[%s195 + $0x16c] sm:$0xff]
      %v250 = vld [vmem:[%s195 + $0x174] sm:$0xff]
      %v251 = vld [vmem:[%s195 + $0x17c] sm:$0xff]
      %v252 = vld [vmem:[%s195 + $0x184] sm:$0xff]
      %v253 = vld [vmem:[%s195 + $0x18c] sm:$0xff]
      %v254 = vld [vmem:[%s195 + $0x194] sm:$0xff]
      %v255 = vld [vmem:[%s195 + $0x19c] sm:$0xff]
      %v256 = vld [vmem:[%s195 + $0x1a4] sm:$0xff]
      %v257 = vld [vmem:[%s195 + $0x1ac] sm:$0xff]
      %v258 = vld [vmem:[%s195 + $0x1b4] sm:$0xff]
      %v259 = vld [vmem:[%s195 + $0x1bc] sm:$0xff]
      %v260 = vld [vmem:[%s195 + $0x1c4] sm:$0xff]
      %v261 = vld [vmem:[%s195 + $0x1cc] sm:$0xf]
      %v262 = vld [vmem:[%s195 + $0x1d0] sm:$0xff]
      %v263 = vld [vmem:[%s195 + $0x1d8] sm:$0xff]
      %v264 = vld [vmem:[%s195 + $0x1e0] sm:$0xff]
      %v265 = vld [vmem:[%s195 + $0x1e8] sm:$0xff]
      %v266 = vld [vmem:[%s195 + $0x1f0] sm:$0xff]
      %v267 = vld [vmem:[%s195 + $0x1f8] sm:$0xff]
      %v268 = vld [vmem:[%s195 + $0x200] sm:$0xff]
      %v269 = vld [vmem:[%s195 + $0x208] sm:$0xff]
      %v270 = vld [vmem:[%s195 + $0x210] sm:$0xff]
      %v271 = vld [vmem:[%s195 + $0x218] sm:$0xff]
      %v272 = vld [vmem:[%s195 + $0x220] sm:$0xff]
      %v273 = vld [vmem:[%s195 + $0x228] sm:$0xff]
      %v274 = vld [vmem:[%s195 + $0x230] sm:$0xff]
      %v275 = vld [vmem:[%s195 + $0x238] sm:$0xff]
      %v276 = vld [vmem:[%s195 + $0x240] sm:$0xf]
      %v277 = vld [vmem:[%s195 + $0x244] sm:$0xff]
      %v278 = vld [vmem:[%s195 + $0x24c] sm:$0xff]
      %v279 = vld [vmem:[%s195 + $0x254] sm:$0xff]
      %v280 = vld [vmem:[%s195 + $0x25c] sm:$0xff]
      %v281 = vld [vmem:[%s195 + $0x264] sm:$0xff]
      %v282 = vld [vmem:[%s195 + $0x26c] sm:$0xff]
      %v283 = vld [vmem:[%s195 + $0x274] sm:$0xff]
      %v284 = vld [vmem:[%s195 + $0x27c] sm:$0xff]
      %v285 = vld [vmem:[%s195 + $0x284] sm:$0xff]
      %v286 = vld [vmem:[%s195 + $0x28c] sm:$0xff]
      %v287 = vld [vmem:[%s195 + $0x294] sm:$0xff]
      %v288 = vld [vmem:[%s195 + $0x29c] sm:$0xff]
      %v289 = vld [vmem:[%s195 + $0x2a4] sm:$0xff]
      %v290 = vld [vmem:[%s195 + $0x2ac] sm:$0xff]
      %v291 = vld [vmem:[%s195 + $0x2b4] sm:$0xf]
      %v292 = vld [vmem:[%s195 + $0x2b8] sm:$0xff]
      %v293 = vld [vmem:[%s195 + $0x2c0] sm:$0xff]
      %v294 = vld [vmem:[%s195 + $0x2c8] sm:$0xff]
      %v295 = vld [vmem:[%s195 + $0x2d0] sm:$0xff]
      %v296 = vld [vmem:[%s195 + $0x2d8] sm:$0xff]
      %v297 = vld [vmem:[%s195 + $0x2e0] sm:$0xff]
      %v298 = vld [vmem:[%s195 + $0x2e8] sm:$0xff]
      %v299 = vld [vmem:[%s195 + $0x2f0] sm:$0xff]
      %v300 = vld [vmem:[%s195 + $0x2f8] sm:$0xff]
      %v301 = vld [vmem:[%s195 + $0x300] sm:$0xff]
      %v302 = vld [vmem:[%s195 + $0x308] sm:$0xff]
      %v303 = vld [vmem:[%s195 + $0x310] sm:$0xff]
      %v304 = vld [vmem:[%s195 + $0x318] sm:$0xff]
      %v305 = vld [vmem:[%s195 + $0x320] sm:$0xff]
      %v306 = vld [vmem:[%s195 + $0x328] sm:$0xf]
      %v307 = vld [vmem:[%s195 + $0x32c] sm:$0xff]
      %v308 = vld [vmem:[%s195 + $0x334] sm:$0xff]
      %v309 = vld [vmem:[%s195 + $0x33c] sm:$0xff]
      %v310 = vld [vmem:[%s195 + $0x344] sm:$0xff]
      %v311 = vld [vmem:[%s195 + $0x34c] sm:$0xff]
      %v312 = vld [vmem:[%s195 + $0x354] sm:$0xff]
      %v313 = vld [vmem:[%s195 + $0x35c] sm:$0xff]
      %v314 = vld [vmem:[%s195 + $0x364] sm:$0xff]
      %v315 = vld [vmem:[%s195 + $0x36c] sm:$0xff]
      %v316 = vld [vmem:[%s195 + $0x374] sm:$0xff]
      %v317 = vld [vmem:[%s195 + $0x37c] sm:$0xff]
      %v318 = vld [vmem:[%s195 + $0x384] sm:$0xff]
      %v319 = vld [vmem:[%s195 + $0x38c] sm:$0xff]
      %v320 = vld [vmem:[%s195 + $0x394] sm:$0xff]
      %v321 = vld [vmem:[%s195 + $0x39c] sm:$0xf]
      %v322 = vld [vmem:[%s195 + $0x3a0] sm:$0xff]
      %v323 = vld [vmem:[%s195 + $0x3a8] sm:$0xff]
      %v324 = vld [vmem:[%s195 + $0x3b0] sm:$0xff]
      %v325 = vld [vmem:[%s195 + $0x3b8] sm:$0xff]
      %v326 = vld [vmem:[%s195 + $0x3c0] sm:$0xff]
      %v327 = vld [vmem:[%s195 + $0x3c8] sm:$0xff]
      %v328 = vld [vmem:[%s195 + $0x3d0] sm:$0xff]
      %v329 = vld [vmem:[%s195 + $0x3d8] sm:$0xff]
      %v330 = vld [vmem:[%s195 + $0x3e0] sm:$0xff]
      %v331 = vld [vmem:[%s195 + $0x3e8] sm:$0xff]
      %v332 = vld [vmem:[%s195 + $0x3f0] sm:$0xff]
      %v333 = vld [vmem:[%s195 + $0x3f8] sm:$0xff]
      %v334 = vld [vmem:[%s195 + $0x400] sm:$0xff]
      %v335 = vld [vmem:[%s195 + $0x408] sm:$0xff]
      %v336 = vld [vmem:[%s195 + $0x410] sm:$0xf]
      %v472 = vunpack.c.l.b16 %v202
      %v473 = vunpack.c.h.b16 %v202
      %v474 = vunpack.c.l.b16 %v203
      %v475 = vunpack.c.h.b16 %v203
      %v476 = vunpack.c.l.b16 %v204
      %v477 = vunpack.c.h.b16 %v204
      %v478 = vunpack.c.l.b16 %v205
      %v479 = vunpack.c.h.b16 %v205
      %v480 = vunpack.c.l.b16 %v206
      %v481 = vunpack.c.h.b16 %v206
      %v482 = vunpack.c.l.b16 %v207
      %v483 = vunpack.c.h.b16 %v207
      %v484 = vunpack.c.l.b16 %v208
      %v485 = vunpack.c.h.b16 %v208
      %v486 = vunpack.c.l.b16 %v209
      %v487 = vunpack.c.h.b16 %v209
      %v488 = vunpack.c.l.b16 %v210
      %v489 = vunpack.c.h.b16 %v210
      %v490 = vunpack.c.l.b16 %v211
      %v491 = vunpack.c.h.b16 %v211
      %v492 = vunpack.c.l.b16 %v212
      %v493 = vunpack.c.h.b16 %v212
      %v494 = vunpack.c.l.b16 %v213
      %v495 = vunpack.c.h.b16 %v213
      %v496 = vunpack.c.l.b16 %v214
      %v497 = vunpack.c.h.b16 %v214
      %v498 = vunpack.c.l.b16 %v215
      %v499 = vunpack.c.h.b16 %v215
      %v500 = vunpack.c.l.b16 %v216
      %v501 = vunpack.c.l.b16 %v217
      %v502 = vunpack.c.h.b16 %v217
      %v503 = vunpack.c.l.b16 %v218
      %v504 = vunpack.c.h.b16 %v218
      %v505 = vunpack.c.l.b16 %v219
      %v506 = vunpack.c.h.b16 %v219
      %v507 = vunpack.c.l.b16 %v220
      %v508 = vunpack.c.h.b16 %v220
      %v509 = vunpack.c.l.b16 %v221
      %v510 = vunpack.c.h.b16 %v221
      %v511 = vunpack.c.l.b16 %v222
      %v512 = vunpack.c.h.b16 %v222
      %v513 = vunpack.c.l.b16 %v223
      %v514 = vunpack.c.h.b16 %v223
      %v515 = vunpack.c.l.b16 %v224
      %v516 = vunpack.c.h.b16 %v224
      %v517 = vunpack.c.l.b16 %v225
      %v518 = vunpack.c.h.b16 %v225
      %v519 = vunpack.c.l.b16 %v226
      %v520 = vunpack.c.h.b16 %v226
      %v521 = vunpack.c.l.b16 %v227
      %v522 = vunpack.c.h.b16 %v227
      %v523 = vunpack.c.l.b16 %v228
      %v524 = vunpack.c.h.b16 %v228
      %v525 = vunpack.c.l.b16 %v229
      %v526 = vunpack.c.h.b16 %v229
      %v527 = vunpack.c.l.b16 %v230
      %v528 = vunpack.c.h.b16 %v230
      %v529 = vunpack.c.l.b16 %v231
      %v530 = vunpack.c.l.b16 %v232
      %v531 = vunpack.c.h.b16 %v232
      %v532 = vunpack.c.l.b16 %v233
      %v533 = vunpack.c.h.b16 %v233
      %v534 = vunpack.c.l.b16 %v234
      %v535 = vunpack.c.h.b16 %v234
      %v536 = vunpack.c.l.b16 %v235
      %v537 = vunpack.c.h.b16 %v235
      %v538 = vunpack.c.l.b16 %v236
      %v539 = vunpack.c.h.b16 %v236
      %v540 = vunpack.c.l.b16 %v237
      %v541 = vunpack.c.h.b16 %v237
      %v542 = vunpack.c.l.b16 %v238
      %v543 = vunpack.c.h.b16 %v238
      %v544 = vunpack.c.l.b16 %v239
      %v545 = vunpack.c.h.b16 %v239
      %v546 = vunpack.c.l.b16 %v240
      %v547 = vunpack.c.h.b16 %v240
      %v548 = vunpack.c.l.b16 %v241
      %v549 = vunpack.c.h.b16 %v241
      %v550 = vunpack.c.l.b16 %v242
      %v551 = vunpack.c.h.b16 %v242
      %v552 = vunpack.c.l.b16 %v243
      %v553 = vunpack.c.h.b16 %v243
      %v554 = vunpack.c.l.b16 %v244
      %v555 = vunpack.c.h.b16 %v244
      %v556 = vunpack.c.l.b16 %v245
      %v557 = vunpack.c.h.b16 %v245
      %v558 = vunpack.c.l.b16 %v246
      %v559 = vunpack.c.l.b16 %v247
      %v560 = vunpack.c.h.b16 %v247
      %v561 = vunpack.c.l.b16 %v248
      %v562 = vunpack.c.h.b16 %v248
      %v563 = vunpack.c.l.b16 %v249
      %v564 = vunpack.c.h.b16 %v249
      %v565 = vunpack.c.l.b16 %v250
      %v566 = vunpack.c.h.b16 %v250
      %v567 = vunpack.c.l.b16 %v251
      %v568 = vunpack.c.h.b16 %v251
      %v569 = vunpack.c.l.b16 %v252
      %v570 = vunpack.c.h.b16 %v252
      %v571 = vunpack.c.l.b16 %v253
      %v572 = vunpack.c.h.b16 %v253
      %v573 = vunpack.c.l.b16 %v254
      %v574 = vunpack.c.h.b16 %v254
      %v575 = vunpack.c.l.b16 %v255
      %v576 = vunpack.c.h.b16 %v255
      %v577 = vunpack.c.l.b16 %v256
      %v578 = vunpack.c.h.b16 %v256
      %v579 = vunpack.c.l.b16 %v257
      %v580 = vunpack.c.h.b16 %v257
      %v581 = vunpack.c.l.b16 %v258
      %v582 = vunpack.c.h.b16 %v258
      %v583 = vunpack.c.l.b16 %v259
      %v584 = vunpack.c.h.b16 %v259
      %v585 = vunpack.c.l.b16 %v260
      %v586 = vunpack.c.h.b16 %v260
      %v587 = vunpack.c.l.b16 %v261
      %v588 = vunpack.c.l.b16 %v262
      %v589 = vunpack.c.h.b16 %v262
      %v590 = vunpack.c.l.b16 %v263
      %v591 = vunpack.c.h.b16 %v263
      %v592 = vunpack.c.l.b16 %v264
      %v593 = vunpack.c.h.b16 %v264
      %v594 = vunpack.c.l.b16 %v265
      %v595 = vunpack.c.h.b16 %v265
      %v596 = vunpack.c.l.b16 %v266
      %v597 = vunpack.c.h.b16 %v266
      %v598 = vunpack.c.l.b16 %v267
      %v599 = vunpack.c.h.b16 %v267
      %v600 = vunpack.c.l.b16 %v268
      %v601 = vunpack.c.h.b16 %v268
      %v602 = vunpack.c.l.b16 %v269
      %v603 = vunpack.c.h.b16 %v269
      %v604 = vunpack.c.l.b16 %v270
      %v605 = vunpack.c.h.b16 %v270
      %v606 = vunpack.c.l.b16 %v271
      %v607 = vunpack.c.h.b16 %v271
      %v608 = vunpack.c.l.b16 %v272
      %v609 = vunpack.c.h.b16 %v272
      %v610 = vunpack.c.l.b16 %v273
      %v611 = vunpack.c.h.b16 %v273
      %v612 = vunpack.c.l.b16 %v274
      %v613 = vunpack.c.h.b16 %v274
      %v614 = vunpack.c.l.b16 %v275
      %v615 = vunpack.c.h.b16 %v275
      %v616 = vunpack.c.l.b16 %v276
      %v617 = vunpack.c.l.b16 %v277
      %v618 = vunpack.c.h.b16 %v277
      %v619 = vunpack.c.l.b16 %v278
      %v620 = vunpack.c.h.b16 %v278
      %v621 = vunpack.c.l.b16 %v279
      %v622 = vunpack.c.h.b16 %v279
      %v623 = vunpack.c.l.b16 %v280
      %v624 = vunpack.c.h.b16 %v280
      %v625 = vunpack.c.l.b16 %v281
      %v626 = vunpack.c.h.b16 %v281
      %v627 = vunpack.c.l.b16 %v282
      %v628 = vunpack.c.h.b16 %v282
      %v629 = vunpack.c.l.b16 %v283
      %v630 = vunpack.c.h.b16 %v283
      %v631 = vunpack.c.l.b16 %v284
      %v632 = vunpack.c.h.b16 %v284
      %v633 = vunpack.c.l.b16 %v285
      %v634 = vunpack.c.h.b16 %v285
      %v635 = vunpack.c.l.b16 %v286
      %v636 = vunpack.c.h.b16 %v286
      %v637 = vunpack.c.l.b16 %v287
      %v638 = vunpack.c.h.b16 %v287
      %v639 = vunpack.c.l.b16 %v288
      %v640 = vunpack.c.h.b16 %v288
      %v641 = vunpack.c.l.b16 %v289
      %v642 = vunpack.c.h.b16 %v289
      %v643 = vunpack.c.l.b16 %v290
      %v644 = vunpack.c.h.b16 %v290
      %v645 = vunpack.c.l.b16 %v291
      %v646 = vunpack.c.l.b16 %v292
      %v647 = vunpack.c.h.b16 %v292
      %v648 = vunpack.c.l.b16 %v293
      %v649 = vunpack.c.h.b16 %v293
      %v650 = vunpack.c.l.b16 %v294
      %v651 = vunpack.c.h.b16 %v294
      %v652 = vunpack.c.l.b16 %v295
      %v653 = vunpack.c.h.b16 %v295
      %v654 = vunpack.c.l.b16 %v296
      %v655 = vunpack.c.h.b16 %v296
      %v656 = vunpack.c.l.b16 %v297
      %v657 = vunpack.c.h.b16 %v297
      %v658 = vunpack.c.l.b16 %v298
      %v659 = vunpack.c.h.b16 %v298
      %v660 = vunpack.c.l.b16 %v299
      %v661 = vunpack.c.h.b16 %v299
      %v662 = vunpack.c.l.b16 %v300
      %v663 = vunpack.c.h.b16 %v300
      %v664 = vunpack.c.l.b16 %v301
      %v665 = vunpack.c.h.b16 %v301
      %v666 = vunpack.c.l.b16 %v302
      %v667 = vunpack.c.h.b16 %v302
      %v668 = vunpack.c.l.b16 %v303
      %v669 = vunpack.c.h.b16 %v303
      %v670 = vunpack.c.l.b16 %v304
      %v671 = vunpack.c.h.b16 %v304
      %v672 = vunpack.c.l.b16 %v305
      %v673 = vunpack.c.h.b16 %v305
      %v674 = vunpack.c.l.b16 %v306
      %v675 = vunpack.c.l.b16 %v307
      %v676 = vunpack.c.h.b16 %v307
      %v677 = vunpack.c.l.b16 %v308
      %v678 = vunpack.c.h.b16 %v308
      %v679 = vunpack.c.l.b16 %v309
      %v680 = vunpack.c.h.b16 %v309
      %v681 = vunpack.c.l.b16 %v310
      %v682 = vunpack.c.h.b16 %v310
      %v683 = vunpack.c.l.b16 %v311
      %v684 = vunpack.c.h.b16 %v311
      %v685 = vunpack.c.l.b16 %v312
      %v686 = vunpack.c.h.b16 %v312
      %v687 = vunpack.c.l.b16 %v313
      %v688 = vunpack.c.h.b16 %v313
      %v689 = vunpack.c.l.b16 %v314
      %v690 = vunpack.c.h.b16 %v314
      %v691 = vunpack.c.l.b16 %v315
      %v692 = vunpack.c.h.b16 %v315
      %v693 = vunpack.c.l.b16 %v316
      %v694 = vunpack.c.h.b16 %v316
      %v695 = vunpack.c.l.b16 %v317
      %v696 = vunpack.c.h.b16 %v317
      %v697 = vunpack.c.l.b16 %v318
      %v698 = vunpack.c.h.b16 %v318
      %v699 = vunpack.c.l.b16 %v319
      %v700 = vunpack.c.h.b16 %v319
      %v701 = vunpack.c.l.b16 %v320
      %v702 = vunpack.c.h.b16 %v320
      %v703 = vunpack.c.l.b16 %v321
      %v704 = vunpack.c.l.b16 %v322
      %v705 = vunpack.c.h.b16 %v322
      %v706 = vunpack.c.l.b16 %v323
      %v707 = vunpack.c.h.b16 %v323
      %v708 = vunpack.c.l.b16 %v324
      %v709 = vunpack.c.h.b16 %v324
      %v710 = vunpack.c.l.b16 %v325
      %v711 = vunpack.c.h.b16 %v325
      %v712 = vunpack.c.l.b16 %v326
      %v713 = vunpack.c.h.b16 %v326
      %v714 = vunpack.c.l.b16 %v327
      %v715 = vunpack.c.h.b16 %v327
      %v716 = vunpack.c.l.b16 %v328
      %v717 = vunpack.c.h.b16 %v328
      %v718 = vunpack.c.l.b16 %v329
      %v719 = vunpack.c.h.b16 %v329
      %v720 = vunpack.c.l.b16 %v330
      %v721 = vunpack.c.h.b16 %v330
      %v722 = vunpack.c.l.b16 %v331
      %v723 = vunpack.c.h.b16 %v331
      %v724 = vunpack.c.l.b16 %v332
      %v725 = vunpack.c.h.b16 %v332
      %v726 = vunpack.c.l.b16 %v333
      %v727 = vunpack.c.h.b16 %v333
      %v728 = vunpack.c.l.b16 %v334
      %v729 = vunpack.c.h.b16 %v334
      %v730 = vunpack.c.l.b16 %v335
      %v731 = vunpack.c.h.b16 %v335
      %v732 = vunpack.c.l.b16 %v336
      %v733 = vpack.c.b16 %v501, %v472
      %v734 = vpack.c.b16 %v502, %v473
      %v735 = vpack.c.b16 %v503, %v474
      %v736 = vpack.c.b16 %v504, %v475
      %v737 = vpack.c.b16 %v505, %v476
      %v738 = vpack.c.b16 %v506, %v477
      %v739 = vpack.c.b16 %v507, %v478
      %v740 = vpack.c.b16 %v508, %v479
      %v741 = vpack.c.b16 %v509, %v480
      %v742 = vpack.c.b16 %v510, %v481
      %v743 = vpack.c.b16 %v511, %v482
      %v744 = vpack.c.b16 %v512, %v483
      %v745 = vpack.c.b16 %v513, %v484
      %v746 = vpack.c.b16 %v514, %v485
      %v747 = vpack.c.b16 %v515, %v486
      %v748 = vpack.c.b16 %v516, %v487
      %v749 = vpack.c.b16 %v517, %v488
      %v750 = vpack.c.b16 %v518, %v489
      %v751 = vpack.c.b16 %v519, %v490
      %v752 = vpack.c.b16 %v520, %v491
      %v753 = vpack.c.b16 %v521, %v492
      %v754 = vpack.c.b16 %v522, %v493
      %v755 = vpack.c.b16 %v523, %v494
      %v756 = vpack.c.b16 %v524, %v495
      %v757 = vpack.c.b16 %v525, %v496
      %v758 = vpack.c.b16 %v526, %v497
      %v759 = vpack.c.b16 %v527, %v498
      %v760 = vpack.c.b16 %v528, %v499
      %v761 = vpack.c.b16 %v529, %v500
      %v762 = vpack.c.b16 %v559, %v530
      %v763 = vpack.c.b16 %v560, %v531
      %v764 = vpack.c.b16 %v561, %v532
      %v765 = vpack.c.b16 %v562, %v533
      %v766 = vpack.c.b16 %v563, %v534
      %v767 = vpack.c.b16 %v564, %v535
      %v768 = vpack.c.b16 %v565, %v536
      %v769 = vpack.c.b16 %v566, %v537
      %v770 = vpack.c.b16 %v567, %v538
      %v771 = vpack.c.b16 %v568, %v539
      %v772 = vpack.c.b16 %v569, %v540
      %v773 = vpack.c.b16 %v570, %v541
      %v774 = vpack.c.b16 %v571, %v542
      %v775 = vpack.c.b16 %v572, %v543
      %v776 = vpack.c.b16 %v573, %v544
      %v777 = vpack.c.b16 %v574, %v545
      %v778 = vpack.c.b16 %v575, %v546
      %v779 = vpack.c.b16 %v576, %v547
      %v780 = vpack.c.b16 %v577, %v548
      %v781 = vpack.c.b16 %v578, %v549
      %v782 = vpack.c.b16 %v579, %v550
      %v783 = vpack.c.b16 %v580, %v551
      %v784 = vpack.c.b16 %v581, %v552
      %v785 = vpack.c.b16 %v582, %v553
      %v786 = vpack.c.b16 %v583, %v554
      %v787 = vpack.c.b16 %v584, %v555
      %v788 = vpack.c.b16 %v585, %v556
      %v789 = vpack.c.b16 %v586, %v557
      %v790 = vpack.c.b16 %v587, %v558
      %v791 = vpack.c.b16 %v617, %v588
      %v792 = vpack.c.b16 %v618, %v589
      %v793 = vpack.c.b16 %v619, %v590
      %v794 = vpack.c.b16 %v620, %v591
      %v795 = vpack.c.b16 %v621, %v592
      %v796 = vpack.c.b16 %v622, %v593
      %v797 = vpack.c.b16 %v623, %v594
      %v798 = vpack.c.b16 %v624, %v595
      %v799 = vpack.c.b16 %v625, %v596
      %v800 = vpack.c.b16 %v626, %v597
      %v801 = vpack.c.b16 %v627, %v598
      %v802 = vpack.c.b16 %v628, %v599
      %v803 = vpack.c.b16 %v629, %v600
      %v804 = vpack.c.b16 %v630, %v601
      %v805 = vpack.c.b16 %v631, %v602
      %v806 = vpack.c.b16 %v632, %v603
      %v807 = vpack.c.b16 %v633, %v604
      %v808 = vpack.c.b16 %v634, %v605
      %v809 = vpack.c.b16 %v635, %v606
      %v810 = vpack.c.b16 %v636, %v607
      %v811 = vpack.c.b16 %v637, %v608
      %v812 = vpack.c.b16 %v638, %v609
      %v813 = vpack.c.b16 %v639, %v610
      %v814 = vpack.c.b16 %v640, %v611
      %v815 = vpack.c.b16 %v641, %v612
      %v816 = vpack.c.b16 %v642, %v613
      %v817 = vpack.c.b16 %v643, %v614
      %v818 = vpack.c.b16 %v644, %v615
      %v819 = vpack.c.b16 %v645, %v616
      %v820 = vpack.c.b16 %v675, %v646
      %v821 = vpack.c.b16 %v676, %v647
      %v822 = vpack.c.b16 %v677, %v648
      %v823 = vpack.c.b16 %v678, %v649
      %v824 = vpack.c.b16 %v679, %v650
      %v825 = vpack.c.b16 %v680, %v651
      %v826 = vpack.c.b16 %v681, %v652
      %v827 = vpack.c.b16 %v682, %v653
      %v828 = vpack.c.b16 %v683, %v654
      %v829 = vpack.c.b16 %v684, %v655
      %v830 = vpack.c.b16 %v685, %v656
      %v831 = vpack.c.b16 %v686, %v657
      %v832 = vpack.c.b16 %v687, %v658
      %v833 = vpack.c.b16 %v688, %v659
      %v834 = vpack.c.b16 %v689, %v660
      %v835 = vpack.c.b16 %v690, %v661
      %v836 = vpack.c.b16 %v691, %v662
      %v837 = vpack.c.b16 %v692, %v663
      %v838 = vpack.c.b16 %v693, %v664
      %v839 = vpack.c.b16 %v694, %v665
      %v840 = vpack.c.b16 %v695, %v666
      %v841 = vpack.c.b16 %v696, %v667
      %v842 = vpack.c.b16 %v697, %v668
      %v843 = vpack.c.b16 %v698, %v669
      %v844 = vpack.c.b16 %v699, %v670
      %v845 = vpack.c.b16 %v700, %v671
      %v846 = vpack.c.b16 %v701, %v672
      %v847 = vpack.c.b16 %v702, %v673
      %v848 = vpack.c.b16 %v703, %v674
      %v849 = vpack.c.b16 %v704, %v704
      %v850 = vpack.c.b16 %v705, %v705
      %v851 = vpack.c.b16 %v706, %v706
      %v852 = vpack.c.b16 %v707, %v707
      %v853 = vpack.c.b16 %v708, %v708
      %v854 = vpack.c.b16 %v709, %v709
      %v855 = vpack.c.b16 %v710, %v710
      %v856 = vpack.c.b16 %v711, %v711
      %v857 = vpack.c.b16 %v712, %v712
      %v858 = vpack.c.b16 %v713, %v713
      %v859 = vpack.c.b16 %v714, %v714
      %v860 = vpack.c.b16 %v715, %v715
      %v861 = vpack.c.b16 %v716, %v716
      %v862 = vpack.c.b16 %v717, %v717
      %v863 = vpack.c.b16 %v718, %v718
      %v864 = vpack.c.b16 %v719, %v719
      %v865 = vpack.c.b16 %v720, %v720
      %v866 = vpack.c.b16 %v721, %v721
      %v867 = vpack.c.b16 %v722, %v722
      %v868 = vpack.c.b16 %v723, %v723
      %v869 = vpack.c.b16 %v724, %v724
      %v870 = vpack.c.b16 %v725, %v725
      %v871 = vpack.c.b16 %v726, %v726
      %v872 = vpack.c.b16 %v727, %v727
      %v873 = vpack.c.b16 %v728, %v728
      %v874 = vpack.c.b16 %v729, %v729
      %v875 = vpack.c.b16 %v730, %v730
      %v876 = vpack.c.b16 %v731, %v731
      %v877 = vpack.c.b16 %v732, %v732
      %vm994 = vcmask 588800
      %v996 = vsel %vm994, %v201, 0
      %vm998 = vcmask 1043456
      %v1000 = vsel %vm998, %v849, 0
      %v1003 = vsel %vm998, %v850, 0
      %v1006 = vsel %vm998, %v851, 0
      %v1009 = vsel %vm998, %v852, 0
      %v1012 = vsel %vm998, %v853, 0
      %v1015 = vsel %vm998, %v854, 0
      %v1018 = vsel %vm998, %v855, 0
      %v1021 = vsel %vm998, %v856, 0
      %v1024 = vsel %vm998, %v857, 0
      %v1027 = vsel %vm998, %v858, 0
      %v1030 = vsel %vm998, %v859, 0
      %v1033 = vsel %vm998, %v860, 0
      %v1036 = vsel %vm998, %v861, 0
      %v1039 = vsel %vm998, %v862, 0
      %v1042 = vsel %vm998, %v863, 0
      %v1045 = vsel %vm998, %v864, 0
      %v1048 = vsel %vm998, %v865, 0
      %v1051 = vsel %vm998, %v866, 0
      %v1054 = vsel %vm998, %v867, 0
      %v1057 = vsel %vm998, %v868, 0
      %v1060 = vsel %vm998, %v869, 0
      %v1063 = vsel %vm998, %v870, 0
      %v1066 = vsel %vm998, %v871, 0
      %v1069 = vsel %vm998, %v872, 0
      %v1072 = vsel %vm998, %v873, 0
      %v1075 = vsel %vm998, %v874, 0
      %v1078 = vsel %vm998, %v875, 0
      %v1081 = vsel %vm998, %v876, 0
      %v1084 = vsel %vm998, %v877, 0
      %1086 = vmatpush.bf16.msra.mxu0 0
      %1087 = vmatpush.bf16.msra.mxu0 0
      %1088 = vmatpush.bf16.msra.mxu0 0
      %1089 = vmatpush.bf16.msra.mxu0 %v1000
      %1090 = vmatpush.bf16.msra.mxu0 %v820
      %1091 = vmatpush.bf16.msra.mxu0 %v791
      %1092 = vmatpush.bf16.msra.mxu0 %v762
      %1093 = vmatpush.bf16.msra.mxu0 %v733
      %1094 = vmatmul.bf16.gmra.mxu0 %v996
      %v1095 = vpop.f32.mrf.mxu0
      %v1096 = vadd.f32 0.0, %v1095
      %v1097 = vpop.f32.mrf.mxu0
      %1098 = vdwg.mxu0
      %1099 = vmatpush.bf16.msra.mxu0 0
      %1100 = vmatpush.bf16.msra.mxu0 0
      %1101 = vmatpush.bf16.msra.mxu0 0
      %1102 = vmatpush.bf16.msra.mxu0 %v1003
      %1103 = vmatpush.bf16.msra.mxu0 %v821
      %1104 = vmatpush.bf16.msra.mxu0 %v792
      %1105 = vmatpush.bf16.msra.mxu0 %v763
      %1106 = vmatpush.bf16.msra.mxu0 %v734
      %1107 = vmatmul.bf16.gmra.mxu0 %v996
      %v1108 = vpop.f32.mrf.mxu0
      %v1109 = vadd.f32 0.0, %v1108
      %v1110 = vpop.f32.mrf.mxu0
      %1111 = vdwg.mxu0
      %1112 = vmatpush.bf16.msra.mxu0 0
      %1113 = vmatpush.bf16.msra.mxu0 0
      %1114 = vmatpush.bf16.msra.mxu0 0
      %1115 = vmatpush.bf16.msra.mxu0 %v1006
      %1116 = vmatpush.bf16.msra.mxu0 %v822
      %1117 = vmatpush.bf16.msra.mxu0 %v793
      %1118 = vmatpush.bf16.msra.mxu0 %v764
      %1119 = vmatpush.bf16.msra.mxu0 %v735
      %1120 = vmatmul.bf16.gmra.mxu0 %v996
      %v1121 = vpop.f32.mrf.mxu0
      %v1122 = vadd.f32 0.0, %v1121
      %v1123 = vpop.f32.mrf.mxu0
      %1124 = vdwg.mxu0
      %1125 = vmatpush.bf16.msra.mxu0 0
      %1126 = vmatpush.bf16.msra.mxu0 0
      %1127 = vmatpush.bf16.msra.mxu0 0
      %1128 = vmatpush.bf16.msra.mxu0 %v1009
      %1129 = vmatpush.bf16.msra.mxu0 %v823
      %1130 = vmatpush.bf16.msra.mxu0 %v794
      %1131 = vmatpush.bf16.msra.mxu0 %v765
      %1132 = vmatpush.bf16.msra.mxu0 %v736
      %1133 = vmatmul.bf16.gmra.mxu0 %v996
      %v1134 = vpop.f32.mrf.mxu0
      %v1135 = vadd.f32 0.0, %v1134
      %v1136 = vpop.f32.mrf.mxu0
      %1137 = vdwg.mxu0
      %1138 = vmatpush.bf16.msra.mxu0 0
      %1139 = vmatpush.bf16.msra.mxu0 0
      %1140 = vmatpush.bf16.msra.mxu0 0
      %1141 = vmatpush.bf16.msra.mxu0 %v1012
      %1142 = vmatpush.bf16.msra.mxu0 %v824
      %1143 = vmatpush.bf16.msra.mxu0 %v795
      %1144 = vmatpush.bf16.msra.mxu0 %v766
      %1145 = vmatpush.bf16.msra.mxu0 %v737
      %1146 = vmatmul.bf16.gmra.mxu0 %v996
      %v1147 = vpop.f32.mrf.mxu0
      %v1148 = vadd.f32 0.0, %v1147
      %v1149 = vpop.f32.mrf.mxu0
      %1150 = vdwg.mxu0
      %1151 = vmatpush.bf16.msra.mxu0 0
      %1152 = vmatpush.bf16.msra.mxu0 0
      %1153 = vmatpush.bf16.msra.mxu0 0
      %1154 = vmatpush.bf16.msra.mxu0 %v1015
      %1155 = vmatpush.bf16.msra.mxu0 %v825
      %1156 = vmatpush.bf16.msra.mxu0 %v796
      %1157 = vmatpush.bf16.msra.mxu0 %v767
      %1158 = vmatpush.bf16.msra.mxu0 %v738
      %1159 = vmatmul.bf16.gmra.mxu0 %v996
      %v1160 = vpop.f32.mrf.mxu0
      %v1161 = vadd.f32 0.0, %v1160
      %v1162 = vpop.f32.mrf.mxu0
      %1163 = vdwg.mxu0
      %1164 = vmatpush.bf16.msra.mxu0 0
      %1165 = vmatpush.bf16.msra.mxu0 0
      %1166 = vmatpush.bf16.msra.mxu0 0
      %1167 = vmatpush.bf16.msra.mxu0 %v1018
      %1168 = vmatpush.bf16.msra.mxu0 %v826
      %1169 = vmatpush.bf16.msra.mxu0 %v797
      %1170 = vmatpush.bf16.msra.mxu0 %v768
      %1171 = vmatpush.bf16.msra.mxu0 %v739
      %1172 = vmatmul.bf16.gmra.mxu0 %v996
      %v1173 = vpop.f32.mrf.mxu0
      %v1174 = vadd.f32 0.0, %v1173
      %v1175 = vpop.f32.mrf.mxu0
      %1176 = vdwg.mxu0
      %1177 = vmatpush.bf16.msra.mxu0 0
      %1178 = vmatpush.bf16.msra.mxu0 0
      %1179 = vmatpush.bf16.msra.mxu0 0
      %1180 = vmatpush.bf16.msra.mxu0 %v1021
      %1181 = vmatpush.bf16.msra.mxu0 %v827
      %1182 = vmatpush.bf16.msra.mxu0 %v798
      %1183 = vmatpush.bf16.msra.mxu0 %v769
      %1184 = vmatpush.bf16.msra.mxu0 %v740
      %1185 = vmatmul.bf16.gmra.mxu0 %v996
      %v1186 = vpop.f32.mrf.mxu0
      %v1187 = vadd.f32 0.0, %v1186
      %v1188 = vpop.f32.mrf.mxu0
      %1189 = vdwg.mxu0
      %1190 = vmatpush.bf16.msra.mxu0 0
      %1191 = vmatpush.bf16.msra.mxu0 0
      %1192 = vmatpush.bf16.msra.mxu0 0
      %1193 = vmatpush.bf16.msra.mxu0 %v1024
      %1194 = vmatpush.bf16.msra.mxu0 %v828
      %1195 = vmatpush.bf16.msra.mxu0 %v799
      %1196 = vmatpush.bf16.msra.mxu0 %v770
      %1197 = vmatpush.bf16.msra.mxu0 %v741
      %1198 = vmatmul.bf16.gmra.mxu0 %v996
      %v1199 = vpop.f32.mrf.mxu0
      %v1200 = vadd.f32 0.0, %v1199
      %v1201 = vpop.f32.mrf.mxu0
      %1202 = vdwg.mxu0
      %1203 = vmatpush.bf16.msra.mxu0 0
      %1204 = vmatpush.bf16.msra.mxu0 0
      %1205 = vmatpush.bf16.msra.mxu0 0
      %1206 = vmatpush.bf16.msra.mxu0 %v1027
      %1207 = vmatpush.bf16.msra.mxu0 %v829
      %1208 = vmatpush.bf16.msra.mxu0 %v800
      %1209 = vmatpush.bf16.msra.mxu0 %v771
      %1210 = vmatpush.bf16.msra.mxu0 %v742
      %1211 = vmatmul.bf16.gmra.mxu0 %v996
      %v1212 = vpop.f32.mrf.mxu0
      %v1213 = vadd.f32 0.0, %v1212
      %v1214 = vpop.f32.mrf.mxu0
      %1215 = vdwg.mxu0
      %1216 = vmatpush.bf16.msra.mxu0 0
      %1217 = vmatpush.bf16.msra.mxu0 0
      %1218 = vmatpush.bf16.msra.mxu0 0
      %1219 = vmatpush.bf16.msra.mxu0 %v1030
      %1220 = vmatpush.bf16.msra.mxu0 %v830
      %1221 = vmatpush.bf16.msra.mxu0 %v801
      %1222 = vmatpush.bf16.msra.mxu0 %v772
      %1223 = vmatpush.bf16.msra.mxu0 %v743
      %1224 = vmatmul.bf16.gmra.mxu0 %v996
      %v1225 = vpop.f32.mrf.mxu0
      %v1226 = vadd.f32 0.0, %v1225
      %v1227 = vpop.f32.mrf.mxu0
      %1228 = vdwg.mxu0
      %1229 = vmatpush.bf16.msra.mxu0 0
      %1230 = vmatpush.bf16.msra.mxu0 0
      %1231 = vmatpush.bf16.msra.mxu0 0
      %1232 = vmatpush.bf16.msra.mxu0 %v1033
      %1233 = vmatpush.bf16.msra.mxu0 %v831
      %1234 = vmatpush.bf16.msra.mxu0 %v802
      %1235 = vmatpush.bf16.msra.mxu0 %v773
      %1236 = vmatpush.bf16.msra.mxu0 %v744
      %1237 = vmatmul.bf16.gmra.mxu0 %v996
      %v1238 = vpop.f32.mrf.mxu0
      %v1239 = vadd.f32 0.0, %v1238
      %v1240 = vpop.f32.mrf.mxu0
      %1241 = vdwg.mxu0
      %1242 = vmatpush.bf16.msra.mxu0 0
      %1243 = vmatpush.bf16.msra.mxu0 0
      %1244 = vmatpush.bf16.msra.mxu0 0
      %1245 = vmatpush.bf16.msra.mxu0 %v1036
      %1246 = vmatpush.bf16.msra.mxu0 %v832
      %1247 = vmatpush.bf16.msra.mxu0 %v803
      %1248 = vmatpush.bf16.msra.mxu0 %v774
      %1249 = vmatpush.bf16.msra.mxu0 %v745
      %1250 = vmatmul.bf16.gmra.mxu0 %v996
      %v1251 = vpop.f32.mrf.mxu0
      %v1252 = vadd.f32 0.0, %v1251
      %v1253 = vpop.f32.mrf.mxu0
      %1254 = vdwg.mxu0
      %1255 = vmatpush.bf16.msra.mxu0 0
      %1256 = vmatpush.bf16.msra.mxu0 0
      %1257 = vmatpush.bf16.msra.mxu0 0
      %1258 = vmatpush.bf16.msra.mxu0 %v1039
      %1259 = vmatpush.bf16.msra.mxu0 %v833
      %1260 = vmatpush.bf16.msra.mxu0 %v804
      %1261 = vmatpush.bf16.msra.mxu0 %v775
      %1262 = vmatpush.bf16.msra.mxu0 %v746
      %1263 = vmatmul.bf16.gmra.mxu0 %v996
      %v1264 = vpop.f32.mrf.mxu0
      %v1265 = vadd.f32 0.0, %v1264
      %v1266 = vpop.f32.mrf.mxu0
      %1267 = vdwg.mxu0
      %1268 = vmatpush.bf16.msra.mxu0 0
      %1269 = vmatpush.bf16.msra.mxu0 0
      %1270 = vmatpush.bf16.msra.mxu0 0
      %1271 = vmatpush.bf16.msra.mxu0 %v1042
      %1272 = vmatpush.bf16.msra.mxu0 %v834
      %1273 = vmatpush.bf16.msra.mxu0 %v805
      %1274 = vmatpush.bf16.msra.mxu0 %v776
      %1275 = vmatpush.bf16.msra.mxu0 %v747
      %1276 = vmatmul.bf16.gmra.mxu0 %v996
      %v1277 = vpop.f32.mrf.mxu0
      %v1278 = vadd.f32 0.0, %v1277
      %v1279 = vpop.f32.mrf.mxu0
      %1280 = vdwg.mxu0
      %1281 = vmatpush.bf16.msra.mxu0 0
      %1282 = vmatpush.bf16.msra.mxu0 0
      %1283 = vmatpush.bf16.msra.mxu0 0
      %1284 = vmatpush.bf16.msra.mxu0 %v1045
      %1285 = vmatpush.bf16.msra.mxu0 %v835
      %1286 = vmatpush.bf16.msra.mxu0 %v806
      %1287 = vmatpush.bf16.msra.mxu0 %v777
      %1288 = vmatpush.bf16.msra.mxu0 %v748
      %1289 = vmatmul.bf16.gmra.mxu0 %v996
      %v1290 = vpop.f32.mrf.mxu0
      %v1291 = vadd.f32 0.0, %v1290
      %v1292 = vpop.f32.mrf.mxu0
      %1293 = vdwg.mxu0
      %1294 = vmatpush.bf16.msra.mxu0 0
      %1295 = vmatpush.bf16.msra.mxu0 0
      %1296 = vmatpush.bf16.msra.mxu0 0
      %1297 = vmatpush.bf16.msra.mxu0 %v1048
      %1298 = vmatpush.bf16.msra.mxu0 %v836
      %1299 = vmatpush.bf16.msra.mxu0 %v807
      %1300 = vmatpush.bf16.msra.mxu0 %v778
      %1301 = vmatpush.bf16.msra.mxu0 %v749
      %1302 = vmatmul.bf16.gmra.mxu0 %v996
      %v1303 = vpop.f32.mrf.mxu0
      %v1304 = vadd.f32 0.0, %v1303
      %v1305 = vpop.f32.mrf.mxu0
      %1306 = vdwg.mxu0
      %1307 = vmatpush.bf16.msra.mxu0 0
      %1308 = vmatpush.bf16.msra.mxu0 0
      %1309 = vmatpush.bf16.msra.mxu0 0
      %1310 = vmatpush.bf16.msra.mxu0 %v1051
      %1311 = vmatpush.bf16.msra.mxu0 %v837
      %1312 = vmatpush.bf16.msra.mxu0 %v808
      %1313 = vmatpush.bf16.msra.mxu0 %v779
      %1314 = vmatpush.bf16.msra.mxu0 %v750
      %1315 = vmatmul.bf16.gmra.mxu0 %v996
      %v1316 = vpop.f32.mrf.mxu0
      %v1317 = vadd.f32 0.0, %v1316
      %v1318 = vpop.f32.mrf.mxu0
      %1319 = vdwg.mxu0
      %1320 = vmatpush.bf16.msra.mxu0 0
      %1321 = vmatpush.bf16.msra.mxu0 0
      %1322 = vmatpush.bf16.msra.mxu0 0
      %1323 = vmatpush.bf16.msra.mxu0 %v1054
      %1324 = vmatpush.bf16.msra.mxu0 %v838
      %1325 = vmatpush.bf16.msra.mxu0 %v809
      %1326 = vmatpush.bf16.msra.mxu0 %v780
      %1327 = vmatpush.bf16.msra.mxu0 %v751
      %1328 = vmatmul.bf16.gmra.mxu0 %v996
      %v1329 = vpop.f32.mrf.mxu0
      %v1330 = vadd.f32 0.0, %v1329
      %v1331 = vpop.f32.mrf.mxu0
      %1332 = vdwg.mxu0
      %1333 = vmatpush.bf16.msra.mxu0 0
      %1334 = vmatpush.bf16.msra.mxu0 0
      %1335 = vmatpush.bf16.msra.mxu0 0
      %1336 = vmatpush.bf16.msra.mxu0 %v1057
      %1337 = vmatpush.bf16.msra.mxu0 %v839
      %1338 = vmatpush.bf16.msra.mxu0 %v810
      %1339 = vmatpush.bf16.msra.mxu0 %v781
      %1340 = vmatpush.bf16.msra.mxu0 %v752
      %1341 = vmatmul.bf16.gmra.mxu0 %v996
      %v1342 = vpop.f32.mrf.mxu0
      %v1343 = vadd.f32 0.0, %v1342
      %v1344 = vpop.f32.mrf.mxu0
      %1345 = vdwg.mxu0
      %1346 = vmatpush.bf16.msra.mxu0 0
      %1347 = vmatpush.bf16.msra.mxu0 0
      %1348 = vmatpush.bf16.msra.mxu0 0
      %1349 = vmatpush.bf16.msra.mxu0 %v1060
      %1350 = vmatpush.bf16.msra.mxu0 %v840
      %1351 = vmatpush.bf16.msra.mxu0 %v811
      %1352 = vmatpush.bf16.msra.mxu0 %v782
      %1353 = vmatpush.bf16.msra.mxu0 %v753
      %1354 = vmatmul.bf16.gmra.mxu0 %v996
      %v1355 = vpop.f32.mrf.mxu0
      %v1356 = vadd.f32 0.0, %v1355
      %v1357 = vpop.f32.mrf.mxu0
      %1358 = vdwg.mxu0
      %1359 = vmatpush.bf16.msra.mxu0 0
      %1360 = vmatpush.bf16.msra.mxu0 0
      %1361 = vmatpush.bf16.msra.mxu0 0
      %1362 = vmatpush.bf16.msra.mxu0 %v1063
      %1363 = vmatpush.bf16.msra.mxu0 %v841
      %1364 = vmatpush.bf16.msra.mxu0 %v812
      %1365 = vmatpush.bf16.msra.mxu0 %v783
      %1366 = vmatpush.bf16.msra.mxu0 %v754
      %1367 = vmatmul.bf16.gmra.mxu0 %v996
      %v1368 = vpop.f32.mrf.mxu0
      %v1369 = vadd.f32 0.0, %v1368
      %v1370 = vpop.f32.mrf.mxu0
      %1371 = vdwg.mxu0
      %1372 = vmatpush.bf16.msra.mxu0 0
      %1373 = vmatpush.bf16.msra.mxu0 0
      %1374 = vmatpush.bf16.msra.mxu0 0
      %1375 = vmatpush.bf16.msra.mxu0 %v1066
      %1376 = vmatpush.bf16.msra.mxu0 %v842
      %1377 = vmatpush.bf16.msra.mxu0 %v813
      %1378 = vmatpush.bf16.msra.mxu0 %v784
      %1379 = vmatpush.bf16.msra.mxu0 %v755
      %1380 = vmatmul.bf16.gmra.mxu0 %v996
      %v1381 = vpop.f32.mrf.mxu0
      %v1382 = vadd.f32 0.0, %v1381
      %v1383 = vpop.f32.mrf.mxu0
      %1384 = vdwg.mxu0
      %1385 = vmatpush.bf16.msra.mxu0 0
      %1386 = vmatpush.bf16.msra.mxu0 0
      %1387 = vmatpush.bf16.msra.mxu0 0
      %1388 = vmatpush.bf16.msra.mxu0 %v1069
      %1389 = vmatpush.bf16.msra.mxu0 %v843
      %1390 = vmatpush.bf16.msra.mxu0 %v814
      %1391 = vmatpush.bf16.msra.mxu0 %v785
      %1392 = vmatpush.bf16.msra.mxu0 %v756
      %1393 = vmatmul.bf16.gmra.mxu0 %v996
      %v1394 = vpop.f32.mrf.mxu0
      %v1395 = vadd.f32 0.0, %v1394
      %v1396 = vpop.f32.mrf.mxu0
      %1397 = vdwg.mxu0
      %1398 = vmatpush.bf16.msra.mxu0 0
      %1399 = vmatpush.bf16.msra.mxu0 0
      %1400 = vmatpush.bf16.msra.mxu0 0
      %1401 = vmatpush.bf16.msra.mxu0 %v1072
      %1402 = vmatpush.bf16.msra.mxu0 %v844
      %1403 = vmatpush.bf16.msra.mxu0 %v815
      %1404 = vmatpush.bf16.msra.mxu0 %v786
      %1405 = vmatpush.bf16.msra.mxu0 %v757
      %1406 = vmatmul.bf16.gmra.mxu0 %v996
      %v1407 = vpop.f32.mrf.mxu0
      %v1408 = vadd.f32 0.0, %v1407
      %v1409 = vpop.f32.mrf.mxu0
      %1410 = vdwg.mxu0
      %1411 = vmatpush.bf16.msra.mxu0 0
      %1412 = vmatpush.bf16.msra.mxu0 0
      %1413 = vmatpush.bf16.msra.mxu0 0
      %1414 = vmatpush.bf16.msra.mxu0 %v1075
      %1415 = vmatpush.bf16.msra.mxu0 %v845
      %1416 = vmatpush.bf16.msra.mxu0 %v816
      %1417 = vmatpush.bf16.msra.mxu0 %v787
      %1418 = vmatpush.bf16.msra.mxu0 %v758
      %1419 = vmatmul.bf16.gmra.mxu0 %v996
      %v1420 = vpop.f32.mrf.mxu0
      %v1421 = vadd.f32 0.0, %v1420
      %v1422 = vpop.f32.mrf.mxu0
      %1423 = vdwg.mxu0
      %1424 = vmatpush.bf16.msra.mxu0 0
      %1425 = vmatpush.bf16.msra.mxu0 0
      %1426 = vmatpush.bf16.msra.mxu0 0
      %1427 = vmatpush.bf16.msra.mxu0 %v1078
      %1428 = vmatpush.bf16.msra.mxu0 %v846
      %1429 = vmatpush.bf16.msra.mxu0 %v817
      %1430 = vmatpush.bf16.msra.mxu0 %v788
      %1431 = vmatpush.bf16.msra.mxu0 %v759
      %1432 = vmatmul.bf16.gmra.mxu0 %v996
      %v1433 = vpop.f32.mrf.mxu0
      %v1434 = vadd.f32 0.0, %v1433
      %v1435 = vpop.f32.mrf.mxu0
      %1436 = vdwg.mxu0
      %1437 = vmatpush.bf16.msra.mxu0 0
      %1438 = vmatpush.bf16.msra.mxu0 0
      %1439 = vmatpush.bf16.msra.mxu0 0
      %1440 = vmatpush.bf16.msra.mxu0 %v1081
      %1441 = vmatpush.bf16.msra.mxu0 %v847
      %1442 = vmatpush.bf16.msra.mxu0 %v818
      %1443 = vmatpush.bf16.msra.mxu0 %v789
      %1444 = vmatpush.bf16.msra.mxu0 %v760
      %1445 = vmatmul.bf16.gmra.mxu0 %v996
      %v1446 = vpop.f32.mrf.mxu0
      %v1447 = vadd.f32 0.0, %v1446
      %v1448 = vpop.f32.mrf.mxu0
      %1449 = vdwg.mxu0
      %1450 = vmatpush.bf16.msra.mxu0 0
      %1451 = vmatpush.bf16.msra.mxu0 0
      %1452 = vmatpush.bf16.msra.mxu0 0
      %1453 = vmatpush.bf16.msra.mxu0 %v1084
      %1454 = vmatpush.bf16.msra.mxu0 %v848
      %1455 = vmatpush.bf16.msra.mxu0 %v819
      %1456 = vmatpush.bf16.msra.mxu0 %v790
      %1457 = vmatpush.bf16.msra.mxu0 %v761
      %1458 = vmatmul.bf16.gmra.mxu0 %v996
      %v1459 = vpop.f32.mrf.mxu0
      %v1460 = vadd.f32 0.0, %v1459
      %v1461 = vpop.f32.mrf.mxu0
      %1462 = vdwg.mxu0
      %v1463 = vld [vmem:[#allocation2] sm:$0x1]
      %1465 = vset.pattern.permute.xlu0 0
      %1466 = vperm.xlu0 %1465, %v1463
      %v1467 = vpop.permute.xlu0 %1466
      %v1469 = vperm.slane %v1467, 0
      %v1470 = vmul.f32 %v1096, %v1469
      %v1471 = vmul.f32 %v1109, %v1469
      %v1472 = vmul.f32 %v1122, %v1469
      %v1473 = vmul.f32 %v1135, %v1469
      %v1474 = vmul.f32 %v1148, %v1469
      %v1475 = vmul.f32 %v1161, %v1469
      %v1476 = vmul.f32 %v1174, %v1469
      %v1477 = vmul.f32 %v1187, %v1469
      %v1478 = vmul.f32 %v1200, %v1469
      %v1479 = vmul.f32 %v1213, %v1469
      %v1480 = vmul.f32 %v1226, %v1469
      %v1481 = vmul.f32 %v1239, %v1469
      %v1482 = vmul.f32 %v1252, %v1469
      %v1483 = vmul.f32 %v1265, %v1469
      %v1484 = vmul.f32 %v1278, %v1469
      %v1485 = vmul.f32 %v1291, %v1469
      %v1486 = vmul.f32 %v1304, %v1469
      %v1487 = vmul.f32 %v1317, %v1469
      %v1488 = vmul.f32 %v1330, %v1469
      %v1489 = vmul.f32 %v1343, %v1469
      %v1490 = vmul.f32 %v1356, %v1469
      %v1491 = vmul.f32 %v1369, %v1469
      %v1492 = vmul.f32 %v1382, %v1469
      %v1493 = vmul.f32 %v1395, %v1469
      %v1494 = vmul.f32 %v1408, %v1469
      %v1495 = vmul.f32 %v1421, %v1469
      %v1496 = vmul.f32 %v1434, %v1469
      %v1497 = vmul.f32 %v1447, %v1469
      %v1498 = vmul.f32 %v1460, %v1469
      %v1499 = vld [vmem:[#allocation3] sm:$0x1]
      %1501 = vset.pattern.permute.xlu0 0
      %1502 = vperm.xlu0 %1501, %v1499
      %v1503 = vpop.permute.xlu0 %1502
      %v1505 = vperm.slane %v1503, 0
      %v1506 = vadd.f32 %v1470, %v1505
      %v1507 = vadd.f32 %v1471, %v1505
      %v1508 = vadd.f32 %v1472, %v1505
      %v1509 = vadd.f32 %v1473, %v1505
      %v1510 = vadd.f32 %v1474, %v1505
      %v1511 = vadd.f32 %v1475, %v1505
      %v1512 = vadd.f32 %v1476, %v1505
      %v1513 = vadd.f32 %v1477, %v1505
      %v1514 = vadd.f32 %v1478, %v1505
      %v1515 = vadd.f32 %v1479, %v1505
      %v1516 = vadd.f32 %v1480, %v1505
      %v1517 = vadd.f32 %v1481, %v1505
      %v1518 = vadd.f32 %v1482, %v1505
      %v1519 = vadd.f32 %v1483, %v1505
      %v1520 = vadd.f32 %v1484, %v1505
      %v1521 = vadd.f32 %v1485, %v1505
      %v1522 = vadd.f32 %v1486, %v1505
      %v1523 = vadd.f32 %v1487, %v1505
      %v1524 = vadd.f32 %v1488, %v1505
      %v1525 = vadd.f32 %v1489, %v1505
      %v1526 = vadd.f32 %v1490, %v1505
      %v1527 = vadd.f32 %v1491, %v1505
      %v1528 = vadd.f32 %v1492, %v1505
      %v1529 = vadd.f32 %v1493, %v1505
      %v1530 = vadd.f32 %v1494, %v1505
      %v1531 = vadd.f32 %v1495, %v1505
      %v1532 = vadd.f32 %v1496, %v1505
      %v1533 = vadd.f32 %v1497, %v1505
      %v1534 = vadd.f32 %v1498, %v1505
      %v1535 = vxor.u32 %v1506, 2147483648
      %v1536 = vxor.u32 %v1507, 2147483648
      %v1537 = vxor.u32 %v1508, 2147483648
      %v1538 = vxor.u32 %v1509, 2147483648
      %v1539 = vxor.u32 %v1510, 2147483648
      %v1540 = vxor.u32 %v1511, 2147483648
      %v1541 = vxor.u32 %v1512, 2147483648
      %v1542 = vxor.u32 %v1513, 2147483648
      %v1543 = vxor.u32 %v1514, 2147483648
      %v1544 = vxor.u32 %v1515, 2147483648
      %v1545 = vxor.u32 %v1516, 2147483648
      %v1546 = vxor.u32 %v1517, 2147483648
      %v1547 = vxor.u32 %v1518, 2147483648
      %v1548 = vxor.u32 %v1519, 2147483648
      %v1549 = vxor.u32 %v1520, 2147483648
      %v1550 = vxor.u32 %v1521, 2147483648
      %v1551 = vxor.u32 %v1522, 2147483648
      %v1552 = vxor.u32 %v1523, 2147483648
      %v1553 = vxor.u32 %v1524, 2147483648
      %v1554 = vxor.u32 %v1525, 2147483648
      %v1555 = vxor.u32 %v1526, 2147483648
      %v1556 = vxor.u32 %v1527, 2147483648
      %v1557 = vxor.u32 %v1528, 2147483648
      %v1558 = vxor.u32 %v1529, 2147483648
      %v1559 = vxor.u32 %v1530, 2147483648
      %v1560 = vxor.u32 %v1531, 2147483648
      %v1561 = vxor.u32 %v1532, 2147483648
      %v1562 = vxor.u32 %v1533, 2147483648
      %v1563 = vxor.u32 %v1534, 2147483648
      %v1564 = vmul.f32 %v1535, 1.442695
      %v1565 = vpow.pop %v1564
      %v1566 = vmul.f32 %v1536, 1.442695
      %v1567 = vpow.pop %v1566
      %v1568 = vmul.f32 %v1537, 1.442695
      %v1569 = vpow.pop %v1568
      %v1570 = vmul.f32 %v1538, 1.442695
      %v1571 = vpow.pop %v1570
      %v1572 = vmul.f32 %v1539, 1.442695
      %v1573 = vpow.pop %v1572
      %v1574 = vmul.f32 %v1540, 1.442695
      %v1575 = vpow.pop %v1574
      %v1576 = vmul.f32 %v1541, 1.442695
      %v1577 = vpow.pop %v1576
      %v1578 = vmul.f32 %v1542, 1.442695
      %v1579 = vpow.pop %v1578
      %v1580 = vmul.f32 %v1543, 1.442695
      %v1581 = vpow.pop %v1580
      %v1582 = vmul.f32 %v1544, 1.442695
      %v1583 = vpow.pop %v1582
      %v1584 = vmul.f32 %v1545, 1.442695
      %v1585 = vpow.pop %v1584
      %v1586 = vmul.f32 %v1546, 1.442695
      %v1587 = vpow.pop %v1586
      %v1588 = vmul.f32 %v1547, 1.442695
      %v1589 = vpow.pop %v1588
      %v1590 = vmul.f32 %v1548, 1.442695
      %v1591 = vpow.pop %v1590
      %v1592 = vmul.f32 %v1549, 1.442695
      %v1593 = vpow.pop %v1592
      %v1594 = vmul.f32 %v1550, 1.442695
      %v1595 = vpow.pop %v1594
      %v1596 = vmul.f32 %v1551, 1.442695
      %v1597 = vpow.pop %v1596
      %v1598 = vmul.f32 %v1552, 1.442695
      %v1599 = vpow.pop %v1598
      %v1600 = vmul.f32 %v1553, 1.442695
      %v1601 = vpow.pop %v1600
      %v1602 = vmul.f32 %v1554, 1.442695
      %v1603 = vpow.pop %v1602
      %v1604 = vmul.f32 %v1555, 1.442695
      %v1605 = vpow.pop %v1604
      %v1606 = vmul.f32 %v1556, 1.442695
      %v1607 = vpow.pop %v1606
      %v1608 = vmul.f32 %v1557, 1.442695
      %v1609 = vpow.pop %v1608
      %v1610 = vmul.f32 %v1558, 1.442695
      %v1611 = vpow.pop %v1610
      %v1612 = vmul.f32 %v1559, 1.442695
      %v1613 = vpow.pop %v1612
      %v1614 = vmul.f32 %v1560, 1.442695
      %v1615 = vpow.pop %v1614
      %v1616 = vmul.f32 %v1561, 1.442695
      %v1617 = vpow.pop %v1616
      %v1618 = vmul.f32 %v1562, 1.442695
      %v1619 = vpow.pop %v1618
      %v1620 = vmul.f32 %v1563, 1.442695
      %v1621 = vpow.pop %v1620
      %v1622 = vadd.f32 %v1565, 1.0
      %v1623 = vadd.f32 %v1567, 1.0
      %v1624 = vadd.f32 %v1569, 1.0
      %v1625 = vadd.f32 %v1571, 1.0
      %v1626 = vadd.f32 %v1573, 1.0
      %v1627 = vadd.f32 %v1575, 1.0
      %v1628 = vadd.f32 %v1577, 1.0
      %v1629 = vadd.f32 %v1579, 1.0
      %v1630 = vadd.f32 %v1581, 1.0
      %v1631 = vadd.f32 %v1583, 1.0
      %v1632 = vadd.f32 %v1585, 1.0
      %v1633 = vadd.f32 %v1587, 1.0
      %v1634 = vadd.f32 %v1589, 1.0
      %v1635 = vadd.f32 %v1591, 1.0
      %v1636 = vadd.f32 %v1593, 1.0
      %v1637 = vadd.f32 %v1595, 1.0
      %v1638 = vadd.f32 %v1597, 1.0
      %v1639 = vadd.f32 %v1599, 1.0
      %v1640 = vadd.f32 %v1601, 1.0
      %v1641 = vadd.f32 %v1603, 1.0
      %v1642 = vadd.f32 %v1605, 1.0
      %v1643 = vadd.f32 %v1607, 1.0
      %v1644 = vadd.f32 %v1609, 1.0
      %v1645 = vadd.f32 %v1611, 1.0
      %v1646 = vadd.f32 %v1613, 1.0
      %v1647 = vadd.f32 %v1615, 1.0
      %v1648 = vadd.f32 %v1617, 1.0
      %v1649 = vadd.f32 %v1619, 1.0
      %v1650 = vadd.f32 %v1621, 1.0
      %v1651 = vrcp.pop %v1622
      %v1652 = vmul.f32 %v1622, %v1651
      %v1653 = vsub.f32 1.0, %v1652
      %v1654 = vmul.f32 %v1651, %v1653
      %v1655 = vadd.f32 %v1651, %v1654
      %vm1656 = vweird.f32 %v1622
      %vm1657 = vweird.f32 %v1651
      %vm1658 = vmor %vm1656, %vm1657
      %v1659 = vsel %vm1658, %v1651, %v1655
      %v1660 = vand.u32 2147483647, %v1622
      %vm1661 = vcmp.eq.f32.partialorder %v1660, 8.507059e+37
      %v1662 = vand.u32 %v1622, 2147483648
      %v1663 = vor.u32 1.1754944e-38, %v1662
      %v1664 = vsel %vm1661, %v1663, %v1659
      %v1665 = vmul.f32 1.0, %v1664
      %v1666 = vrcp.pop %v1623
      %v1667 = vmul.f32 %v1623, %v1666
      %v1668 = vsub.f32 1.0, %v1667
      %v1669 = vmul.f32 %v1666, %v1668
      %v1670 = vadd.f32 %v1666, %v1669
      %vm1671 = vweird.f32 %v1623
      %vm1672 = vweird.f32 %v1666
      %vm1673 = vmor %vm1671, %vm1672
      %v1674 = vsel %vm1673, %v1666, %v1670
      %v1675 = vand.u32 2147483647, %v1623
      %vm1676 = vcmp.eq.f32.partialorder %v1675, 8.507059e+37
      %v1677 = vand.u32 %v1623, 2147483648
      %v1678 = vor.u32 1.1754944e-38, %v1677
      %v1679 = vsel %vm1676, %v1678, %v1674
      %v1680 = vmul.f32 1.0, %v1679
      %v1681 = vrcp.pop %v1624
      %v1682 = vmul.f32 %v1624, %v1681
      %v1683 = vsub.f32 1.0, %v1682
      %v1684 = vmul.f32 %v1681, %v1683
      %v1685 = vadd.f32 %v1681, %v1684
      %vm1686 = vweird.f32 %v1624
      %vm1687 = vweird.f32 %v1681
      %vm1688 = vmor %vm1686, %vm1687
      %v1689 = vsel %vm1688, %v1681, %v1685
      %v1690 = vand.u32 2147483647, %v1624
      %vm1691 = vcmp.eq.f32.partialorder %v1690, 8.507059e+37
      %v1692 = vand.u32 %v1624, 2147483648
      %v1693 = vor.u32 1.1754944e-38, %v1692
      %v1694 = vsel %vm1691, %v1693, %v1689
      %v1695 = vmul.f32 1.0, %v1694
      %v1696 = vrcp.pop %v1625
      %v1697 = vmul.f32 %v1625, %v1696
      %v1698 = vsub.f32 1.0, %v1697
      %v1699 = vmul.f32 %v1696, %v1698
      %v1700 = vadd.f32 %v1696, %v1699
      %vm1701 = vweird.f32 %v1625
      %vm1702 = vweird.f32 %v1696
      %vm1703 = vmor %vm1701, %vm1702
      %v1704 = vsel %vm1703, %v1696, %v1700
      %v1705 = vand.u32 2147483647, %v1625
      %vm1706 = vcmp.eq.f32.partialorder %v1705, 8.507059e+37
      %v1707 = vand.u32 %v1625, 2147483648
      %v1708 = vor.u32 1.1754944e-38, %v1707
      %v1709 = vsel %vm1706, %v1708, %v1704
      %v1710 = vmul.f32 1.0, %v1709
      %v1711 = vrcp.pop %v1626
      %v1712 = vmul.f32 %v1626, %v1711
      %v1713 = vsub.f32 1.0, %v1712
      %v1714 = vmul.f32 %v1711, %v1713
      %v1715 = vadd.f32 %v1711, %v1714
      %vm1716 = vweird.f32 %v1626
      %vm1717 = vweird.f32 %v1711
      %vm1718 = vmor %vm1716, %vm1717
      %v1719 = vsel %vm1718, %v1711, %v1715
      %v1720 = vand.u32 2147483647, %v1626
      %vm1721 = vcmp.eq.f32.partialorder %v1720, 8.507059e+37
      %v1722 = vand.u32 %v1626, 2147483648
      %v1723 = vor.u32 1.1754944e-38, %v1722
      %v1724 = vsel %vm1721, %v1723, %v1719
      %v1725 = vmul.f32 1.0, %v1724
      %v1726 = vrcp.pop %v1627
      %v1727 = vmul.f32 %v1627, %v1726
      %v1728 = vsub.f32 1.0, %v1727
      %v1729 = vmul.f32 %v1726, %v1728
      %v1730 = vadd.f32 %v1726, %v1729
      %vm1731 = vweird.f32 %v1627
      %vm1732 = vweird.f32 %v1726
      %vm1733 = vmor %vm1731, %vm1732
      %v1734 = vsel %vm1733, %v1726, %v1730
      %v1735 = vand.u32 2147483647, %v1627
      %vm1736 = vcmp.eq.f32.partialorder %v1735, 8.507059e+37
      %v1737 = vand.u32 %v1627, 2147483648
      %v1738 = vor.u32 1.1754944e-38, %v1737
      %v1739 = vsel %vm1736, %v1738, %v1734
      %v1740 = vmul.f32 1.0, %v1739
      %v1741 = vrcp.pop %v1628
      %v1742 = vmul.f32 %v1628, %v1741
      %v1743 = vsub.f32 1.0, %v1742
      %v1744 = vmul.f32 %v1741, %v1743
      %v1745 = vadd.f32 %v1741, %v1744
      %vm1746 = vweird.f32 %v1628
      %vm1747 = vweird.f32 %v1741
      %vm1748 = vmor %vm1746, %vm1747
      %v1749 = vsel %vm1748, %v1741, %v1745
      %v1750 = vand.u32 2147483647, %v1628
      %vm1751 = vcmp.eq.f32.partialorder %v1750, 8.507059e+37
      %v1752 = vand.u32 %v1628, 2147483648
      %v1753 = vor.u32 1.1754944e-38, %v1752
      %v1754 = vsel %vm1751, %v1753, %v1749
      %v1755 = vmul.f32 1.0, %v1754
      %v1756 = vrcp.pop %v1629
      %v1757 = vmul.f32 %v1629, %v1756
      %v1758 = vsub.f32 1.0, %v1757
      %v1759 = vmul.f32 %v1756, %v1758
      %v1760 = vadd.f32 %v1756, %v1759
      %vm1761 = vweird.f32 %v1629
      %vm1762 = vweird.f32 %v1756
      %vm1763 = vmor %vm1761, %vm1762
      %v1764 = vsel %vm1763, %v1756, %v1760
      %v1765 = vand.u32 2147483647, %v1629
      %vm1766 = vcmp.eq.f32.partialorder %v1765, 8.507059e+37
      %v1767 = vand.u32 %v1629, 2147483648
      %v1768 = vor.u32 1.1754944e-38, %v1767
      %v1769 = vsel %vm1766, %v1768, %v1764
      %v1770 = vmul.f32 1.0, %v1769
      %v1771 = vrcp.pop %v1630
      %v1772 = vmul.f32 %v1630, %v1771
      %v1773 = vsub.f32 1.0, %v1772
      %v1774 = vmul.f32 %v1771, %v1773
      %v1775 = vadd.f32 %v1771, %v1774
      %vm1776 = vweird.f32 %v1630
      %vm1777 = vweird.f32 %v1771
      %vm1778 = vmor %vm1776, %vm1777
      %v1779 = vsel %vm1778, %v1771, %v1775
      %v1780 = vand.u32 2147483647, %v1630
      %vm1781 = vcmp.eq.f32.partialorder %v1780, 8.507059e+37
      %v1782 = vand.u32 %v1630, 2147483648
      %v1783 = vor.u32 1.1754944e-38, %v1782
      %v1784 = vsel %vm1781, %v1783, %v1779
      %v1785 = vmul.f32 1.0, %v1784
      %v1786 = vrcp.pop %v1631
      %v1787 = vmul.f32 %v1631, %v1786
      %v1788 = vsub.f32 1.0, %v1787
      %v1789 = vmul.f32 %v1786, %v1788
      %v1790 = vadd.f32 %v1786, %v1789
      %vm1791 = vweird.f32 %v1631
      %vm1792 = vweird.f32 %v1786
      %vm1793 = vmor %vm1791, %vm1792
      %v1794 = vsel %vm1793, %v1786, %v1790
      %v1795 = vand.u32 2147483647, %v1631
      %vm1796 = vcmp.eq.f32.partialorder %v1795, 8.507059e+37
      %v1797 = vand.u32 %v1631, 2147483648
      %v1798 = vor.u32 1.1754944e-38, %v1797
      %v1799 = vsel %vm1796, %v1798, %v1794
      %v1800 = vmul.f32 1.0, %v1799
      %v1801 = vrcp.pop %v1632
      %v1802 = vmul.f32 %v1632, %v1801
      %v1803 = vsub.f32 1.0, %v1802
      %v1804 = vmul.f32 %v1801, %v1803
      %v1805 = vadd.f32 %v1801, %v1804
      %vm1806 = vweird.f32 %v1632
      %vm1807 = vweird.f32 %v1801
      %vm1808 = vmor %vm1806, %vm1807
      %v1809 = vsel %vm1808, %v1801, %v1805
      %v1810 = vand.u32 2147483647, %v1632
      %vm1811 = vcmp.eq.f32.partialorder %v1810, 8.507059e+37
      %v1812 = vand.u32 %v1632, 2147483648
      %v1813 = vor.u32 1.1754944e-38, %v1812
      %v1814 = vsel %vm1811, %v1813, %v1809
      %v1815 = vmul.f32 1.0, %v1814
      %v1816 = vrcp.pop %v1633
      %v1817 = vmul.f32 %v1633, %v1816
      %v1818 = vsub.f32 1.0, %v1817
      %v1819 = vmul.f32 %v1816, %v1818
      %v1820 = vadd.f32 %v1816, %v1819
      %vm1821 = vweird.f32 %v1633
      %vm1822 = vweird.f32 %v1816
      %vm1823 = vmor %vm1821, %vm1822
      %v1824 = vsel %vm1823, %v1816, %v1820
      %v1825 = vand.u32 2147483647, %v1633
      %vm1826 = vcmp.eq.f32.partialorder %v1825, 8.507059e+37
      %v1827 = vand.u32 %v1633, 2147483648
      %v1828 = vor.u32 1.1754944e-38, %v1827
      %v1829 = vsel %vm1826, %v1828, %v1824
      %v1830 = vmul.f32 1.0, %v1829
      %v1831 = vrcp.pop %v1634
      %v1832 = vmul.f32 %v1634, %v1831
      %v1833 = vsub.f32 1.0, %v1832
      %v1834 = vmul.f32 %v1831, %v1833
      %v1835 = vadd.f32 %v1831, %v1834
      %vm1836 = vweird.f32 %v1634
      %vm1837 = vweird.f32 %v1831
      %vm1838 = vmor %vm1836, %vm1837
      %v1839 = vsel %vm1838, %v1831, %v1835
      %v1840 = vand.u32 2147483647, %v1634
      %vm1841 = vcmp.eq.f32.partialorder %v1840, 8.507059e+37
      %v1842 = vand.u32 %v1634, 2147483648
      %v1843 = vor.u32 1.1754944e-38, %v1842
      %v1844 = vsel %vm1841, %v1843, %v1839
      %v1845 = vmul.f32 1.0, %v1844
      %v1846 = vrcp.pop %v1635
      %v1847 = vmul.f32 %v1635, %v1846
      %v1848 = vsub.f32 1.0, %v1847
      %v1849 = vmul.f32 %v1846, %v1848
      %v1850 = vadd.f32 %v1846, %v1849
      %vm1851 = vweird.f32 %v1635
      %vm1852 = vweird.f32 %v1846
      %vm1853 = vmor %vm1851, %vm1852
      %v1854 = vsel %vm1853, %v1846, %v1850
      %v1855 = vand.u32 2147483647, %v1635
      %vm1856 = vcmp.eq.f32.partialorder %v1855, 8.507059e+37
      %v1857 = vand.u32 %v1635, 2147483648
      %v1858 = vor.u32 1.1754944e-38, %v1857
      %v1859 = vsel %vm1856, %v1858, %v1854
      %v1860 = vmul.f32 1.0, %v1859
      %v1861 = vrcp.pop %v1636
      %v1862 = vmul.f32 %v1636, %v1861
      %v1863 = vsub.f32 1.0, %v1862
      %v1864 = vmul.f32 %v1861, %v1863
      %v1865 = vadd.f32 %v1861, %v1864
      %vm1866 = vweird.f32 %v1636
      %vm1867 = vweird.f32 %v1861
      %vm1868 = vmor %vm1866, %vm1867
      %v1869 = vsel %vm1868, %v1861, %v1865
      %v1870 = vand.u32 2147483647, %v1636
      %vm1871 = vcmp.eq.f32.partialorder %v1870, 8.507059e+37
      %v1872 = vand.u32 %v1636, 2147483648
      %v1873 = vor.u32 1.1754944e-38, %v1872
      %v1874 = vsel %vm1871, %v1873, %v1869
      %v1875 = vmul.f32 1.0, %v1874
      %v1876 = vrcp.pop %v1637
      %v1877 = vmul.f32 %v1637, %v1876
      %v1878 = vsub.f32 1.0, %v1877
      %v1879 = vmul.f32 %v1876, %v1878
      %v1880 = vadd.f32 %v1876, %v1879
      %vm1881 = vweird.f32 %v1637
      %vm1882 = vweird.f32 %v1876
      %vm1883 = vmor %vm1881, %vm1882
      %v1884 = vsel %vm1883, %v1876, %v1880
      %v1885 = vand.u32 2147483647, %v1637
      %vm1886 = vcmp.eq.f32.partialorder %v1885, 8.507059e+37
      %v1887 = vand.u32 %v1637, 2147483648
      %v1888 = vor.u32 1.1754944e-38, %v1887
      %v1889 = vsel %vm1886, %v1888, %v1884
      %v1890 = vmul.f32 1.0, %v1889
      %v1891 = vrcp.pop %v1638
      %v1892 = vmul.f32 %v1638, %v1891
      %v1893 = vsub.f32 1.0, %v1892
      %v1894 = vmul.f32 %v1891, %v1893
      %v1895 = vadd.f32 %v1891, %v1894
      %vm1896 = vweird.f32 %v1638
      %vm1897 = vweird.f32 %v1891
      %vm1898 = vmor %vm1896, %vm1897
      %v1899 = vsel %vm1898, %v1891, %v1895
      %v1900 = vand.u32 2147483647, %v1638
      %vm1901 = vcmp.eq.f32.partialorder %v1900, 8.507059e+37
      %v1902 = vand.u32 %v1638, 2147483648
      %v1903 = vor.u32 1.1754944e-38, %v1902
      %v1904 = vsel %vm1901, %v1903, %v1899
      %v1905 = vmul.f32 1.0, %v1904
      %v1906 = vrcp.pop %v1639
      %v1907 = vmul.f32 %v1639, %v1906
      %v1908 = vsub.f32 1.0, %v1907
      %v1909 = vmul.f32 %v1906, %v1908
      %v1910 = vadd.f32 %v1906, %v1909
      %vm1911 = vweird.f32 %v1639
      %vm1912 = vweird.f32 %v1906
      %vm1913 = vmor %vm1911, %vm1912
      %v1914 = vsel %vm1913, %v1906, %v1910
      %v1915 = vand.u32 2147483647, %v1639
      %vm1916 = vcmp.eq.f32.partialorder %v1915, 8.507059e+37
      %v1917 = vand.u32 %v1639, 2147483648
      %v1918 = vor.u32 1.1754944e-38, %v1917
      %v1919 = vsel %vm1916, %v1918, %v1914
      %v1920 = vmul.f32 1.0, %v1919
      %v1921 = vrcp.pop %v1640
      %v1922 = vmul.f32 %v1640, %v1921
      %v1923 = vsub.f32 1.0, %v1922
      %v1924 = vmul.f32 %v1921, %v1923
      %v1925 = vadd.f32 %v1921, %v1924
      %vm1926 = vweird.f32 %v1640
      %vm1927 = vweird.f32 %v1921
      %vm1928 = vmor %vm1926, %vm1927
      %v1929 = vsel %vm1928, %v1921, %v1925
      %v1930 = vand.u32 2147483647, %v1640
      %vm1931 = vcmp.eq.f32.partialorder %v1930, 8.507059e+37
      %v1932 = vand.u32 %v1640, 2147483648
      %v1933 = vor.u32 1.1754944e-38, %v1932
      %v1934 = vsel %vm1931, %v1933, %v1929
      %v1935 = vmul.f32 1.0, %v1934
      %v1936 = vrcp.pop %v1641
      %v1937 = vmul.f32 %v1641, %v1936
      %v1938 = vsub.f32 1.0, %v1937
      %v1939 = vmul.f32 %v1936, %v1938
      %v1940 = vadd.f32 %v1936, %v1939
      %vm1941 = vweird.f32 %v1641
      %vm1942 = vweird.f32 %v1936
      %vm1943 = vmor %vm1941, %vm1942
      %v1944 = vsel %vm1943, %v1936, %v1940
      %v1945 = vand.u32 2147483647, %v1641
      %vm1946 = vcmp.eq.f32.partialorder %v1945, 8.507059e+37
      %v1947 = vand.u32 %v1641, 2147483648
      %v1948 = vor.u32 1.1754944e-38, %v1947
      %v1949 = vsel %vm1946, %v1948, %v1944
      %v1950 = vmul.f32 1.0, %v1949
      %v1951 = vrcp.pop %v1642
      %v1952 = vmul.f32 %v1642, %v1951
      %v1953 = vsub.f32 1.0, %v1952
      %v1954 = vmul.f32 %v1951, %v1953
      %v1955 = vadd.f32 %v1951, %v1954
      %vm1956 = vweird.f32 %v1642
      %vm1957 = vweird.f32 %v1951
      %vm1958 = vmor %vm1956, %vm1957
      %v1959 = vsel %vm1958, %v1951, %v1955
      %v1960 = vand.u32 2147483647, %v1642
      %vm1961 = vcmp.eq.f32.partialorder %v1960, 8.507059e+37
      %v1962 = vand.u32 %v1642, 2147483648
      %v1963 = vor.u32 1.1754944e-38, %v1962
      %v1964 = vsel %vm1961, %v1963, %v1959
      %v1965 = vmul.f32 1.0, %v1964
      %v1966 = vrcp.pop %v1643
      %v1967 = vmul.f32 %v1643, %v1966
      %v1968 = vsub.f32 1.0, %v1967
      %v1969 = vmul.f32 %v1966, %v1968
      %v1970 = vadd.f32 %v1966, %v1969
      %vm1971 = vweird.f32 %v1643
      %vm1972 = vweird.f32 %v1966
      %vm1973 = vmor %vm1971, %vm1972
      %v1974 = vsel %vm1973, %v1966, %v1970
      %v1975 = vand.u32 2147483647, %v1643
      %vm1976 = vcmp.eq.f32.partialorder %v1975, 8.507059e+37
      %v1977 = vand.u32 %v1643, 2147483648
      %v1978 = vor.u32 1.1754944e-38, %v1977
      %v1979 = vsel %vm1976, %v1978, %v1974
      %v1980 = vmul.f32 1.0, %v1979
      %v1981 = vrcp.pop %v1644
      %v1982 = vmul.f32 %v1644, %v1981
      %v1983 = vsub.f32 1.0, %v1982
      %v1984 = vmul.f32 %v1981, %v1983
      %v1985 = vadd.f32 %v1981, %v1984
      %vm1986 = vweird.f32 %v1644
      %vm1987 = vweird.f32 %v1981
      %vm1988 = vmor %vm1986, %vm1987
      %v1989 = vsel %vm1988, %v1981, %v1985
      %v1990 = vand.u32 2147483647, %v1644
      %vm1991 = vcmp.eq.f32.partialorder %v1990, 8.507059e+37
      %v1992 = vand.u32 %v1644, 2147483648
      %v1993 = vor.u32 1.1754944e-38, %v1992
      %v1994 = vsel %vm1991, %v1993, %v1989
      %v1995 = vmul.f32 1.0, %v1994
      %v1996 = vrcp.pop %v1645
      %v1997 = vmul.f32 %v1645, %v1996
      %v1998 = vsub.f32 1.0, %v1997
      %v1999 = vmul.f32 %v1996, %v1998
      %v2000 = vadd.f32 %v1996, %v1999
      %vm2001 = vweird.f32 %v1645
      %vm2002 = vweird.f32 %v1996
      %vm2003 = vmor %vm2001, %vm2002
      %v2004 = vsel %vm2003, %v1996, %v2000
      %v2005 = vand.u32 2147483647, %v1645
      %vm2006 = vcmp.eq.f32.partialorder %v2005, 8.507059e+37
      %v2007 = vand.u32 %v1645, 2147483648
      %v2008 = vor.u32 1.1754944e-38, %v2007
      %v2009 = vsel %vm2006, %v2008, %v2004
      %v2010 = vmul.f32 1.0, %v2009
      %v2011 = vrcp.pop %v1646
      %v2012 = vmul.f32 %v1646, %v2011
      %v2013 = vsub.f32 1.0, %v2012
      %v2014 = vmul.f32 %v2011, %v2013
      %v2015 = vadd.f32 %v2011, %v2014
      %vm2016 = vweird.f32 %v1646
      %vm2017 = vweird.f32 %v2011
      %vm2018 = vmor %vm2016, %vm2017
      %v2019 = vsel %vm2018, %v2011, %v2015
      %v2020 = vand.u32 2147483647, %v1646
      %vm2021 = vcmp.eq.f32.partialorder %v2020, 8.507059e+37
      %v2022 = vand.u32 %v1646, 2147483648
      %v2023 = vor.u32 1.1754944e-38, %v2022
      %v2024 = vsel %vm2021, %v2023, %v2019
      %v2025 = vmul.f32 1.0, %v2024
      %v2026 = vrcp.pop %v1647
      %v2027 = vmul.f32 %v1647, %v2026
      %v2028 = vsub.f32 1.0, %v2027
      %v2029 = vmul.f32 %v2026, %v2028
      %v2030 = vadd.f32 %v2026, %v2029
      %vm2031 = vweird.f32 %v1647
      %vm2032 = vweird.f32 %v2026
      %vm2033 = vmor %vm2031, %vm2032
      %v2034 = vsel %vm2033, %v2026, %v2030
      %v2035 = vand.u32 2147483647, %v1647
      %vm2036 = vcmp.eq.f32.partialorder %v2035, 8.507059e+37
      %v2037 = vand.u32 %v1647, 2147483648
      %v2038 = vor.u32 1.1754944e-38, %v2037
      %v2039 = vsel %vm2036, %v2038, %v2034
      %v2040 = vmul.f32 1.0, %v2039
      %v2041 = vrcp.pop %v1648
      %v2042 = vmul.f32 %v1648, %v2041
      %v2043 = vsub.f32 1.0, %v2042
      %v2044 = vmul.f32 %v2041, %v2043
      %v2045 = vadd.f32 %v2041, %v2044
      %vm2046 = vweird.f32 %v1648
      %vm2047 = vweird.f32 %v2041
      %vm2048 = vmor %vm2046, %vm2047
      %v2049 = vsel %vm2048, %v2041, %v2045
      %v2050 = vand.u32 2147483647, %v1648
      %vm2051 = vcmp.eq.f32.partialorder %v2050, 8.507059e+37
      %v2052 = vand.u32 %v1648, 2147483648
      %v2053 = vor.u32 1.1754944e-38, %v2052
      %v2054 = vsel %vm2051, %v2053, %v2049
      %v2055 = vmul.f32 1.0, %v2054
      %v2056 = vrcp.pop %v1649
      %v2057 = vmul.f32 %v1649, %v2056
      %v2058 = vsub.f32 1.0, %v2057
      %v2059 = vmul.f32 %v2056, %v2058
      %v2060 = vadd.f32 %v2056, %v2059
      %vm2061 = vweird.f32 %v1649
      %vm2062 = vweird.f32 %v2056
      %vm2063 = vmor %vm2061, %vm2062
      %v2064 = vsel %vm2063, %v2056, %v2060
      %v2065 = vand.u32 2147483647, %v1649
      %vm2066 = vcmp.eq.f32.partialorder %v2065, 8.507059e+37
      %v2067 = vand.u32 %v1649, 2147483648
      %v2068 = vor.u32 1.1754944e-38, %v2067
      %v2069 = vsel %vm2066, %v2068, %v2064
      %v2070 = vmul.f32 1.0, %v2069
      %v2071 = vrcp.pop %v1650
      %v2072 = vmul.f32 %v1650, %v2071
      %v2073 = vsub.f32 1.0, %v2072
      %v2074 = vmul.f32 %v2071, %v2073
      %v2075 = vadd.f32 %v2071, %v2074
      %vm2076 = vweird.f32 %v1650
      %vm2077 = vweird.f32 %v2071
      %vm2078 = vmor %vm2076, %vm2077
      %v2079 = vsel %vm2078, %v2071, %v2075
      %v2080 = vand.u32 2147483647, %v1650
      %vm2081 = vcmp.eq.f32.partialorder %v2080, 8.507059e+37
      %v2082 = vand.u32 %v1650, 2147483648
      %v2083 = vor.u32 1.1754944e-38, %v2082
      %v2084 = vsel %vm2081, %v2083, %v2079
      %v2085 = vmul.f32 1.0, %v2084
      %v2115 = vrot.slane %v1680, 7
      %v2116 = vrot.slane %v1695, 6
      %v2117 = vrot.slane %v1710, 5
      %v2118 = vrot.slane %v1725, 4
      %v2119 = vrot.slane %v1740, 3
      %v2120 = vrot.slane %v1755, 2
      %v2121 = vrot.slane %v1770, 1
      %v2122 = vrot.slane %v1800, 7
      %v2123 = vrot.slane %v1815, 6
      %v2124 = vrot.slane %v1830, 5
      %v2125 = vrot.slane %v1845, 4
      %v2126 = vrot.slane %v1860, 3
      %v2127 = vrot.slane %v1875, 2
      %v2128 = vrot.slane %v1890, 1
      %v2129 = vrot.slane %v1920, 7
      %v2130 = vrot.slane %v1935, 6
      %v2131 = vrot.slane %v1950, 5
      %v2132 = vrot.slane %v1965, 4
      %v2133 = vrot.slane %v1980, 3
      %v2134 = vrot.slane %v1995, 2
      %v2135 = vrot.slane %v2010, 1
      %v2136 = vrot.slane %v2040, 7
      %v2137 = vrot.slane %v2055, 6
      %v2138 = vrot.slane %v2070, 5
      %v2139 = vrot.slane %v2085, 4
      %vm2140 = vcmask 1040384
      %v2141 = vsel %vm2140, %v1665, %v2115
      %vm2142 = vcmask 1042434
      %v2143 = vsel %vm2142, %v2116, %v2117
      %vm2144 = vcmask 1041408
      %v2145 = vsel %vm2144, %v2141, %v2143
      %vm2146 = vcmask 1044484
      %v2147 = vsel %vm2146, %v2118, %v2119
      %vm2148 = vcmask 1046534
      %v2149 = vsel %vm2148, %v2120, %v2121
      %vm2150 = vcmask 1045508
      %v2151 = vsel %vm2150, %v2147, %v2149
      %v2152 = vsel %vm998, %v2145, %v2151
      %v2153 = vsel %vm2140, %v1785, %v2122
      %v2154 = vsel %vm2142, %v2123, %v2124
      %v2155 = vsel %vm2144, %v2153, %v2154
      %v2156 = vsel %vm2146, %v2125, %v2126
      %v2157 = vsel %vm2148, %v2127, %v2128
      %v2158 = vsel %vm2150, %v2156, %v2157
      %v2159 = vsel %vm998, %v2155, %v2158
      %v2160 = vsel %vm2140, %v1905, %v2129
      %v2161 = vsel %vm2142, %v2130, %v2131
      %v2162 = vsel %vm2144, %v2160, %v2161
      %v2163 = vsel %vm2146, %v2132, %v2133
      %v2164 = vsel %vm2148, %v2134, %v2135
      %v2165 = vsel %vm2150, %v2163, %v2164
      %v2166 = vsel %vm998, %v2162, %v2165
      %v2167 = vsel %vm2140, %v2025, %v2136
      %v2168 = vsel %vm2144, %v2167, %v2137
      %vm2169 = vcmask 1043459
      %v2170 = vsel %vm2169, %v2138, %v2139
      %vm2171 = vcmask 1042432
      %v2172 = vsel %vm2171, %v2168, %v2170
      %2177 = vst [vmem:[%s199] sm:$0xff] %v2152
      %2178 = vst [vmem:[%s199 + $0x8] sm:$0xff] %v2159
      %2179 = vst [vmem:[%s199 + $0x10] sm:$0xff] %v2166
      %v2180 = vlaneseq
      %vm2181 = vcmp.ge.s32.totalorder %v2180, 0
      %vm2182 = vcmp.lt.s32.totalorder %v2180, 640
      %vm2183 = vmand %vm2181, %vm2182
      %2184 = vst.msk [vmem:[%s199 + $0x18] sm:$0x1f] %vm2183, %v2172
      %p2185 = scmp.lt.s32.totalorder %s19, 1
      %s2186 = scalar_select %p2185, %s19, 1
      %s2187 = smul.addr %s2186, 29
      %s2188 = scalar_lea.vmem %s4, %s2187
      // Predicated region
      $region37: #{decoder_forward.9} parent=35 // pred_check
        %p2189 = pneg %p126
      $region38: #{decoder_forward.9} parent=35 // pred_check_branch
        %2191 = sbr.rel (%p2189) target = $region40
      $region39: #{decoder_forward.9} parent=35 // pred_region
        _
      $region40: #{decoder_forward.9} parent=35 // pred_fallthru
        _
    $region36: #{decoder_forward.9} parent=5 // pred_fallthru
      _
    %p2192 = scmp.le.s32.totalorder 2, %s14
    // Predicated region
    $region41: #{decoder_forward.9} parent=5 // pred_check
      %p2193 = pneg %p2192
    $region42: #{decoder_forward.9} parent=5 // pred_check_branch
      %2195 = sbr.rel (%p2193) target = $region44
    $region43: #{decoder_forward.9} parent=5 // pred_region
      %s2196 = ssub.s32 %s14, 2
      // Predicated region
      $region45: #{decoder_forward.9} parent=43 // pred_check
        %p2197 = pneg %p132
      $region46: #{decoder_forward.9} parent=43 // pred_check_branch
        %2199 = sbr.rel (%p2197) target = $region48
      $region47: #{decoder_forward.9} parent=43 // pred_region
        %p2200 = scmp.lt.s32.totalorder %s20, 1
        %s2201 = scalar_select %p2200, %s20, 1
        %s2202 = smul.addr %s2201, 29
        %s2203 = scalar_lea.vmem %s4, %s2202
      $region48: #{decoder_forward.9} parent=43 // pred_fallthru
        _
    $region44: #{decoder_forward.9} parent=5 // pred_fallthru
      _
  $region6: #{decoder_forward.9} parent=0 // loop_footer
    %s18 = sadd.s32 1, %s14
  $region7: #{decoder_forward.9} parent=0 // loop_footer_branch
    %13 = sbr.rel target = $region3
  $region8: #{decoder_forward.9} parent=0 // loop_exit
    _

</llo_original>
